<compile_context>
chip_gen: v6e
topology: v6e:2x2x1
jax: 0.10.0
libtpu: 0.0.40
codegen_flags: <defaults>
</compile_context>

<pallas_src>
import functools
import math

import jax
import jax.numpy as jnp
from jax.experimental import pallas as pl
from jax.experimental.pallas import tpu as pltpu


_VMEM_LIMIT = 48 * 1024 * 1024      # <= v7x 64 MiB budget, a raise for v5e/v6e
X_LOGIT_SCALE = 1.0                 # emb_trg_sharing=False in the reference module
W_DTYPE = jnp.bfloat16              # weight / activation streaming dtype
A_DTYPE = jnp.bfloat16


def _pick_tile(dim, max_tile, align, min_tile=None):
    """Largest tile <= max_tile that divides `dim`, is `align`-aligned and not
    smaller than `min_tile`; falls back to the full dimension (always legal)."""
    if dim <= max_tile:
        return dim
    if min_tile is None:
        min_tile = align
    t = (max_tile // align) * align
    while t >= min_tile:
        if dim % t == 0:
            return t
        t -= align
    return dim


# ----------------------------------------------------------------------------
# Kernel 1: tiled linear  y = act(x @ W + b)      (bf16 in, f32 accumulate)
# ----------------------------------------------------------------------------
def _linear_kernel(x_ref, w_ref, b_ref, o_ref, acc_ref, *, activation):
    @pl.when(pl.program_id(2) == 0)
    def _init():
        acc_ref[...] = jnp.zeros_like(acc_ref)

    acc_ref[...] += jnp.dot(x_ref[...], w_ref[...],
                            preferred_element_type=jnp.float32)

    @pl.when(pl.program_id(2) == pl.num_programs(2) - 1)
    def _store():
        y = acc_ref[...] + b_ref[...]
        if activation == "relu":
            y = jnp.maximum(y, 0.0)
        o_ref[...] = y.astype(o_ref.dtype)


def linear(x, w, b, activation=None, *, out_dtype=A_DTYPE,
           max_tm=256, max_tn=1024, max_tk=512):
    """x: (M, K) bf16, w: (K, N) bf16, b: (1, N) f32 -> (M, N) out_dtype."""
    M, K = x.shape
    _, N = w.shape
    tm = _pick_tile(M, max_tm, 8, min_tile=64)
    tn = _pick_tile(N, max_tn, 128)
    tk = _pick_tile(K, max_tk, 128)
    grid = (M // tm, N // tn, K // tk)
    kernel = functools.partial(_linear_kernel, activation=activation)
    return pl.pallas_call(
        kernel,
        out_shape=jax.ShapeDtypeStruct((M, N), out_dtype),
        grid=grid,
        in_specs=[
            pl.BlockSpec((tm, tk), lambda i, j, k: (i, k)),
            pl.BlockSpec((tk, tn), lambda i, j, k: (k, j)),
            pl.BlockSpec((1, tn), lambda i, j, k: (0, j)),
        ],
        out_specs=pl.BlockSpec((tm, tn), lambda i, j, k: (i, j)),
        scratch_shapes=[pltpu.VMEM((tm, tn), jnp.float32)],
        compiler_params=pltpu.CompilerParams(
            dimension_semantics=("parallel", "parallel", "arbitrary"),
            vmem_limit_bytes=_VMEM_LIMIT,
        ),
    )(x, w, b)


# ----------------------------------------------------------------------------
# Kernel 2: fused  out = LayerNorm(x @ W + b + residual) * scale
#   (output projection / conv_2 epilogue; `scale` is the non-pad mask applied
#    right after the layer in DecoderLayer)
# ----------------------------------------------------------------------------
def _linear_add_ln_kernel(x_ref, w_ref, b_ref, res_ref, g_ref, bb_ref, s_ref,
                          o_ref, acc_ref, *, eps):
    @pl.when(pl.program_id(1) == 0)
    def _init():
        acc_ref[...] = jnp.zeros_like(acc_ref)

    acc_ref[...] += jnp.dot(x_ref[...], w_ref[...],
                            preferred_element_type=jnp.float32)

    @pl.when(pl.program_id(1) == pl.num_programs(1) - 1)
    def _store():
        y = acc_ref[...] + b_ref[...] + res_ref[...].astype(jnp.float32)
        mu = jnp.mean(y, axis=-1, keepdims=True)
        var = jnp.mean(jnp.square(y - mu), axis=-1, keepdims=True)
        yn = (y - mu) * jax.lax.rsqrt(var + eps)
        o_ref[...] = ((yn * g_ref[...] + bb_ref[...]) * s_ref[...]).astype(o_ref.dtype)


def linear_add_layernorm(x, w, b, res, gamma, beta, scale, *, eps=1e-5,
                         max_tm=128, max_tk=512):
    """x: (M, K) bf16, w: (K, N) bf16, b/gamma/beta: (1, N) f32,
    res: (M, N) bf16, scale: (M, 1) f32 -> (M, N) bf16."""
    M, K = x.shape
    _, N = w.shape
    tm = _pick_tile(M, max_tm, 8, min_tile=64)
    tk = _pick_tile(K, max_tk, 128)
    grid = (M // tm, K // tk)
    kernel = functools.partial(_linear_add_ln_kernel, eps=eps)
    return pl.pallas_call(
        kernel,
        out_shape=jax.ShapeDtypeStruct((M, N), A_DTYPE),
        grid=grid,
        in_specs=[
            pl.BlockSpec((tm, tk), lambda i, k: (i, k)),
            pl.BlockSpec((tk, N), lambda i, k: (k, 0)),
            pl.BlockSpec((1, N), lambda i, k: (0, 0)),
            pl.BlockSpec((tm, N), lambda i, k: (i, 0)),
            pl.BlockSpec((1, N), lambda i, k: (0, 0)),
            pl.BlockSpec((1, N), lambda i, k: (0, 0)),
            pl.BlockSpec((tm, 1), lambda i, k: (i, 0)),
        ],
        out_specs=pl.BlockSpec((tm, N), lambda i, k: (i, 0)),
        scratch_shapes=[pltpu.VMEM((tm, N), jnp.float32)],
        compiler_params=pltpu.CompilerParams(
            dimension_semantics=("parallel", "arbitrary"),
            vmem_limit_bytes=_VMEM_LIMIT,
        ),
    )(x, w, b, res, gamma, beta, scale)


# ----------------------------------------------------------------------------
# Kernel 3: masked scaled-dot-product attention (per-head loop, lane-dense I/O)
#   * q/k/v are (B, T, H*d) - no head-split transposes outside the kernel.
#   * 1/sqrt(dk) is already folded into the Q projection weights.
#   * mask arrives as an additive f32 bias (0 / -1e30) broadcast over heads.
#   * attn probabilities are NOT written back (Decoder.forward never returns them).
# ----------------------------------------------------------------------------
def _sdpa_kernel(q_ref, k_ref, v_ref, bias_ref, o_ref, *, num_heads,
                 dim_key, dim_value):
    q = q_ref[0]                                   # (tq, H*dk)  bf16
    k = k_ref[0]                                   # (Tk, H*dk)  bf16
    v = v_ref[0]                                   # (Tk, H*dv)  bf16
    bias = bias_ref[0]                             # (tq, Tk)    f32
    outs = []
    for h in range(num_heads):                     # only one (tq, Tk) block live
        q_h = q[:, h * dim_key:(h + 1) * dim_key]
        k_h = k[:, h * dim_key:(h + 1) * dim_key]
        v_h = v[:, h * dim_value:(h + 1) * dim_value]
        s = jax.lax.dot_general(q_h, k_h, (((1,), (1,)), ((), ())),
                                preferred_element_type=jnp.float32)   # (tq, Tk)
        s = s + bias                               # masked_fill(-inf) equivalent
        m = jnp.max(s, axis=-1, keepdims=True)
        e = jnp.exp(s - m)
        p = e * pl.reciprocal(jnp.sum(e, axis=-1, keepdims=True), approx=True)
        outs.append(jnp.dot(p.astype(v_h.dtype), v_h,
                            preferred_element_type=jnp.float32))      # (tq, dv)
    o_ref[0] = jnp.concatenate(outs, axis=-1).astype(o_ref.dtype)     # dense store


def sdpa(q, k, v, bias, *, num_heads, dim_key, dim_value, max_tq=128):
    """q: (B,Tq,H*dk), k: (B,Tk,H*dk), v: (B,Tk,H*dv) bf16; bias: (B,Tq,Tk) f32."""
    B, Tq, _ = q.shape
    _, Tk, _ = k.shape
    hdk = num_heads * dim_key
    hdv = num_heads * dim_value
    tq = _pick_tile(Tq, max_tq, 8)
    grid = (B, Tq // tq)
    kernel = functools.partial(_sdpa_kernel, num_heads=num_heads,
                               dim_key=dim_key, dim_value=dim_value)
    return pl.pallas_call(
        kernel,
        out_shape=jax.ShapeDtypeStruct((B, Tq, hdv), A_DTYPE),
        grid=grid,
        in_specs=[
            pl.BlockSpec((1, tq, hdk), lambda b, qi: (b, qi, 0)),
            pl.BlockSpec((1, Tk, hdk), lambda b, qi: (b, 0, 0)),
            pl.BlockSpec((1, Tk, hdv), lambda b, qi: (b, 0, 0)),
            pl.BlockSpec((1, tq, Tk), lambda b, qi: (b, qi, 0)),
        ],
        out_specs=pl.BlockSpec((1, tq, hdv), lambda b, qi: (b, qi, 0)),
        compiler_params=pltpu.CompilerParams(
            dimension_semantics=("parallel", "parallel"),
            vmem_limit_bytes=_VMEM_LIMIT,
        ),
    )(q, k, v, bias)


# ----------------------------------------------------------------------------
# Module glue (layouts / masks in plain JAX, hot paths in the kernels above)
# ----------------------------------------------------------------------------
def multi_head_attention(p, q_in, kv_in, mask_bias, npm_flat, *, num_heads,
                         dim_key, dim_value, is_self_attn):
    B, Tq, D = q_in.shape
    _, Tk, _ = kv_in.shape
    H, dk, dv = num_heads, dim_key, dim_value

    q_flat = q_in.reshape(B * Tq, D)
    residual = q_flat

    if is_self_attn:
        qkv = linear(q_flat, p["w_qkv"], p["b_qkv"])           # fused Q|K|V
        q_p = qkv[:, : H * dk]
        k_p = qkv[:, H * dk: 2 * H * dk]
        v_p = qkv[:, 2 * H * dk:]
    else:
        kv_flat = kv_in.reshape(B * Tk, D)
        q_p = linear(q_flat, p["w_q"], p["b_q"])
        kv = linear(kv_flat, p["w_kv"], p["b_kv"])             # fused K|V
        k_p = kv[:, : H * dk]
        v_p = kv[:, H * dk:]

    # keep the fused head layout; pure reshapes, no transposes
    q3 = q_p.reshape(B, Tq, H * dk)
    k3 = k_p.reshape(B, Tk, H * dk)
    v3 = v_p.reshape(B, Tk, H * dv)

    ctx = sdpa(q3, k3, v3, mask_bias,
               num_heads=H, dim_key=dk, dim_value=dv)          # (B, Tq, H*dv)
    ctx_flat = ctx.reshape(B * Tq, H * dv)

    # output projection + residual + LayerNorm + non-pad mask, fused in one kernel
    out = linear_add_layernorm(ctx_flat, p["w_o"], p["b_o"], residual,
                               p["ln_g"], p["ln_b"], npm_flat)
    return out.reshape(B, Tq, D)


def positionwise_ffn(fp, x, npm_flat):
    B, T, D = x.shape
    x_flat = x.reshape(B * T, D)
    h = linear(x_flat, fp["w1"], fp["b1"], activation="relu")   # conv_1 (1x1) + ReLU
    out = linear_add_layernorm(h, fp["w2"], fp["b2"], x_flat,   # conv_2 + res + LN + mask
                               fp["ln_g"], fp["ln_b"], npm_flat)
    return out.reshape(B, T, D)


def decoder_layer(lp, x, enc_out, npm_flat, self_bias, dec_enc_bias, cfg):
    x = multi_head_attention(lp["self_attn"], x, x, self_bias, npm_flat,
                             is_self_attn=True, **cfg)
    x = multi_head_attention(lp["enc_attn"], x, enc_out, dec_enc_bias, npm_flat,
                             is_self_attn=False, **cfg)
    x = positionwise_ffn(lp["ffn"], x, npm_flat)
    return x


def decoder_forward(params, seq_in_pad, encoder_outputs, encoder_lengths, *,
                    num_heads, dim_key, dim_value, pad_idx):
    """seq_in_pad: (B, T) int32; encoder_outputs: (B, Te, D); encoder_lengths: (B,)."""
    B, T = seq_in_pad.shape
    _, Te, D = encoder_outputs.shape

    # ---- masks -> additive biases (tiny iota/elementwise work, XLA glue) ----
    non_pad = (seq_in_pad != pad_idx).astype(jnp.float32).reshape(B * T, 1)
    subseq = jnp.triu(jnp.ones((T, T), jnp.int32), k=1)[None, :, :]
    keypad = (seq_in_pad == pad_idx).astype(jnp.int32)[:, None, :]
    self_mask = (keypad + subseq) > 0                                       # (B,T,T)
    enc_pos = jnp.arange(Te, dtype=jnp.int32)[None, :]
    dec_enc_mask = jnp.broadcast_to(
        (enc_pos >= encoder_lengths[:, None])[:, None, :], (B, T, Te))      # (B,T,Te)
    self_bias = jnp.where(self_mask, jnp.float32(-1e30), jnp.float32(0.0))
    dec_enc_bias = jnp.where(dec_enc_mask, jnp.float32(-1e30), jnp.float32(0.0))

    # ---- embedding + positional encoding (gather left to XLA) ----
    x = params["emb"][seq_in_pad] * X_LOGIT_SCALE + params["pe"][None, :T, :]
    x = x.astype(A_DTYPE)
    enc_out = encoder_outputs.astype(A_DTYPE)

    cfg = dict(num_heads=num_heads, dim_key=dim_key, dim_value=dim_value)
    for lp in params["layers"]:
        x = decoder_layer(lp, x, enc_out, non_pad, self_bias, dec_enc_bias, cfg)

    # final vocab projection (no bias in the PyTorch module); logits kept in f32
    logits = linear(x.reshape(B * T, D), params["w_out"], params["b_out"],
                    out_dtype=jnp.float32)
    V = params["w_out"].shape[1]
    return logits.reshape(B, T, V)


# ----------------------------------------------------------------------------
# Parameter construction (deterministic, mirrors the PyTorch __init__ inits)
# ----------------------------------------------------------------------------
def init_decoder_params(key, *, num_layers, num_heads, dim_model, dim_inner,
                        dim_key, dim_value, vocab_size, pad_idx, max_length):
    H, D, dk, dv = num_heads, dim_model, dim_key, dim_value
    keys = jax.random.split(key, 2 + num_layers)

    def normal(k, shape, std):
        return std * jax.random.normal(k, shape, jnp.float32)

    def uniform_bias(k, fan_in, n):
        bound = 1.0 / math.sqrt(fan_in)
        return jax.random.uniform(k, (1, n), jnp.float32, -bound, bound)

    # embedding (padding row zeroed, as nn.Embedding(padding_idx=...) does)
    emb = jax.random.normal(keys[0], (vocab_size, D), jnp.float32)
    emb = emb.at[pad_idx].set(0.0)

    # sinusoidal positional encoding table
    pos = jnp.arange(max_length, dtype=jnp.float32)[:, None]
    exp_term = jnp.exp(jnp.arange(0, D, 2, dtype=jnp.float32)
                       * (-(math.log(10000.0) / D)))
    pe = jnp.zeros((max_length, D), jnp.float32)
    pe = pe.at[:, 0::2].set(jnp.sin(pos * exp_term))
    pe = pe.at[:, 1::2].set(jnp.cos(pos * exp_term))

    std_qk = math.sqrt(2.0 / (D + dk))
    std_v = math.sqrt(2.0 / (D + dv))
    std_o = math.sqrt(2.0 / (H * dv + D))
    std_ffn1 = math.sqrt(2.0 / (D + dim_inner))
    std_ffn2 = math.sqrt(2.0 / (dim_inner + D))
    std_out = math.sqrt(2.0 / (D + vocab_size))
    inv_temp = 1.0 / math.sqrt(dk)                 # folded into Q projection

    def mha_params(k, cross):
        ks = jax.random.split(k, 8)
        w_q = normal(ks[0], (D, H * dk), std_qk) * inv_temp
        w_k = normal(ks[1], (D, H * dk), std_qk)
        w_v = normal(ks[2], (D, H * dv), std_v)
        b_q = uniform_bias(ks[3], D, H * dk) * inv_temp
        b_k = uniform_bias(ks[4], D, H * dk)
        b_v = uniform_bias(ks[5], D, H * dv)
        p = {
            "w_o": normal(ks[6], (H * dv, D), std_o).astype(W_DTYPE),
            "b_o": uniform_bias(ks[7], H * dv, D),
            "ln_g": jnp.ones((1, D), jnp.float32),
            "ln_b": jnp.zeros((1, D), jnp.float32),
        }
        if cross:
            p["w_q"], p["b_q"] = w_q.astype(W_DTYPE), b_q
            p["w_kv"] = jnp.concatenate([w_k, w_v], axis=1).astype(W_DTYPE)
            p["b_kv"] = jnp.concatenate([b_k, b_v], axis=1)
        else:
            p["w_qkv"] = jnp.concatenate([w_q, w_k, w_v], axis=1).astype(W_DTYPE)
            p["b_qkv"] = jnp.concatenate([b_q, b_k, b_v], axis=1)
        return p

    def ffn_params(k):
        ks = jax.random.split(k, 4)
        return {
            "w1": normal(ks[0], (D, dim_inner), std_ffn1).astype(W_DTYPE),
            "b1": uniform_bias(ks[1], D, dim_inner),
            "w2": normal(ks[2], (dim_inner, D), std_ffn2).astype(W_DTYPE),
            "b2": uniform_bias(ks[3], dim_inner, D),
            "ln_g": jnp.ones((1, D), jnp.float32),
            "ln_b": jnp.zeros((1, D), jnp.float32),
        }

    layers = []
    for li in range(num_layers):
        k_self, k_cross, k_ffn = jax.random.split(keys[2 + li], 3)
        layers.append({
            "self_attn": mha_params(k_self, cross=False),
            "enc_attn": mha_params(k_cross, cross=True),
            "ffn": ffn_params(k_ffn),
        })

    return {
        "emb": emb,
        "pe": pe,
        "layers": layers,
        "w_out": normal(keys[1], (D, vocab_size), std_out).astype(W_DTYPE),
        "b_out": jnp.zeros((1, vocab_size), jnp.float32),   # output_linear has bias=False
    }


if __name__ == "__main__":
    # Small deterministic example (stand-ins for the uyghur_latin tokenizer).
    NUM_LAYERS, NUM_HEADS = 2, 4
    DIM_MODEL, DIM_INNER, DIM_KEY, DIM_VALUE = 32, 64, 8, 8
    VOCAB, PAD_IDX, MAX_LEN = 40, 0, 64
    B, T_DEC, T_ENC = 2, 8, 16

    root = jax.random.PRNGKey(0)
    k_params, k_tok, k_enc = jax.random.split(root, 3)

    params = init_decoder_params(
        k_params, num_layers=NUM_LAYERS, num_heads=NUM_HEADS, dim_model=DIM_MODEL,
        dim_inner=DIM_INNER, dim_key=DIM_KEY, dim_value=DIM_VALUE,
        vocab_size=VOCAB, pad_idx=PAD_IDX, max_length=MAX_LEN)

    seq = jax.random.randint(k_tok, (B, T_DEC), 1, VOCAB, dtype=jnp.int32)
    seq = seq.at[1, -2:].set(PAD_IDX)                       # trailing padding in item 1
    enc_out = jax.random.normal(k_enc, (B, T_ENC, DIM_MODEL), jnp.float32)
    enc_lengths = jnp.array([T_ENC, T_ENC - 5], jnp.int32)

    fwd = jax.jit(functools.partial(
        decoder_forward, num_heads=NUM_HEADS, dim_key=DIM_KEY,
        dim_value=DIM_VALUE, pad_idx=PAD_IDX))

    logits = fwd(params, seq, enc_out, enc_lengths)
    jax.block_until_ready(logits)

    assert logits.shape == (B, T_DEC, VOCAB)
    assert bool(jnp.all(jnp.isfinite(logits)))
    print("KERNEL_OK")
</pallas_src>

<mosaic_0001>
module attributes {stable_mosaic.version = 11 : i64} {
  func.func @_linear_kernel(%arg0: i32, %arg1: i32, %arg2: i32, %arg3: memref<16x32xbf16, #tpu.memory_space<vmem>>, %arg4: memref<32x96xbf16, #tpu.memory_space<vmem>>, %arg5: memref<1x96xf32, #tpu.memory_space<vmem>>, %arg6: memref<16x96xbf16, #tpu.memory_space<vmem>>, %arg7: memref<16x96xf32, #tpu.memory_space<vmem>>) attributes {dimension_semantics = [#tpu.dimension_semantics<parallel>, #tpu.dimension_semantics<parallel>, #tpu.dimension_semantics<arbitrary>], iteration_bounds = array<i64: 1, 1, 1>, scalar_prefetch = 0 : i64, scratch_operands = 1 : i64, tpu.core_type = #tpu.core_type<tc>, window_params = [{transform_indices = @transform_0, window_bounds = array<i64: 16, 32>}, {transform_indices = @transform_1, window_bounds = array<i64: 32, 96>}, {transform_indices = @transform_2, window_bounds = array<i64: 1, 96>}, {transform_indices = @transform_3, window_bounds = array<i64: 16, 96>}]} {
    %c0_i32 = arith.constant 0 : i32
    %0 = arith.cmpi eq, %arg2, %c0_i32 : i32
    %1 = arith.extui %0 : i1 to i32
    %c0_i32_0 = arith.constant 0 : i32
    %2 = arith.cmpi ne, %1, %c0_i32_0 : i32
    scf.if %2 {
      %cst_10 = arith.constant 0.000000e+00 : f32
      %12 = vector.broadcast %cst_10 : f32 to vector<16x96xf32>
      %c0_11 = arith.constant 0 : index
      %c0_12 = arith.constant 0 : index
      %13 = vector.load %arg7[%c0_11, %c0_12] : memref<16x96xf32, #tpu.memory_space<vmem>>, vector<16x96xf32>
      tpu.vector_store %arg7[%c0_11, %c0_12], %12 {strides = array<i32>} : memref<16x96xf32, #tpu.memory_space<vmem>>, vector<16x96xf32>,
    } else {
    }
    %c0 = arith.constant 0 : index
    %c0_1 = arith.constant 0 : index
    %3 = vector.load %arg7[%c0, %c0_1] : memref<16x96xf32, #tpu.memory_space<vmem>>, vector<16x96xf32>
    %c0_2 = arith.constant 0 : index
    %c0_3 = arith.constant 0 : index
    %4 = vector.load %arg3[%c0_2, %c0_3] : memref<16x32xbf16, #tpu.memory_space<vmem>>, vector<16x32xbf16>
    %c0_4 = arith.constant 0 : index
    %c0_5 = arith.constant 0 : index
    %5 = vector.load %arg4[%c0_4, %c0_5] : memref<32x96xbf16, #tpu.memory_space<vmem>>, vector<32x96xbf16>
    %cst = arith.constant dense<0.000000e+00> : vector<16x96xf32>
    %6 = tpu.matmul %4, %5, %cst {dimension_numbers = #tpu.dot_dimension_numbers<[1], [0], [0], [1], [0, 0, 1, 1], [], []>} : vector<16x32xbf16>, vector<32x96xbf16>, vector<16x96xf32> -> vector<16x96xf32>
    %7 = arith.addf %3, %6 : vector<16x96xf32>
    %c0_6 = arith.constant 0 : index
    %c0_7 = arith.constant 0 : index
    %8 = vector.load %arg7[%c0_6, %c0_7] : memref<16x96xf32, #tpu.memory_space<vmem>>, vector<16x96xf32>
    tpu.vector_store %arg7[%c0_6, %c0_7], %7 {strides = array<i32>} : memref<16x96xf32, #tpu.memory_space<vmem>>, vector<16x96xf32>,
    %c0_i32_8 = arith.constant 0 : i32
    %9 = arith.cmpi eq, %arg2, %c0_i32_8 : i32
    %10 = arith.extui %9 : i1 to i32
    %c0_i32_9 = arith.constant 0 : i32
    %11 = arith.cmpi ne, %10, %c0_i32_9 : i32
    scf.if %11 {
      %c0_10 = arith.constant 0 : index
      %c0_11 = arith.constant 0 : index
      %12 = vector.load %arg7[%c0_10, %c0_11] : memref<16x96xf32, #tpu.memory_space<vmem>>, vector<16x96xf32>
      %c0_12 = arith.constant 0 : index
      %c0_13 = arith.constant 0 : index
      %13 = vector.load %arg5[%c0_12, %c0_13] : memref<1x96xf32, #tpu.memory_space<vmem>>, vector<1x96xf32>
      %14 = vector.broadcast %13 : vector<1x96xf32> to vector<16x96xf32>
      %15 = arith.addf %12, %14 : vector<16x96xf32>
      %16 = arith.truncf %15 : vector<16x96xf32> to vector<16x96xbf16>
      %c0_14 = arith.constant 0 : index
      %c0_15 = arith.constant 0 : index
      %17 = vector.load %arg6[%c0_14, %c0_15] : memref<16x96xbf16, #tpu.memory_space<vmem>>, vector<16x96xbf16>
      tpu.vector_store %arg6[%c0_14, %c0_15], %16 {strides = array<i32>} : memref<16x96xbf16, #tpu.memory_space<vmem>>, vector<16x96xbf16>,
    } else {
    }
    return
  }
  func.func @transform_0(%arg0: i32, %arg1: i32, %arg2: i32) -> (i32, i32) {
    %c0_i32 = arith.constant 0 : i32
    return %arg0, %arg2 : i32, i32
  }
  func.func @transform_1(%arg0: i32, %arg1: i32, %arg2: i32) -> (i32, i32) {
    %c0_i32 = arith.constant 0 : i32
    return %arg2, %arg1 : i32, i32
  }
  func.func @transform_2(%arg0: i32, %arg1: i32, %arg2: i32) -> (i32, i32) {
    %c0_i32 = arith.constant 0 : i32
    %c0_i32_0 = arith.constant 0 : i32
    return %c0_i32, %arg1 : i32, i32
  }
  func.func @transform_3(%arg0: i32, %arg1: i32, %arg2: i32) -> (i32, i32) {
    %c0_i32 = arith.constant 0 : i32
    return %arg0, %arg1 : i32, i32
  }
}

module attributes {stable_mosaic.version = 11 : i64} {
  func.func @_linear_add_ln_kernel(%arg0: i32, %arg1: i32, %arg2: memref<16x32xbf16, #tpu.memory_space<vmem>>, %arg3: memref<32x32xbf16, #tpu.memory_space<vmem>>, %arg4: memref<1x32xf32, #tpu.memory_space<vmem>>, %arg5: memref<16x32xbf16, #tpu.memory_space<vmem>>, %arg6: memref<1x32xf32, #tpu.memory_space<vmem>>, %arg7: memref<1x32xf32, #tpu.memory_space<vmem>>, %arg8: memref<16x1xf32, #tpu.memory_space<vmem>>, %arg9: memref<16x32xbf16, #tpu.memory_space<vmem>>, %arg10: memref<16x32xf32, #tpu.memory_space<vmem>>) attributes {dimension_semantics = [#tpu.dimension_semantics<parallel>, #tpu.dimension_semantics<arbitrary>], iteration_bounds = array<i64: 1, 1>, scalar_prefetch = 0 : i64, scratch_operands = 1 : i64, tpu.core_type = #tpu.core_type<tc>, window_params = [{transform_indices = @transform_0, window_bounds = array<i64: 16, 32>}, {transform_indices = @transform_1, window_bounds = array<i64: 32, 32>}, {pipeline_mode = #tpu.pipeline_mode<synchronous>, transform_indices = @transform_2, window_bounds = array<i64: 1, 32>}, {transform_indices = @transform_3, window_bounds = array<i64: 16, 32>}, {pipeline_mode = #tpu.pipeline_mode<synchronous>, transform_indices = @transform_4, window_bounds = array<i64: 1, 32>}, {pipeline_mode = #tpu.pipeline_mode<synchronous>, transform_indices = @transform_5, window_bounds = array<i64: 1, 32>}, {transform_indices = @transform_6, window_bounds = array<i64: 16, 1>}, {transform_indices = @transform_7, window_bounds = array<i64: 16, 32>}]} {
    %c0_i32 = arith.constant 0 : i32
    %0 = arith.cmpi eq, %arg1, %c0_i32 : i32
    %1 = arith.extui %0 : i1 to i32
    %c0_i32_0 = arith.constant 0 : i32
    %2 = arith.cmpi ne, %1, %c0_i32_0 : i32
    scf.if %2 {
      %cst_10 = arith.constant 0.000000e+00 : f32
      %12 = vector.broadcast %cst_10 : f32 to vector<16x32xf32>
      %c0_11 = arith.constant 0 : index
      %c0_12 = arith.constant 0 : index
      %13 = vector.load %arg10[%c0_11, %c0_12] : memref<16x32xf32, #tpu.memory_space<vmem>>, vector<16x32xf32>
      tpu.vector_store %arg10[%c0_11, %c0_12], %12 {strides = array<i32>} : memref<16x32xf32, #tpu.memory_space<vmem>>, vector<16x32xf32>,
    } else {
    }
    %c0 = arith.constant 0 : index
    %c0_1 = arith.constant 0 : index
    %3 = vector.load %arg10[%c0, %c0_1] : memref<16x32xf32, #tpu.memory_space<vmem>>, vector<16x32xf32>
    %c0_2 = arith.constant 0 : index
    %c0_3 = arith.constant 0 : index
    %4 = vector.load %arg2[%c0_2, %c0_3] : memref<16x32xbf16, #tpu.memory_space<vmem>>, vector<16x32xbf16>
    %c0_4 = arith.constant 0 : index
    %c0_5 = arith.constant 0 : index
    %5 = vector.load %arg3[%c0_4, %c0_5] : memref<32x32xbf16, #tpu.memory_space<vmem>>, vector<32x32xbf16>
    %cst = arith.constant dense<0.000000e+00> : vector<16x32xf32>
    %6 = tpu.matmul %4, %5, %cst {dimension_numbers = #tpu.dot_dimension_numbers<[1], [0], [0], [1], [0, 0, 1, 1], [], []>} : vector<16x32xbf16>, vector<32x32xbf16>, vector<16x32xf32> -> vector<16x32xf32>
    %7 = arith.addf %3, %6 : vector<16x32xf32>
    %c0_6 = arith.constant 0 : index
    %c0_7 = arith.constant 0 : index
    %8 = vector.load %arg10[%c0_6, %c0_7] : memref<16x32xf32, #tpu.memory_space<vmem>>, vector<16x32xf32>
    tpu.vector_store %arg10[%c0_6, %c0_7], %7 {strides = array<i32>} : memref<16x32xf32, #tpu.memory_space<vmem>>, vector<16x32xf32>,
    %c0_i32_8 = arith.constant 0 : i32
    %9 = arith.cmpi eq, %arg1, %c0_i32_8 : i32
    %10 = arith.extui %9 : i1 to i32
    %c0_i32_9 = arith.constant 0 : i32
    %11 = arith.cmpi ne, %10, %c0_i32_9 : i32
    scf.if %11 {
      %c0_10 = arith.constant 0 : index
      %c0_11 = arith.constant 0 : index
      %12 = vector.load %arg10[%c0_10, %c0_11] : memref<16x32xf32, #tpu.memory_space<vmem>>, vector<16x32xf32>
      %c0_12 = arith.constant 0 : index
      %c0_13 = arith.constant 0 : index
      %13 = vector.load %arg4[%c0_12, %c0_13] : memref<1x32xf32, #tpu.memory_space<vmem>>, vector<1x32xf32>
      %14 = vector.broadcast %13 : vector<1x32xf32> to vector<16x32xf32>
      %15 = arith.addf %12, %14 : vector<16x32xf32>
      %c0_14 = arith.constant 0 : index
      %c0_15 = arith.constant 0 : index
      %16 = vector.load %arg5[%c0_14, %c0_15] : memref<16x32xbf16, #tpu.memory_space<vmem>>, vector<16x32xbf16>
      %17 = arith.extf %16 : vector<16x32xbf16> to vector<16x32xf32>
      %18 = arith.addf %15, %17 : vector<16x32xf32>
      %cst_16 = arith.constant dense<0.000000e+00> : vector<16xf32>
      %19 = vector.multi_reduction <add>, %18, %cst_16 [1] : vector<16x32xf32> to vector<16xf32>
      %20 = vector.shape_cast %19 : vector<16xf32> to vector<16x1xf32>
      %cst_17 = arith.constant 3.200000e+01 : f32
      %21 = vector.broadcast %cst_17 : f32 to vector<16x1xf32>
      %22 = arith.divf %20, %21 : vector<16x1xf32>
      %23 = vector.broadcast %22 : vector<16x1xf32> to vector<16x32xf32>
      %24 = arith.subf %18, %23 : vector<16x32xf32>
      %25 = arith.mulf %24, %24 : vector<16x32xf32>
      %cst_18 = arith.constant dense<0.000000e+00> : vector<16xf32>
      %26 = vector.multi_reduction <add>, %25, %cst_18 [1] : vector<16x32xf32> to vector<16xf32>
      %27 = vector.shape_cast %26 : vector<16xf32> to vector<16x1xf32>
      %cst_19 = arith.constant 3.200000e+01 : f32
      %28 = vector.broadcast %cst_19 : f32 to vector<16x1xf32>
      %29 = arith.divf %27, %28 : vector<16x1xf32>
      %30 = vector.broadcast %22 : vector<16x1xf32> to vector<16x32xf32>
      %31 = arith.subf %18, %30 : vector<16x32xf32>
      %cst_20 = arith.constant 9.99999974E-6 : f32
      %32 = vector.broadcast %cst_20 : f32 to vector<16x1xf32>
      %33 = arith.addf %29, %32 : vector<16x1xf32>
      %34 = math.rsqrt %33 : vector<16x1xf32>
      %35 = vector.broadcast %34 : vector<16x1xf32> to vector<16x32xf32>
      %36 = arith.mulf %31, %35 : vector<16x32xf32>
      %c0_21 = arith.constant 0 : index
      %c0_22 = arith.constant 0 : index
      %37 = vector.load %arg6[%c0_21, %c0_22] : memref<1x32xf32, #tpu.memory_space<vmem>>, vector<1x32xf32>
      %38 = vector.broadcast %37 : vector<1x32xf32> to vector<16x32xf32>
      %39 = arith.mulf %36, %38 : vector<16x32xf32>
      %c0_23 = arith.constant 0 : index
      %c0_24 = arith.constant 0 : index
      %40 = vector.load %arg7[%c0_23, %c0_24] : memref<1x32xf32, #tpu.memory_space<vmem>>, vector<1x32xf32>
      %41 = vector.broadcast %40 : vector<1x32xf32> to vector<16x32xf32>
      %42 = arith.addf %39, %41 : vector<16x32xf32>
      %c0_25 = arith.constant 0 : index
      %c0_26 = arith.constant 0 : index
      %43 = vector.load %arg8[%c0_25, %c0_26] : memref<16x1xf32, #tpu.memory_space<vmem>>, vector<16x1xf32>
      %44 = vector.broadcast %43 : vector<16x1xf32> to vector<16x32xf32>
      %45 = arith.mulf %42, %44 : vector<16x32xf32>
      %46 = arith.truncf %45 : vector<16x32xf32> to vector<16x32xbf16>
      %c0_27 = arith.constant 0 : index
      %c0_28 = arith.constant 0 : index
      %47 = vector.load %arg9[%c0_27, %c0_28] : memref<16x32xbf16, #tpu.memory_space<vmem>>, vector<16x32xbf16>
      tpu.vector_store %arg9[%c0_27, %c0_28], %46 {strides = array<i32>} : memref<16x32xbf16, #tpu.memory_space<vmem>>, vector<16x32xbf16>,
    } else {
    }
    return
  }
  func.func @transform_0(%arg0: i32, %arg1: i32) -> (i32, i32) {
    %c0_i32 = arith.constant 0 : i32
    return %arg0, %arg1 : i32, i32
  }
  func.func @transform_1(%arg0: i32, %arg1: i32) -> (i32, i32) {
    %c0_i32 = arith.constant 0 : i32
    %c0_i32_0 = arith.constant 0 : i32
    return %arg1, %c0_i32 : i32, i32
  }
  func.func @transform_2(%arg0: i32, %arg1: i32) -> (i32, i32) {
    %c0_i32 = arith.constant 0 : i32
    %c0_i32_0 = arith.constant 0 : i32
    %c0_i32_1 = arith.constant 0 : i32
    return %c0_i32, %c0_i32_0 : i32, i32
  }
  func.func @transform_3(%arg0: i32, %arg1: i32) -> (i32, i32) {
    %c0_i32 = arith.constant 0 : i32
    %c0_i32_0 = arith.constant 0 : i32
    return %arg0, %c0_i32 : i32, i32
  }
  func.func @transform_4(%arg0: i32, %arg1: i32) -> (i32, i32) {
    %c0_i32 = arith.constant 0 : i32
    %c0_i32_0 = arith.constant 0 : i32
    %c0_i32_1 = arith.constant 0 : i32
    return %c0_i32, %c0_i32_0 : i32, i32
  }
  func.func @transform_5(%arg0: i32, %arg1: i32) -> (i32, i32) {
    %c0_i32 = arith.constant 0 : i32
    %c0_i32_0 = arith.constant 0 : i32
    %c0_i32_1 = arith.constant 0 : i32
    return %c0_i32, %c0_i32_0 : i32, i32
  }
  func.func @transform_6(%arg0: i32, %arg1: i32) -> (i32, i32) {
    %c0_i32 = arith.constant 0 : i32
    %c0_i32_0 = arith.constant 0 : i32
    return %arg0, %c0_i32 : i32, i32
  }
  func.func @transform_7(%arg0: i32, %arg1: i32) -> (i32, i32) {
    %c0_i32 = arith.constant 0 : i32
    %c0_i32_0 = arith.constant 0 : i32
    return %arg0, %c0_i32 : i32, i32
  }
}

module attributes {stable_mosaic.version = 11 : i64} {
  func.func @_linear_kernel(%arg0: i32, %arg1: i32, %arg2: i32, %arg3: memref<16x32xbf16, #tpu.memory_space<vmem>>, %arg4: memref<32x32xbf16, #tpu.memory_space<vmem>>, %arg5: memref<1x32xf32, #tpu.memory_space<vmem>>, %arg6: memref<16x32xbf16, #tpu.memory_space<vmem>>, %arg7: memref<16x32xf32, #tpu.memory_space<vmem>>) attributes {dimension_semantics = [#tpu.dimension_semantics<parallel>, #tpu.dimension_semantics<parallel>, #tpu.dimension_semantics<arbitrary>], iteration_bounds = array<i64: 1, 1, 1>, scalar_prefetch = 0 : i64, scratch_operands = 1 : i64, tpu.core_type = #tpu.core_type<tc>, window_params = [{transform_indices = @transform_0, window_bounds = array<i64: 16, 32>}, {transform_indices = @transform_1, window_bounds = array<i64: 32, 32>}, {transform_indices = @transform_2, window_bounds = array<i64: 1, 32>}, {transform_indices = @transform_3, window_bounds = array<i64: 16, 32>}]} {
    %c0_i32 = arith.constant 0 : i32
    %0 = arith.cmpi eq, %arg2, %c0_i32 : i32
    %1 = arith.extui %0 : i1 to i32
    %c0_i32_0 = arith.constant 0 : i32
    %2 = arith.cmpi ne, %1, %c0_i32_0 : i32
    scf.if %2 {
      %cst_10 = arith.constant 0.000000e+00 : f32
      %12 = vector.broadcast %cst_10 : f32 to vector<16x32xf32>
      %c0_11 = arith.constant 0 : index
      %c0_12 = arith.constant 0 : index
      %13 = vector.load %arg7[%c0_11, %c0_12] : memref<16x32xf32, #tpu.memory_space<vmem>>, vector<16x32xf32>
      tpu.vector_store %arg7[%c0_11, %c0_12], %12 {strides = array<i32>} : memref<16x32xf32, #tpu.memory_space<vmem>>, vector<16x32xf32>,
    } else {
    }
    %c0 = arith.constant 0 : index
    %c0_1 = arith.constant 0 : index
    %3 = vector.load %arg7[%c0, %c0_1] : memref<16x32xf32, #tpu.memory_space<vmem>>, vector<16x32xf32>
    %c0_2 = arith.constant 0 : index
    %c0_3 = arith.constant 0 : index
    %4 = vector.load %arg3[%c0_2, %c0_3] : memref<16x32xbf16, #tpu.memory_space<vmem>>, vector<16x32xbf16>
    %c0_4 = arith.constant 0 : index
    %c0_5 = arith.constant 0 : index
    %5 = vector.load %arg4[%c0_4, %c0_5] : memref<32x32xbf16, #tpu.memory_space<vmem>>, vector<32x32xbf16>
    %cst = arith.constant dense<0.000000e+00> : vector<16x32xf32>
    %6 = tpu.matmul %4, %5, %cst {dimension_numbers = #tpu.dot_dimension_numbers<[1], [0], [0], [1], [0, 0, 1, 1], [], []>} : vector<16x32xbf16>, vector<32x32xbf16>, vector<16x32xf32> -> vector<16x32xf32>
    %7 = arith.addf %3, %6 : vector<16x32xf32>
    %c0_6 = arith.constant 0 : index
    %c0_7 = arith.constant 0 : index
    %8 = vector.load %arg7[%c0_6, %c0_7] : memref<16x32xf32, #tpu.memory_space<vmem>>, vector<16x32xf32>
    tpu.vector_store %arg7[%c0_6, %c0_7], %7 {strides = array<i32>} : memref<16x32xf32, #tpu.memory_space<vmem>>, vector<16x32xf32>,
    %c0_i32_8 = arith.constant 0 : i32
    %9 = arith.cmpi eq, %arg2, %c0_i32_8 : i32
    %10 = arith.extui %9 : i1 to i32
    %c0_i32_9 = arith.constant 0 : i32
    %11 = arith.cmpi ne, %10, %c0_i32_9 : i32
    scf.if %11 {
      %c0_10 = arith.constant 0 : index
      %c0_11 = arith.constant 0 : index
      %12 = vector.load %arg7[%c0_10, %c0_11] : memref<16x32xf32, #tpu.memory_space<vmem>>, vector<16x32xf32>
      %c0_12 = arith.constant 0 : index
      %c0_13 = arith.constant 0 : index
      %13 = vector.load %arg5[%c0_12, %c0_13] : memref<1x32xf32, #tpu.memory_space<vmem>>, vector<1x32xf32>
      %14 = vector.broadcast %13 : vector<1x32xf32> to vector<16x32xf32>
      %15 = arith.addf %12, %14 : vector<16x32xf32>
      %16 = arith.truncf %15 : vector<16x32xf32> to vector<16x32xbf16>
      %c0_14 = arith.constant 0 : index
      %c0_15 = arith.constant 0 : index
      %17 = vector.load %arg6[%c0_14, %c0_15] : memref<16x32xbf16, #tpu.memory_space<vmem>>, vector<16x32xbf16>
      tpu.vector_store %arg6[%c0_14, %c0_15], %16 {strides = array<i32>} : memref<16x32xbf16, #tpu.memory_space<vmem>>, vector<16x32xbf16>,
    } else {
    }
    return
  }
  func.func @transform_0(%arg0: i32, %arg1: i32, %arg2: i32) -> (i32, i32) {
    %c0_i32 = arith.constant 0 : i32
    return %arg0, %arg2 : i32, i32
  }
  func.func @transform_1(%arg0: i32, %arg1: i32, %arg2: i32) -> (i32, i32) {
    %c0_i32 = arith.constant 0 : i32
    return %arg2, %arg1 : i32, i32
  }
  func.func @transform_2(%arg0: i32, %arg1: i32, %arg2: i32) -> (i32, i32) {
    %c0_i32 = arith.constant 0 : i32
    %c0_i32_0 = arith.constant 0 : i32
    return %c0_i32, %arg1 : i32, i32
  }
  func.func @transform_3(%arg0: i32, %arg1: i32, %arg2: i32) -> (i32, i32) {
    %c0_i32 = arith.constant 0 : i32
    return %arg0, %arg1 : i32, i32
  }
}

module attributes {stable_mosaic.version = 11 : i64} {
  func.func @_sdpa_kernel(%arg0: i32, %arg1: i32, %arg2: memref<1x8x32xbf16, #tpu.memory_space<vmem>>, %arg3: memref<1x8x32xbf16, #tpu.memory_space<vmem>>, %arg4: memref<1x8x32xbf16, #tpu.memory_space<vmem>>, %arg5: memref<1x8x8xf32, #tpu.memory_space<vmem>>, %arg6: memref<1x8x32xbf16, #tpu.memory_space<vmem>>) attributes {dimension_semantics = [#tpu.dimension_semantics<parallel>, #tpu.dimension_semantics<parallel>], iteration_bounds = array<i64: 2, 1>, scalar_prefetch = 0 : i64, scratch_operands = 0 : i64, tpu.core_type = #tpu.core_type<tc>, window_params = [{transform_indices = @transform_0, window_bounds = array<i64: 1, 8, 32>}, {transform_indices = @transform_1, window_bounds = array<i64: 1, 8, 32>}, {transform_indices = @transform_2, window_bounds = array<i64: 1, 8, 32>}, {transform_indices = @transform_3, window_bounds = array<i64: 1, 8, 8>}, {transform_indices = @transform_4, window_bounds = array<i64: 1, 8, 32>}]} {
    %c0 = arith.constant 0 : index
    %c0_0 = arith.constant 0 : index
    %c0_1 = arith.constant 0 : index
    %0 = vector.load %arg2[%c0, %c0_0, %c0_1] : memref<1x8x32xbf16, #tpu.memory_space<vmem>>, vector<1x8x32xbf16>
    %1 = vector.shape_cast %0 : vector<1x8x32xbf16> to vector<8x32xbf16>
    %c0_2 = arith.constant 0 : index
    %c0_3 = arith.constant 0 : index
    %c0_4 = arith.constant 0 : index
    %2 = vector.load %arg3[%c0_2, %c0_3, %c0_4] : memref<1x8x32xbf16, #tpu.memory_space<vmem>>, vector<1x8x32xbf16>
    %3 = vector.shape_cast %2 : vector<1x8x32xbf16> to vector<8x32xbf16>
    %c0_5 = arith.constant 0 : index
    %c0_6 = arith.constant 0 : index
    %c0_7 = arith.constant 0 : index
    %4 = vector.load %arg4[%c0_5, %c0_6, %c0_7] : memref<1x8x32xbf16, #tpu.memory_space<vmem>>, vector<1x8x32xbf16>
    %5 = vector.shape_cast %4 : vector<1x8x32xbf16> to vector<8x32xbf16>
    %c0_8 = arith.constant 0 : index
    %c0_9 = arith.constant 0 : index
    %c0_10 = arith.constant 0 : index
    %6 = vector.load %arg5[%c0_8, %c0_9, %c0_10] : memref<1x8x8xf32, #tpu.memory_space<vmem>>, vector<1x8x8xf32>
    %7 = vector.shape_cast %6 : vector<1x8x8xf32> to vector<8x8xf32>
    %8 = vector.extract_strided_slice %1 {offsets = [0, 0], sizes = [8, 8], strides = [1, 1]} : vector<8x32xbf16> to vector<8x8xbf16>
    %9 = vector.extract_strided_slice %3 {offsets = [0, 0], sizes = [8, 8], strides = [1, 1]} : vector<8x32xbf16> to vector<8x8xbf16>
    %10 = vector.extract_strided_slice %5 {offsets = [0, 0], sizes = [8, 8], strides = [1, 1]} : vector<8x32xbf16> to vector<8x8xbf16>
    %cst = arith.constant dense<0.000000e+00> : vector<8x8xf32>
    %11 = tpu.matmul %8, %9, %cst {dimension_numbers = #tpu.dot_dimension_numbers<[1], [1], [0], [0], [0, 0, 1, 0], [], []>} : vector<8x8xbf16>, vector<8x8xbf16>, vector<8x8xf32> -> vector<8x8xf32>
    %12 = arith.addf %11, %7 : vector<8x8xf32>
    %cst_11 = arith.constant dense<0xFF800000> : vector<8xf32>
    %13 = vector.multi_reduction <maximumf>, %12, %cst_11 [1] : vector<8x8xf32> to vector<8xf32>
    %14 = vector.shape_cast %13 : vector<8xf32> to vector<8x1xf32>
    %15 = vector.broadcast %14 : vector<8x1xf32> to vector<8x8xf32>
    %16 = arith.subf %12, %15 : vector<8x8xf32>
    %17 = math.exp %16 : vector<8x8xf32>
    %cst_12 = arith.constant dense<0.000000e+00> : vector<8xf32>
    %18 = vector.multi_reduction <add>, %17, %cst_12 [1] : vector<8x8xf32> to vector<8xf32>
    %19 = vector.shape_cast %18 : vector<8xf32> to vector<8x1xf32>
    %20 = tpu.reciprocal %19 {approx = true} : vector<8x1xf32> -> vector<8x1xf32>
    %21 = vector.broadcast %20 : vector<8x1xf32> to vector<8x8xf32>
    %22 = arith.mulf %17, %21 : vector<8x8xf32>
    %23 = arith.truncf %22 : vector<8x8xf32> to vector<8x8xbf16>
    %cst_13 = arith.constant dense<0.000000e+00> : vector<8x8xf32>
    %24 = tpu.matmul %23, %10, %cst_13 {dimension_numbers = #tpu.dot_dimension_numbers<[1], [0], [0], [1], [0, 0, 1, 1], [], []>} : vector<8x8xbf16>, vector<8x8xbf16>, vector<8x8xf32> -> vector<8x8xf32>
    %25 = vector.extract_strided_slice %1 {offsets = [0, 8], sizes = [8, 8], strides = [1, 1]} : vector<8x32xbf16> to vector<8x8xbf16>
    %26 = vector.extract_strided_slice %3 {offsets = [0, 8], sizes = [8, 8], strides = [1, 1]} : vector<8x32xbf16> to vector<8x8xbf16>
    %27 = vector.extract_strided_slice %5 {offsets = [0, 8], sizes = [8, 8], strides = [1, 1]} : vector<8x32xbf16> to vector<8x8xbf16>
    %cst_14 = arith.constant dense<0.000000e+00> : vector<8x8xf32>
    %28 = tpu.matmul %25, %26, %cst_14 {dimension_numbers = #tpu.dot_dimension_numbers<[1], [1], [0], [0], [0, 0, 1, 0], [], []>} : vector<8x8xbf16>, vector<8x8xbf16>, vector<8x8xf32> -> vector<8x8xf32>
    %29 = arith.addf %28, %7 : vector<8x8xf32>
    %cst_15 = arith.constant dense<0xFF800000> : vector<8xf32>
    %30 = vector.multi_reduction <maximumf>, %29, %cst_15 [1] : vector<8x8xf32> to vector<8xf32>
    %31 = vector.shape_cast %30 : vector<8xf32> to vector<8x1xf32>
    %32 = vector.broadcast %31 : vector<8x1xf32> to vector<8x8xf32>
    %33 = arith.subf %29, %32 : vector<8x8xf32>
    %34 = math.exp %33 : vector<8x8xf32>
    %cst_16 = arith.constant dense<0.000000e+00> : vector<8xf32>
    %35 = vector.multi_reduction <add>, %34, %cst_16 [1] : vector<8x8xf32> to vector<8xf32>
    %36 = vector.shape_cast %35 : vector<8xf32> to vector<8x1xf32>
    %37 = tpu.reciprocal %36 {approx = true} : vector<8x1xf32> -> vector<8x1xf32>
    %38 = vector.broadcast %37 : vector<8x1xf32> to vector<8x8xf32>
    %39 = arith.mulf %34, %38 : vector<8x8xf32>
    %40 = arith.truncf %39 : vector<8x8xf32> to vector<8x8xbf16>
    %cst_17 = arith.constant dense<0.000000e+00> : vector<8x8xf32>
    %41 = tpu.matmul %40, %27, %cst_17 {dimension_numbers = #tpu.dot_dimension_numbers<[1], [0], [0], [1], [0, 0, 1, 1], [], []>} : vector<8x8xbf16>, vector<8x8xbf16>, vector<8x8xf32> -> vector<8x8xf32>
    %42 = vector.extract_strided_slice %1 {offsets = [0, 16], sizes = [8, 8], strides = [1, 1]} : vector<8x32xbf16> to vector<8x8xbf16>
    %43 = vector.extract_strided_slice %3 {offsets = [0, 16], sizes = [8, 8], strides = [1, 1]} : vector<8x32xbf16> to vector<8x8xbf16>
    %44 = vector.extract_strided_slice %5 {offsets = [0, 16], sizes = [8, 8], strides = [1, 1]} : vector<8x32xbf16> to vector<8x8xbf16>
    %cst_18 = arith.constant dense<0.000000e+00> : vector<8x8xf32>
    %45 = tpu.matmul %42, %43, %cst_18 {dimension_numbers = #tpu.dot_dimension_numbers<[1], [1], [0], [0], [0, 0, 1, 0], [], []>} : vector<8x8xbf16>, vector<8x8xbf16>, vector<8x8xf32> -> vector<8x8xf32>
    %46 = arith.addf %45, %7 : vector<8x8xf32>
    %cst_19 = arith.constant dense<0xFF800000> : vector<8xf32>
    %47 = vector.multi_reduction <maximumf>, %46, %cst_19 [1] : vector<8x8xf32> to vector<8xf32>
    %48 = vector.shape_cast %47 : vector<8xf32> to vector<8x1xf32>
    %49 = vector.broadcast %48 : vector<8x1xf32> to vector<8x8xf32>
    %50 = arith.subf %46, %49 : vector<8x8xf32>
    %51 = math.exp %50 : vector<8x8xf32>
    %cst_20 = arith.constant dense<0.000000e+00> : vector<8xf32>
    %52 = vector.multi_reduction <add>, %51, %cst_20 [1] : vector<8x8xf32> to vector<8xf32>
    %53 = vector.shape_cast %52 : vector<8xf32> to vector<8x1xf32>
    %54 = tpu.reciprocal %53 {approx = true} : vector<8x1xf32> -> vector<8x1xf32>
    %55 = vector.broadcast %54 : vector<8x1xf32> to vector<8x8xf32>
    %56 = arith.mulf %51, %55 : vector<8x8xf32>
    %57 = arith.truncf %56 : vector<8x8xf32> to vector<8x8xbf16>
    %cst_21 = arith.constant dense<0.000000e+00> : vector<8x8xf32>
    %58 = tpu.matmul %57, %44, %cst_21 {dimension_numbers = #tpu.dot_dimension_numbers<[1], [0], [0], [1], [0, 0, 1, 1], [], []>} : vector<8x8xbf16>, vector<8x8xbf16>, vector<8x8xf32> -> vector<8x8xf32>
    %59 = vector.extract_strided_slice %1 {offsets = [0, 24], sizes = [8, 8], strides = [1, 1]} : vector<8x32xbf16> to vector<8x8xbf16>
    %60 = vector.extract_strided_slice %3 {offsets = [0, 24], sizes = [8, 8], strides = [1, 1]} : vector<8x32xbf16> to vector<8x8xbf16>
    %61 = vector.extract_strided_slice %5 {offsets = [0, 24], sizes = [8, 8], strides = [1, 1]} : vector<8x32xbf16> to vector<8x8xbf16>
    %cst_22 = arith.constant dense<0.000000e+00> : vector<8x8xf32>
    %62 = tpu.matmul %59, %60, %cst_22 {dimension_numbers = #tpu.dot_dimension_numbers<[1], [1], [0], [0], [0, 0, 1, 0], [], []>} : vector<8x8xbf16>, vector<8x8xbf16>, vector<8x8xf32> -> vector<8x8xf32>
    %63 = arith.addf %62, %7 : vector<8x8xf32>
    %cst_23 = arith.constant dense<0xFF800000> : vector<8xf32>
    %64 = vector.multi_reduction <maximumf>, %63, %cst_23 [1] : vector<8x8xf32> to vector<8xf32>
    %65 = vector.shape_cast %64 : vector<8xf32> to vector<8x1xf32>
    %66 = vector.broadcast %65 : vector<8x1xf32> to vector<8x8xf32>
    %67 = arith.subf %63, %66 : vector<8x8xf32>
    %68 = math.exp %67 : vector<8x8xf32>
    %cst_24 = arith.constant dense<0.000000e+00> : vector<8xf32>
    %69 = vector.multi_reduction <add>, %68, %cst_24 [1] : vector<8x8xf32> to vector<8xf32>
    %70 = vector.shape_cast %69 : vector<8xf32> to vector<8x1xf32>
    %71 = tpu.reciprocal %70 {approx = true} : vector<8x1xf32> -> vector<8x1xf32>
    %72 = vector.broadcast %71 : vector<8x1xf32> to vector<8x8xf32>
    %73 = arith.mulf %68, %72 : vector<8x8xf32>
    %74 = arith.truncf %73 : vector<8x8xf32> to vector<8x8xbf16>
    %cst_25 = arith.constant dense<0.000000e+00> : vector<8x8xf32>
    %75 = tpu.matmul %74, %61, %cst_25 {dimension_numbers = #tpu.dot_dimension_numbers<[1], [0], [0], [1], [0, 0, 1, 1], [], []>} : vector<8x8xbf16>, vector<8x8xbf16>, vector<8x8xf32> -> vector<8x8xf32>
    %76 = tpu.concatenate %24, %41, %58, %75 in 1 : vector<8x8xf32>, vector<8x8xf32>, vector<8x8xf32>, vector<8x8xf32> -> vector<8x32xf32>
    %77 = arith.truncf %76 : vector<8x32xf32> to vector<8x32xbf16>
    %c0_26 = arith.constant 0 : index
    %c0_27 = arith.constant 0 : index
    %c0_28 = arith.constant 0 : index
    %78 = vector.load %arg6[%c0_26, %c0_27, %c0_28] : memref<1x8x32xbf16, #tpu.memory_space<vmem>>, vector<1x8x32xbf16>
    %79 = vector.shape_cast %78 : vector<1x8x32xbf16> to vector<8x32xbf16>
    %80 = vector.shape_cast %77 : vector<8x32xbf16> to vector<1x8x32xbf16>
    tpu.vector_store %arg6[%c0_26, %c0_27, %c0_28], %80 {strides = array<i32>} : memref<1x8x32xbf16, #tpu.memory_space<vmem>>, vector<1x8x32xbf16>,
    return
  }
  func.func @transform_0(%arg0: i32, %arg1: i32) -> (i32, i32, i32) {
    %c0_i32 = arith.constant 0 : i32
    %c0_i32_0 = arith.constant 0 : i32
    return %arg0, %arg1, %c0_i32 : i32, i32, i32
  }
  func.func @transform_1(%arg0: i32, %arg1: i32) -> (i32, i32, i32) {
    %c0_i32 = arith.constant 0 : i32
    %c0_i32_0 = arith.constant 0 : i32
    %c0_i32_1 = arith.constant 0 : i32
    return %arg0, %c0_i32, %c0_i32_0 : i32, i32, i32
  }
  func.func @transform_2(%arg0: i32, %arg1: i32) -> (i32, i32, i32) {
    %c0_i32 = arith.constant 0 : i32
    %c0_i32_0 = arith.constant 0 : i32
    %c0_i32_1 = arith.constant 0 : i32
    return %arg0, %c0_i32, %c0_i32_0 : i32, i32, i32
  }
  func.func @transform_3(%arg0: i32, %arg1: i32) -> (i32, i32, i32) {
    %c0_i32 = arith.constant 0 : i32
    %c0_i32_0 = arith.constant 0 : i32
    return %arg0, %arg1, %c0_i32 : i32, i32, i32
  }
  func.func @transform_4(%arg0: i32, %arg1: i32) -> (i32, i32, i32) {
    %c0_i32 = arith.constant 0 : i32
    %c0_i32_0 = arith.constant 0 : i32
    return %arg0, %arg1, %c0_i32 : i32, i32, i32
  }
}

module attributes {stable_mosaic.version = 11 : i64} {
  func.func @_linear_kernel(%arg0: i32, %arg1: i32, %arg2: i32, %arg3: memref<32x32xbf16, #tpu.memory_space<vmem>>, %arg4: memref<32x64xbf16, #tpu.memory_space<vmem>>, %arg5: memref<1x64xf32, #tpu.memory_space<vmem>>, %arg6: memref<32x64xbf16, #tpu.memory_space<vmem>>, %arg7: memref<32x64xf32, #tpu.memory_space<vmem>>) attributes {dimension_semantics = [#tpu.dimension_semantics<parallel>, #tpu.dimension_semantics<parallel>, #tpu.dimension_semantics<arbitrary>], iteration_bounds = array<i64: 1, 1, 1>, scalar_prefetch = 0 : i64, scratch_operands = 1 : i64, tpu.core_type = #tpu.core_type<tc>, window_params = [{transform_indices = @transform_0, window_bounds = array<i64: 32, 32>}, {transform_indices = @transform_1, window_bounds = array<i64: 32, 64>}, {transform_indices = @transform_2, window_bounds = array<i64: 1, 64>}, {transform_indices = @transform_3, window_bounds = array<i64: 32, 64>}]} {
    %c0_i32 = arith.constant 0 : i32
    %0 = arith.cmpi eq, %arg2, %c0_i32 : i32
    %1 = arith.extui %0 : i1 to i32
    %c0_i32_0 = arith.constant 0 : i32
    %2 = arith.cmpi ne, %1, %c0_i32_0 : i32
    scf.if %2 {
      %cst_10 = arith.constant 0.000000e+00 : f32
      %12 = vector.broadcast %cst_10 : f32 to vector<32x64xf32>
      %c0_11 = arith.constant 0 : index
      %c0_12 = arith.constant 0 : index
      %13 = vector.load %arg7[%c0_11, %c0_12] : memref<32x64xf32, #tpu.memory_space<vmem>>, vector<32x64xf32>
      tpu.vector_store %arg7[%c0_11, %c0_12], %12 {strides = array<i32>} : memref<32x64xf32, #tpu.memory_space<vmem>>, vector<32x64xf32>,
    } else {
    }
    %c0 = arith.constant 0 : index
    %c0_1 = arith.constant 0 : index
    %3 = vector.load %arg7[%c0, %c0_1] : memref<32x64xf32, #tpu.memory_space<vmem>>, vector<32x64xf32>
    %c0_2 = arith.constant 0 : index
    %c0_3 = arith.constant 0 : index
    %4 = vector.load %arg3[%c0_2, %c0_3] : memref<32x32xbf16, #tpu.memory_space<vmem>>, vector<32x32xbf16>
    %c0_4 = arith.constant 0 : index
    %c0_5 = arith.constant 0 : index
    %5 = vector.load %arg4[%c0_4, %c0_5] : memref<32x64xbf16, #tpu.memory_space<vmem>>, vector<32x64xbf16>
    %cst = arith.constant dense<0.000000e+00> : vector<32x64xf32>
    %6 = tpu.matmul %4, %5, %cst {dimension_numbers = #tpu.dot_dimension_numbers<[1], [0], [0], [1], [0, 0, 1, 1], [], []>} : vector<32x32xbf16>, vector<32x64xbf16>, vector<32x64xf32> -> vector<32x64xf32>
    %7 = arith.addf %3, %6 : vector<32x64xf32>
    %c0_6 = arith.constant 0 : index
    %c0_7 = arith.constant 0 : index
    %8 = vector.load %arg7[%c0_6, %c0_7] : memref<32x64xf32, #tpu.memory_space<vmem>>, vector<32x64xf32>
    tpu.vector_store %arg7[%c0_6, %c0_7], %7 {strides = array<i32>} : memref<32x64xf32, #tpu.memory_space<vmem>>, vector<32x64xf32>,
    %c0_i32_8 = arith.constant 0 : i32
    %9 = arith.cmpi eq, %arg2, %c0_i32_8 : i32
    %10 = arith.extui %9 : i1 to i32
    %c0_i32_9 = arith.constant 0 : i32
    %11 = arith.cmpi ne, %10, %c0_i32_9 : i32
    scf.if %11 {
      %c0_10 = arith.constant 0 : index
      %c0_11 = arith.constant 0 : index
      %12 = vector.load %arg7[%c0_10, %c0_11] : memref<32x64xf32, #tpu.memory_space<vmem>>, vector<32x64xf32>
      %c0_12 = arith.constant 0 : index
      %c0_13 = arith.constant 0 : index
      %13 = vector.load %arg5[%c0_12, %c0_13] : memref<1x64xf32, #tpu.memory_space<vmem>>, vector<1x64xf32>
      %14 = vector.broadcast %13 : vector<1x64xf32> to vector<32x64xf32>
      %15 = arith.addf %12, %14 : vector<32x64xf32>
      %16 = arith.truncf %15 : vector<32x64xf32> to vector<32x64xbf16>
      %c0_14 = arith.constant 0 : index
      %c0_15 = arith.constant 0 : index
      %17 = vector.load %arg6[%c0_14, %c0_15] : memref<32x64xbf16, #tpu.memory_space<vmem>>, vector<32x64xbf16>
      tpu.vector_store %arg6[%c0_14, %c0_15], %16 {strides = array<i32>} : memref<32x64xbf16, #tpu.memory_space<vmem>>, vector<32x64xbf16>,
    } else {
    }
    return
  }
  func.func @transform_0(%arg0: i32, %arg1: i32, %arg2: i32) -> (i32, i32) {
    %c0_i32 = arith.constant 0 : i32
    return %arg0, %arg2 : i32, i32
  }
  func.func @transform_1(%arg0: i32, %arg1: i32, %arg2: i32) -> (i32, i32) {
    %c0_i32 = arith.constant 0 : i32
    return %arg2, %arg1 : i32, i32
  }
  func.func @transform_2(%arg0: i32, %arg1: i32, %arg2: i32) -> (i32, i32) {
    %c0_i32 = arith.constant 0 : i32
    %c0_i32_0 = arith.constant 0 : i32
    return %c0_i32, %arg1 : i32, i32
  }
  func.func @transform_3(%arg0: i32, %arg1: i32, %arg2: i32) -> (i32, i32) {
    %c0_i32 = arith.constant 0 : i32
    return %arg0, %arg1 : i32, i32
  }
}

module attributes {stable_mosaic.version = 11 : i64} {
  func.func @_linear_kernel(%arg0: i32, %arg1: i32, %arg2: i32, %arg3: memref<16x32xbf16, #tpu.memory_space<vmem>>, %arg4: memref<32x64xbf16, #tpu.memory_space<vmem>>, %arg5: memref<1x64xf32, #tpu.memory_space<vmem>>, %arg6: memref<16x64xbf16, #tpu.memory_space<vmem>>, %arg7: memref<16x64xf32, #tpu.memory_space<vmem>>) attributes {dimension_semantics = [#tpu.dimension_semantics<parallel>, #tpu.dimension_semantics<parallel>, #tpu.dimension_semantics<arbitrary>], iteration_bounds = array<i64: 1, 1, 1>, scalar_prefetch = 0 : i64, scratch_operands = 1 : i64, tpu.core_type = #tpu.core_type<tc>, window_params = [{transform_indices = @transform_0, window_bounds = array<i64: 16, 32>}, {transform_indices = @transform_1, window_bounds = array<i64: 32, 64>}, {transform_indices = @transform_2, window_bounds = array<i64: 1, 64>}, {transform_indices = @transform_3, window_bounds = array<i64: 16, 64>}]} {
    %c0_i32 = arith.constant 0 : i32
    %0 = arith.cmpi eq, %arg2, %c0_i32 : i32
    %1 = arith.extui %0 : i1 to i32
    %c0_i32_0 = arith.constant 0 : i32
    %2 = arith.cmpi ne, %1, %c0_i32_0 : i32
    scf.if %2 {
      %cst_10 = arith.constant 0.000000e+00 : f32
      %12 = vector.broadcast %cst_10 : f32 to vector<16x64xf32>
      %c0_11 = arith.constant 0 : index
      %c0_12 = arith.constant 0 : index
      %13 = vector.load %arg7[%c0_11, %c0_12] : memref<16x64xf32, #tpu.memory_space<vmem>>, vector<16x64xf32>
      tpu.vector_store %arg7[%c0_11, %c0_12], %12 {strides = array<i32>} : memref<16x64xf32, #tpu.memory_space<vmem>>, vector<16x64xf32>,
    } else {
    }
    %c0 = arith.constant 0 : index
    %c0_1 = arith.constant 0 : index
    %3 = vector.load %arg7[%c0, %c0_1] : memref<16x64xf32, #tpu.memory_space<vmem>>, vector<16x64xf32>
    %c0_2 = arith.constant 0 : index
    %c0_3 = arith.constant 0 : index
    %4 = vector.load %arg3[%c0_2, %c0_3] : memref<16x32xbf16, #tpu.memory_space<vmem>>, vector<16x32xbf16>
    %c0_4 = arith.constant 0 : index
    %c0_5 = arith.constant 0 : index
    %5 = vector.load %arg4[%c0_4, %c0_5] : memref<32x64xbf16, #tpu.memory_space<vmem>>, vector<32x64xbf16>
    %cst = arith.constant dense<0.000000e+00> : vector<16x64xf32>
    %6 = tpu.matmul %4, %5, %cst {dimension_numbers = #tpu.dot_dimension_numbers<[1], [0], [0], [1], [0, 0, 1, 1], [], []>} : vector<16x32xbf16>, vector<32x64xbf16>, vector<16x64xf32> -> vector<16x64xf32>
    %7 = arith.addf %3, %6 : vector<16x64xf32>
    %c0_6 = arith.constant 0 : index
    %c0_7 = arith.constant 0 : index
    %8 = vector.load %arg7[%c0_6, %c0_7] : memref<16x64xf32, #tpu.memory_space<vmem>>, vector<16x64xf32>
    tpu.vector_store %arg7[%c0_6, %c0_7], %7 {strides = array<i32>} : memref<16x64xf32, #tpu.memory_space<vmem>>, vector<16x64xf32>,
    %c0_i32_8 = arith.constant 0 : i32
    %9 = arith.cmpi eq, %arg2, %c0_i32_8 : i32
    %10 = arith.extui %9 : i1 to i32
    %c0_i32_9 = arith.constant 0 : i32
    %11 = arith.cmpi ne, %10, %c0_i32_9 : i32
    scf.if %11 {
      %c0_10 = arith.constant 0 : index
      %c0_11 = arith.constant 0 : index
      %12 = vector.load %arg7[%c0_10, %c0_11] : memref<16x64xf32, #tpu.memory_space<vmem>>, vector<16x64xf32>
      %c0_12 = arith.constant 0 : index
      %c0_13 = arith.constant 0 : index
      %13 = vector.load %arg5[%c0_12, %c0_13] : memref<1x64xf32, #tpu.memory_space<vmem>>, vector<1x64xf32>
      %14 = vector.broadcast %13 : vector<1x64xf32> to vector<16x64xf32>
      %15 = arith.addf %12, %14 : vector<16x64xf32>
      %cst_14 = arith.constant 0.000000e+00 : f32
      %16 = vector.broadcast %cst_14 : f32 to vector<16x64xf32>
      %17 = arith.maximumf %15, %16 : vector<16x64xf32>
      %18 = arith.truncf %17 : vector<16x64xf32> to vector<16x64xbf16>
      %c0_15 = arith.constant 0 : index
      %c0_16 = arith.constant 0 : index
      %19 = vector.load %arg6[%c0_15, %c0_16] : memref<16x64xbf16, #tpu.memory_space<vmem>>, vector<16x64xbf16>
      tpu.vector_store %arg6[%c0_15, %c0_16], %18 {strides = array<i32>} : memref<16x64xbf16, #tpu.memory_space<vmem>>, vector<16x64xbf16>,
    } else {
    }
    return
  }
  func.func @transform_0(%arg0: i32, %arg1: i32, %arg2: i32) -> (i32, i32) {
    %c0_i32 = arith.constant 0 : i32
    return %arg0, %arg2 : i32, i32
  }
  func.func @transform_1(%arg0: i32, %arg1: i32, %arg2: i32) -> (i32, i32) {
    %c0_i32 = arith.constant 0 : i32
    return %arg2, %arg1 : i32, i32
  }
  func.func @transform_2(%arg0: i32, %arg1: i32, %arg2: i32) -> (i32, i32) {
    %c0_i32 = arith.constant 0 : i32
    %c0_i32_0 = arith.constant 0 : i32
    return %c0_i32, %arg1 : i32, i32
  }
  func.func @transform_3(%arg0: i32, %arg1: i32, %arg2: i32) -> (i32, i32) {
    %c0_i32 = arith.constant 0 : i32
    return %arg0, %arg1 : i32, i32
  }
}

module attributes {stable_mosaic.version = 11 : i64} {
  func.func @_sdpa_kernel(%arg0: i32, %arg1: i32, %arg2: memref<1x8x32xbf16, #tpu.memory_space<vmem>>, %arg3: memref<1x16x32xbf16, #tpu.memory_space<vmem>>, %arg4: memref<1x16x32xbf16, #tpu.memory_space<vmem>>, %arg5: memref<1x8x16xf32, #tpu.memory_space<vmem>>, %arg6: memref<1x8x32xbf16, #tpu.memory_space<vmem>>) attributes {dimension_semantics = [#tpu.dimension_semantics<parallel>, #tpu.dimension_semantics<parallel>], iteration_bounds = array<i64: 2, 1>, scalar_prefetch = 0 : i64, scratch_operands = 0 : i64, tpu.core_type = #tpu.core_type<tc>, window_params = [{transform_indices = @transform_0, window_bounds = array<i64: 1, 8, 32>}, {transform_indices = @transform_1, window_bounds = array<i64: 1, 16, 32>}, {transform_indices = @transform_2, window_bounds = array<i64: 1, 16, 32>}, {transform_indices = @transform_3, window_bounds = array<i64: 1, 8, 16>}, {transform_indices = @transform_4, window_bounds = array<i64: 1, 8, 32>}]} {
    %c0 = arith.constant 0 : index
    %c0_0 = arith.constant 0 : index
    %c0_1 = arith.constant 0 : index
    %0 = vector.load %arg2[%c0, %c0_0, %c0_1] : memref<1x8x32xbf16, #tpu.memory_space<vmem>>, vector<1x8x32xbf16>
    %1 = vector.shape_cast %0 : vector<1x8x32xbf16> to vector<8x32xbf16>
    %c0_2 = arith.constant 0 : index
    %c0_3 = arith.constant 0 : index
    %c0_4 = arith.constant 0 : index
    %2 = vector.load %arg3[%c0_2, %c0_3, %c0_4] : memref<1x16x32xbf16, #tpu.memory_space<vmem>>, vector<1x16x32xbf16>
    %3 = vector.shape_cast %2 : vector<1x16x32xbf16> to vector<16x32xbf16>
    %c0_5 = arith.constant 0 : index
    %c0_6 = arith.constant 0 : index
    %c0_7 = arith.constant 0 : index
    %4 = vector.load %arg4[%c0_5, %c0_6, %c0_7] : memref<1x16x32xbf16, #tpu.memory_space<vmem>>, vector<1x16x32xbf16>
    %5 = vector.shape_cast %4 : vector<1x16x32xbf16> to vector<16x32xbf16>
    %c0_8 = arith.constant 0 : index
    %c0_9 = arith.constant 0 : index
    %c0_10 = arith.constant 0 : index
    %6 = vector.load %arg5[%c0_8, %c0_9, %c0_10] : memref<1x8x16xf32, #tpu.memory_space<vmem>>, vector<1x8x16xf32>
    %7 = vector.shape_cast %6 : vector<1x8x16xf32> to vector<8x16xf32>
    %8 = vector.extract_strided_slice %1 {offsets = [0, 0], sizes = [8, 8], strides = [1, 1]} : vector<8x32xbf16> to vector<8x8xbf16>
    %9 = vector.extract_strided_slice %3 {offsets = [0, 0], sizes = [16, 8], strides = [1, 1]} : vector<16x32xbf16> to vector<16x8xbf16>
    %10 = vector.extract_strided_slice %5 {offsets = [0, 0], sizes = [16, 8], strides = [1, 1]} : vector<16x32xbf16> to vector<16x8xbf16>
    %cst = arith.constant dense<0.000000e+00> : vector<8x16xf32>
    %11 = tpu.matmul %8, %9, %cst {dimension_numbers = #tpu.dot_dimension_numbers<[1], [1], [0], [0], [0, 0, 1, 0], [], []>} : vector<8x8xbf16>, vector<16x8xbf16>, vector<8x16xf32> -> vector<8x16xf32>
    %12 = arith.addf %11, %7 : vector<8x16xf32>
    %cst_11 = arith.constant dense<0xFF800000> : vector<8xf32>
    %13 = vector.multi_reduction <maximumf>, %12, %cst_11 [1] : vector<8x16xf32> to vector<8xf32>
    %14 = vector.shape_cast %13 : vector<8xf32> to vector<8x1xf32>
    %15 = vector.broadcast %14 : vector<8x1xf32> to vector<8x16xf32>
    %16 = arith.subf %12, %15 : vector<8x16xf32>
    %17 = math.exp %16 : vector<8x16xf32>
    %cst_12 = arith.constant dense<0.000000e+00> : vector<8xf32>
    %18 = vector.multi_reduction <add>, %17, %cst_12 [1] : vector<8x16xf32> to vector<8xf32>
    %19 = vector.shape_cast %18 : vector<8xf32> to vector<8x1xf32>
    %20 = tpu.reciprocal %19 {approx = true} : vector<8x1xf32> -> vector<8x1xf32>
    %21 = vector.broadcast %20 : vector<8x1xf32> to vector<8x16xf32>
    %22 = arith.mulf %17, %21 : vector<8x16xf32>
    %23 = arith.truncf %22 : vector<8x16xf32> to vector<8x16xbf16>
    %cst_13 = arith.constant dense<0.000000e+00> : vector<8x8xf32>
    %24 = tpu.matmul %23, %10, %cst_13 {dimension_numbers = #tpu.dot_dimension_numbers<[1], [0], [0], [1], [0, 0, 1, 1], [], []>} : vector<8x16xbf16>, vector<16x8xbf16>, vector<8x8xf32> -> vector<8x8xf32>
    %25 = vector.extract_strided_slice %1 {offsets = [0, 8], sizes = [8, 8], strides = [1, 1]} : vector<8x32xbf16> to vector<8x8xbf16>
    %26 = vector.extract_strided_slice %3 {offsets = [0, 8], sizes = [16, 8], strides = [1, 1]} : vector<16x32xbf16> to vector<16x8xbf16>
    %27 = vector.extract_strided_slice %5 {offsets = [0, 8], sizes = [16, 8], strides = [1, 1]} : vector<16x32xbf16> to vector<16x8xbf16>
    %cst_14 = arith.constant dense<0.000000e+00> : vector<8x16xf32>
    %28 = tpu.matmul %25, %26, %cst_14 {dimension_numbers = #tpu.dot_dimension_numbers<[1], [1], [0], [0], [0, 0, 1, 0], [], []>} : vector<8x8xbf16>, vector<16x8xbf16>, vector<8x16xf32> -> vector<8x16xf32>
    %29 = arith.addf %28, %7 : vector<8x16xf32>
    %cst_15 = arith.constant dense<0xFF800000> : vector<8xf32>
    %30 = vector.multi_reduction <maximumf>, %29, %cst_15 [1] : vector<8x16xf32> to vector<8xf32>
    %31 = vector.shape_cast %30 : vector<8xf32> to vector<8x1xf32>
    %32 = vector.broadcast %31 : vector<8x1xf32> to vector<8x16xf32>
    %33 = arith.subf %29, %32 : vector<8x16xf32>
    %34 = math.exp %33 : vector<8x16xf32>
    %cst_16 = arith.constant dense<0.000000e+00> : vector<8xf32>
    %35 = vector.multi_reduction <add>, %34, %cst_16 [1] : vector<8x16xf32> to vector<8xf32>
    %36 = vector.shape_cast %35 : vector<8xf32> to vector<8x1xf32>
    %37 = tpu.reciprocal %36 {approx = true} : vector<8x1xf32> -> vector<8x1xf32>
    %38 = vector.broadcast %37 : vector<8x1xf32> to vector<8x16xf32>
    %39 = arith.mulf %34, %38 : vector<8x16xf32>
    %40 = arith.truncf %39 : vector<8x16xf32> to vector<8x16xbf16>
    %cst_17 = arith.constant dense<0.000000e+00> : vector<8x8xf32>
    %41 = tpu.matmul %40, %27, %cst_17 {dimension_numbers = #tpu.dot_dimension_numbers<[1], [0], [0], [1], [0, 0, 1, 1], [], []>} : vector<8x16xbf16>, vector<16x8xbf16>, vector<8x8xf32> -> vector<8x8xf32>
    %42 = vector.extract_strided_slice %1 {offsets = [0, 16], sizes = [8, 8], strides = [1, 1]} : vector<8x32xbf16> to vector<8x8xbf16>
    %43 = vector.extract_strided_slice %3 {offsets = [0, 16], sizes = [16, 8], strides = [1, 1]} : vector<16x32xbf16> to vector<16x8xbf16>
    %44 = vector.extract_strided_slice %5 {offsets = [0, 16], sizes = [16, 8], strides = [1, 1]} : vector<16x32xbf16> to vector<16x8xbf16>
    %cst_18 = arith.constant dense<0.000000e+00> : vector<8x16xf32>
    %45 = tpu.matmul %42, %43, %cst_18 {dimension_numbers = #tpu.dot_dimension_numbers<[1], [1], [0], [0], [0, 0, 1, 0], [], []>} : vector<8x8xbf16>, vector<16x8xbf16>, vector<8x16xf32> -> vector<8x16xf32>
    %46 = arith.addf %45, %7 : vector<8x16xf32>
    %cst_19 = arith.constant dense<0xFF800000> : vector<8xf32>
    %47 = vector.multi_reduction <maximumf>, %46, %cst_19 [1] : vector<8x16xf32> to vector<8xf32>
    %48 = vector.shape_cast %47 : vector<8xf32> to vector<8x1xf32>
    %49 = vector.broadcast %48 : vector<8x1xf32> to vector<8x16xf32>
    %50 = arith.subf %46, %49 : vector<8x16xf32>
    %51 = math.exp %50 : vector<8x16xf32>
    %cst_20 = arith.constant dense<0.000000e+00> : vector<8xf32>
    %52 = vector.multi_reduction <add>, %51, %cst_20 [1] : vector<8x16xf32> to vector<8xf32>
    %53 = vector.shape_cast %52 : vector<8xf32> to vector<8x1xf32>
    %54 = tpu.reciprocal %53 {approx = true} : vector<8x1xf32> -> vector<8x1xf32>
    %55 = vector.broadcast %54 : vector<8x1xf32> to vector<8x16xf32>
    %56 = arith.mulf %51, %55 : vector<8x16xf32>
    %57 = arith.truncf %56 : vector<8x16xf32> to vector<8x16xbf16>
    %cst_21 = arith.constant dense<0.000000e+00> : vector<8x8xf32>
    %58 = tpu.matmul %57, %44, %cst_21 {dimension_numbers = #tpu.dot_dimension_numbers<[1], [0], [0], [1], [0, 0, 1, 1], [], []>} : vector<8x16xbf16>, vector<16x8xbf16>, vector<8x8xf32> -> vector<8x8xf32>
    %59 = vector.extract_strided_slice %1 {offsets = [0, 24], sizes = [8, 8], strides = [1, 1]} : vector<8x32xbf16> to vector<8x8xbf16>
    %60 = vector.extract_strided_slice %3 {offsets = [0, 24], sizes = [16, 8], strides = [1, 1]} : vector<16x32xbf16> to vector<16x8xbf16>
    %61 = vector.extract_strided_slice %5 {offsets = [0, 24], sizes = [16, 8], strides = [1, 1]} : vector<16x32xbf16> to vector<16x8xbf16>
    %cst_22 = arith.constant dense<0.000000e+00> : vector<8x16xf32>
    %62 = tpu.matmul %59, %60, %cst_22 {dimension_numbers = #tpu.dot_dimension_numbers<[1], [1], [0], [0], [0, 0, 1, 0], [], []>} : vector<8x8xbf16>, vector<16x8xbf16>, vector<8x16xf32> -> vector<8x16xf32>
    %63 = arith.addf %62, %7 : vector<8x16xf32>
    %cst_23 = arith.constant dense<0xFF800000> : vector<8xf32>
    %64 = vector.multi_reduction <maximumf>, %63, %cst_23 [1] : vector<8x16xf32> to vector<8xf32>
    %65 = vector.shape_cast %64 : vector<8xf32> to vector<8x1xf32>
    %66 = vector.broadcast %65 : vector<8x1xf32> to vector<8x16xf32>
    %67 = arith.subf %63, %66 : vector<8x16xf32>
    %68 = math.exp %67 : vector<8x16xf32>
    %cst_24 = arith.constant dense<0.000000e+00> : vector<8xf32>
    %69 = vector.multi_reduction <add>, %68, %cst_24 [1] : vector<8x16xf32> to vector<8xf32>
    %70 = vector.shape_cast %69 : vector<8xf32> to vector<8x1xf32>
    %71 = tpu.reciprocal %70 {approx = true} : vector<8x1xf32> -> vector<8x1xf32>
    %72 = vector.broadcast %71 : vector<8x1xf32> to vector<8x16xf32>
    %73 = arith.mulf %68, %72 : vector<8x16xf32>
    %74 = arith.truncf %73 : vector<8x16xf32> to vector<8x16xbf16>
    %cst_25 = arith.constant dense<0.000000e+00> : vector<8x8xf32>
    %75 = tpu.matmul %74, %61, %cst_25 {dimension_numbers = #tpu.dot_dimension_numbers<[1], [0], [0], [1], [0, 0, 1, 1], [], []>} : vector<8x16xbf16>, vector<16x8xbf16>, vector<8x8xf32> -> vector<8x8xf32>
    %76 = tpu.concatenate %24, %41, %58, %75 in 1 : vector<8x8xf32>, vector<8x8xf32>, vector<8x8xf32>, vector<8x8xf32> -> vector<8x32xf32>
    %77 = arith.truncf %76 : vector<8x32xf32> to vector<8x32xbf16>
    %c0_26 = arith.constant 0 : index
    %c0_27 = arith.constant 0 : index
    %c0_28 = arith.constant 0 : index
    %78 = vector.load %arg6[%c0_26, %c0_27, %c0_28] : memref<1x8x32xbf16, #tpu.memory_space<vmem>>, vector<1x8x32xbf16>
    %79 = vector.shape_cast %78 : vector<1x8x32xbf16> to vector<8x32xbf16>
    %80 = vector.shape_cast %77 : vector<8x32xbf16> to vector<1x8x32xbf16>
    tpu.vector_store %arg6[%c0_26, %c0_27, %c0_28], %80 {strides = array<i32>} : memref<1x8x32xbf16, #tpu.memory_space<vmem>>, vector<1x8x32xbf16>,
    return
  }
  func.func @transform_0(%arg0: i32, %arg1: i32) -> (i32, i32, i32) {
    %c0_i32 = arith.constant 0 : i32
    %c0_i32_0 = arith.constant 0 : i32
    return %arg0, %arg1, %c0_i32 : i32, i32, i32
  }
  func.func @transform_1(%arg0: i32, %arg1: i32) -> (i32, i32, i32) {
    %c0_i32 = arith.constant 0 : i32
    %c0_i32_0 = arith.constant 0 : i32
    %c0_i32_1 = arith.constant 0 : i32
    return %arg0, %c0_i32, %c0_i32_0 : i32, i32, i32
  }
  func.func @transform_2(%arg0: i32, %arg1: i32) -> (i32, i32, i32) {
    %c0_i32 = arith.constant 0 : i32
    %c0_i32_0 = arith.constant 0 : i32
    %c0_i32_1 = arith.constant 0 : i32
    return %arg0, %c0_i32, %c0_i32_0 : i32, i32, i32
  }
  func.func @transform_3(%arg0: i32, %arg1: i32) -> (i32, i32, i32) {
    %c0_i32 = arith.constant 0 : i32
    %c0_i32_0 = arith.constant 0 : i32
    return %arg0, %arg1, %c0_i32 : i32, i32, i32
  }
  func.func @transform_4(%arg0: i32, %arg1: i32) -> (i32, i32, i32) {
    %c0_i32 = arith.constant 0 : i32
    %c0_i32_0 = arith.constant 0 : i32
    return %arg0, %arg1, %c0_i32 : i32, i32, i32
  }
}

module attributes {stable_mosaic.version = 11 : i64} {
  func.func @_linear_add_ln_kernel(%arg0: i32, %arg1: i32, %arg2: memref<16x64xbf16, #tpu.memory_space<vmem>>, %arg3: memref<64x32xbf16, #tpu.memory_space<vmem>>, %arg4: memref<1x32xf32, #tpu.memory_space<vmem>>, %arg5: memref<16x32xbf16, #tpu.memory_space<vmem>>, %arg6: memref<1x32xf32, #tpu.memory_space<vmem>>, %arg7: memref<1x32xf32, #tpu.memory_space<vmem>>, %arg8: memref<16x1xf32, #tpu.memory_space<vmem>>, %arg9: memref<16x32xbf16, #tpu.memory_space<vmem>>, %arg10: memref<16x32xf32, #tpu.memory_space<vmem>>) attributes {dimension_semantics = [#tpu.dimension_semantics<parallel>, #tpu.dimension_semantics<arbitrary>], iteration_bounds = array<i64: 1, 1>, scalar_prefetch = 0 : i64, scratch_operands = 1 : i64, tpu.core_type = #tpu.core_type<tc>, window_params = [{transform_indices = @transform_0, window_bounds = array<i64: 16, 64>}, {transform_indices = @transform_1, window_bounds = array<i64: 64, 32>}, {pipeline_mode = #tpu.pipeline_mode<synchronous>, transform_indices = @transform_2, window_bounds = array<i64: 1, 32>}, {transform_indices = @transform_3, window_bounds = array<i64: 16, 32>}, {pipeline_mode = #tpu.pipeline_mode<synchronous>, transform_indices = @transform_4, window_bounds = array<i64: 1, 32>}, {pipeline_mode = #tpu.pipeline_mode<synchronous>, transform_indices = @transform_5, window_bounds = array<i64: 1, 32>}, {transform_indices = @transform_6, window_bounds = array<i64: 16, 1>}, {transform_indices = @transform_7, window_bounds = array<i64: 16, 32>}]} {
    %c0_i32 = arith.constant 0 : i32
    %0 = arith.cmpi eq, %arg1, %c0_i32 : i32
    %1 = arith.extui %0 : i1 to i32
    %c0_i32_0 = arith.constant 0 : i32
    %2 = arith.cmpi ne, %1, %c0_i32_0 : i32
    scf.if %2 {
      %cst_10 = arith.constant 0.000000e+00 : f32
      %12 = vector.broadcast %cst_10 : f32 to vector<16x32xf32>
      %c0_11 = arith.constant 0 : index
      %c0_12 = arith.constant 0 : index
      %13 = vector.load %arg10[%c0_11, %c0_12] : memref<16x32xf32, #tpu.memory_space<vmem>>, vector<16x32xf32>
      tpu.vector_store %arg10[%c0_11, %c0_12], %12 {strides = array<i32>} : memref<16x32xf32, #tpu.memory_space<vmem>>, vector<16x32xf32>,
    } else {
    }
    %c0 = arith.constant 0 : index
    %c0_1 = arith.constant 0 : index
    %3 = vector.load %arg10[%c0, %c0_1] : memref<16x32xf32, #tpu.memory_space<vmem>>, vector<16x32xf32>
    %c0_2 = arith.constant 0 : index
    %c0_3 = arith.constant 0 : index
    %4 = vector.load %arg2[%c0_2, %c0_3] : memref<16x64xbf16, #tpu.memory_space<vmem>>, vector<16x64xbf16>
    %c0_4 = arith.constant 0 : index
    %c0_5 = arith.constant 0 : index
    %5 = vector.load %arg3[%c0_4, %c0_5] : memref<64x32xbf16, #tpu.memory_space<vmem>>, vector<64x32xbf16>
    %cst = arith.constant dense<0.000000e+00> : vector<16x32xf32>
    %6 = tpu.matmul %4, %5, %cst {dimension_numbers = #tpu.dot_dimension_numbers<[1], [0], [0], [1], [0, 0, 1, 1], [], []>} : vector<16x64xbf16>, vector<64x32xbf16>, vector<16x32xf32> -> vector<16x32xf32>
    %7 = arith.addf %3, %6 : vector<16x32xf32>
    %c0_6 = arith.constant 0 : index
    %c0_7 = arith.constant 0 : index
    %8 = vector.load %arg10[%c0_6, %c0_7] : memref<16x32xf32, #tpu.memory_space<vmem>>, vector<16x32xf32>
    tpu.vector_store %arg10[%c0_6, %c0_7], %7 {strides = array<i32>} : memref<16x32xf32, #tpu.memory_space<vmem>>, vector<16x32xf32>,
    %c0_i32_8 = arith.constant 0 : i32
    %9 = arith.cmpi eq, %arg1, %c0_i32_8 : i32
    %10 = arith.extui %9 : i1 to i32
    %c0_i32_9 = arith.constant 0 : i32
    %11 = arith.cmpi ne, %10, %c0_i32_9 : i32
    scf.if %11 {
      %c0_10 = arith.constant 0 : index
      %c0_11 = arith.constant 0 : index
      %12 = vector.load %arg10[%c0_10, %c0_11] : memref<16x32xf32, #tpu.memory_space<vmem>>, vector<16x32xf32>
      %c0_12 = arith.constant 0 : index
      %c0_13 = arith.constant 0 : index
      %13 = vector.load %arg4[%c0_12, %c0_13] : memref<1x32xf32, #tpu.memory_space<vmem>>, vector<1x32xf32>
      %14 = vector.broadcast %13 : vector<1x32xf32> to vector<16x32xf32>
      %15 = arith.addf %12, %14 : vector<16x32xf32>
      %c0_14 = arith.constant 0 : index
      %c0_15 = arith.constant 0 : index
      %16 = vector.load %arg5[%c0_14, %c0_15] : memref<16x32xbf16, #tpu.memory_space<vmem>>, vector<16x32xbf16>
      %17 = arith.extf %16 : vector<16x32xbf16> to vector<16x32xf32>
      %18 = arith.addf %15, %17 : vector<16x32xf32>
      %cst_16 = arith.constant dense<0.000000e+00> : vector<16xf32>
      %19 = vector.multi_reduction <add>, %18, %cst_16 [1] : vector<16x32xf32> to vector<16xf32>
      %20 = vector.shape_cast %19 : vector<16xf32> to vector<16x1xf32>
      %cst_17 = arith.constant 3.200000e+01 : f32
      %21 = vector.broadcast %cst_17 : f32 to vector<16x1xf32>
      %22 = arith.divf %20, %21 : vector<16x1xf32>
      %23 = vector.broadcast %22 : vector<16x1xf32> to vector<16x32xf32>
      %24 = arith.subf %18, %23 : vector<16x32xf32>
      %25 = arith.mulf %24, %24 : vector<16x32xf32>
      %cst_18 = arith.constant dense<0.000000e+00> : vector<16xf32>
      %26 = vector.multi_reduction <add>, %25, %cst_18 [1] : vector<16x32xf32> to vector<16xf32>
      %27 = vector.shape_cast %26 : vector<16xf32> to vector<16x1xf32>
      %cst_19 = arith.constant 3.200000e+01 : f32
      %28 = vector.broadcast %cst_19 : f32 to vector<16x1xf32>
      %29 = arith.divf %27, %28 : vector<16x1xf32>
      %30 = vector.broadcast %22 : vector<16x1xf32> to vector<16x32xf32>
      %31 = arith.subf %18, %30 : vector<16x32xf32>
      %cst_20 = arith.constant 9.99999974E-6 : f32
      %32 = vector.broadcast %cst_20 : f32 to vector<16x1xf32>
      %33 = arith.addf %29, %32 : vector<16x1xf32>
      %34 = math.rsqrt %33 : vector<16x1xf32>
      %35 = vector.broadcast %34 : vector<16x1xf32> to vector<16x32xf32>
      %36 = arith.mulf %31, %35 : vector<16x32xf32>
      %c0_21 = arith.constant 0 : index
      %c0_22 = arith.constant 0 : index
      %37 = vector.load %arg6[%c0_21, %c0_22] : memref<1x32xf32, #tpu.memory_space<vmem>>, vector<1x32xf32>
      %38 = vector.broadcast %37 : vector<1x32xf32> to vector<16x32xf32>
      %39 = arith.mulf %36, %38 : vector<16x32xf32>
      %c0_23 = arith.constant 0 : index
      %c0_24 = arith.constant 0 : index
      %40 = vector.load %arg7[%c0_23, %c0_24] : memref<1x32xf32, #tpu.memory_space<vmem>>, vector<1x32xf32>
      %41 = vector.broadcast %40 : vector<1x32xf32> to vector<16x32xf32>
      %42 = arith.addf %39, %41 : vector<16x32xf32>
      %c0_25 = arith.constant 0 : index
      %c0_26 = arith.constant 0 : index
      %43 = vector.load %arg8[%c0_25, %c0_26] : memref<16x1xf32, #tpu.memory_space<vmem>>, vector<16x1xf32>
      %44 = vector.broadcast %43 : vector<16x1xf32> to vector<16x32xf32>
      %45 = arith.mulf %42, %44 : vector<16x32xf32>
      %46 = arith.truncf %45 : vector<16x32xf32> to vector<16x32xbf16>
      %c0_27 = arith.constant 0 : index
      %c0_28 = arith.constant 0 : index
      %47 = vector.load %arg9[%c0_27, %c0_28] : memref<16x32xbf16, #tpu.memory_space<vmem>>, vector<16x32xbf16>
      tpu.vector_store %arg9[%c0_27, %c0_28], %46 {strides = array<i32>} : memref<16x32xbf16, #tpu.memory_space<vmem>>, vector<16x32xbf16>,
    } else {
    }
    return
  }
  func.func @transform_0(%arg0: i32, %arg1: i32) -> (i32, i32) {
    %c0_i32 = arith.constant 0 : i32
    return %arg0, %arg1 : i32, i32
  }
  func.func @transform_1(%arg0: i32, %arg1: i32) -> (i32, i32) {
    %c0_i32 = arith.constant 0 : i32
    %c0_i32_0 = arith.constant 0 : i32
    return %arg1, %c0_i32 : i32, i32
  }
  func.func @transform_2(%arg0: i32, %arg1: i32) -> (i32, i32) {
    %c0_i32 = arith.constant 0 : i32
    %c0_i32_0 = arith.constant 0 : i32
    %c0_i32_1 = arith.constant 0 : i32
    return %c0_i32, %c0_i32_0 : i32, i32
  }
  func.func @transform_3(%arg0: i32, %arg1: i32) -> (i32, i32) {
    %c0_i32 = arith.constant 0 : i32
    %c0_i32_0 = arith.constant 0 : i32
    return %arg0, %c0_i32 : i32, i32
  }
  func.func @transform_4(%arg0: i32, %arg1: i32) -> (i32, i32) {
    %c0_i32 = arith.constant 0 : i32
    %c0_i32_0 = arith.constant 0 : i32
    %c0_i32_1 = arith.constant 0 : i32
    return %c0_i32, %c0_i32_0 : i32, i32
  }
  func.func @transform_5(%arg0: i32, %arg1: i32) -> (i32, i32) {
    %c0_i32 = arith.constant 0 : i32
    %c0_i32_0 = arith.constant 0 : i32
    %c0_i32_1 = arith.constant 0 : i32
    return %c0_i32, %c0_i32_0 : i32, i32
  }
  func.func @transform_6(%arg0: i32, %arg1: i32) -> (i32, i32) {
    %c0_i32 = arith.constant 0 : i32
    %c0_i32_0 = arith.constant 0 : i32
    return %arg0, %c0_i32 : i32, i32
  }
  func.func @transform_7(%arg0: i32, %arg1: i32) -> (i32, i32) {
    %c0_i32 = arith.constant 0 : i32
    %c0_i32_0 = arith.constant 0 : i32
    return %arg0, %c0_i32 : i32, i32
  }
}

module attributes {stable_mosaic.version = 11 : i64} {
  func.func @_linear_kernel(%arg0: i32, %arg1: i32, %arg2: i32, %arg3: memref<16x32xbf16, #tpu.memory_space<vmem>>, %arg4: memref<32x40xbf16, #tpu.memory_space<vmem>>, %arg5: memref<1x40xf32, #tpu.memory_space<vmem>>, %arg6: memref<16x40xf32, #tpu.memory_space<vmem>>, %arg7: memref<16x40xf32, #tpu.memory_space<vmem>>) attributes {dimension_semantics = [#tpu.dimension_semantics<parallel>, #tpu.dimension_semantics<parallel>, #tpu.dimension_semantics<arbitrary>], iteration_bounds = array<i64: 1, 1, 1>, scalar_prefetch = 0 : i64, scratch_operands = 1 : i64, tpu.core_type = #tpu.core_type<tc>, window_params = [{transform_indices = @transform_0, window_bounds = array<i64: 16, 32>}, {transform_indices = @transform_1, window_bounds = array<i64: 32, 40>}, {transform_indices = @transform_2, window_bounds = array<i64: 1, 40>}, {transform_indices = @transform_3, window_bounds = array<i64: 16, 40>}]} {
    %c0_i32 = arith.constant 0 : i32
    %0 = arith.cmpi eq, %arg2, %c0_i32 : i32
    %1 = arith.extui %0 : i1 to i32
    %c0_i32_0 = arith.constant 0 : i32
    %2 = arith.cmpi ne, %1, %c0_i32_0 : i32
    scf.if %2 {
      %cst_10 = arith.constant 0.000000e+00 : f32
      %12 = vector.broadcast %cst_10 : f32 to vector<16x40xf32>
      %c0_11 = arith.constant 0 : index
      %c0_12 = arith.constant 0 : index
      %13 = vector.load %arg7[%c0_11, %c0_12] : memref<16x40xf32, #tpu.memory_space<vmem>>, vector<16x40xf32>
      tpu.vector_store %arg7[%c0_11, %c0_12], %12 {strides = array<i32>} : memref<16x40xf32, #tpu.memory_space<vmem>>, vector<16x40xf32>,
    } else {
    }
    %c0 = arith.constant 0 : index
    %c0_1 = arith.constant 0 : index
    %3 = vector.load %arg7[%c0, %c0_1] : memref<16x40xf32, #tpu.memory_space<vmem>>, vector<16x40xf32>
    %c0_2 = arith.constant 0 : index
    %c0_3 = arith.constant 0 : index
    %4 = vector.load %arg3[%c0_2, %c0_3] : memref<16x32xbf16, #tpu.memory_space<vmem>>, vector<16x32xbf16>
    %c0_4 = arith.constant 0 : index
    %c0_5 = arith.constant 0 : index
    %5 = vector.load %arg4[%c0_4, %c0_5] : memref<32x40xbf16, #tpu.memory_space<vmem>>, vector<32x40xbf16>
    %cst = arith.constant dense<0.000000e+00> : vector<16x40xf32>
    %6 = tpu.matmul %4, %5, %cst {dimension_numbers = #tpu.dot_dimension_numbers<[1], [0], [0], [1], [0, 0, 1, 1], [], []>} : vector<16x32xbf16>, vector<32x40xbf16>, vector<16x40xf32> -> vector<16x40xf32>
    %7 = arith.addf %3, %6 : vector<16x40xf32>
    %c0_6 = arith.constant 0 : index
    %c0_7 = arith.constant 0 : index
    %8 = vector.load %arg7[%c0_6, %c0_7] : memref<16x40xf32, #tpu.memory_space<vmem>>, vector<16x40xf32>
    tpu.vector_store %arg7[%c0_6, %c0_7], %7 {strides = array<i32>} : memref<16x40xf32, #tpu.memory_space<vmem>>, vector<16x40xf32>,
    %c0_i32_8 = arith.constant 0 : i32
    %9 = arith.cmpi eq, %arg2, %c0_i32_8 : i32
    %10 = arith.extui %9 : i1 to i32
    %c0_i32_9 = arith.constant 0 : i32
    %11 = arith.cmpi ne, %10, %c0_i32_9 : i32
    scf.if %11 {
      %c0_10 = arith.constant 0 : index
      %c0_11 = arith.constant 0 : index
      %12 = vector.load %arg7[%c0_10, %c0_11] : memref<16x40xf32, #tpu.memory_space<vmem>>, vector<16x40xf32>
      %c0_12 = arith.constant 0 : index
      %c0_13 = arith.constant 0 : index
      %13 = vector.load %arg5[%c0_12, %c0_13] : memref<1x40xf32, #tpu.memory_space<vmem>>, vector<1x40xf32>
      %14 = vector.broadcast %13 : vector<1x40xf32> to vector<16x40xf32>
      %15 = arith.addf %12, %14 : vector<16x40xf32>
      %c0_14 = arith.constant 0 : index
      %c0_15 = arith.constant 0 : index
      %16 = vector.load %arg6[%c0_14, %c0_15] : memref<16x40xf32, #tpu.memory_space<vmem>>, vector<16x40xf32>
      tpu.vector_store %arg6[%c0_14, %c0_15], %15 {strides = array<i32>} : memref<16x40xf32, #tpu.memory_space<vmem>>, vector<16x40xf32>,
    } else {
    }
    return
  }
  func.func @transform_0(%arg0: i32, %arg1: i32, %arg2: i32) -> (i32, i32) {
    %c0_i32 = arith.constant 0 : i32
    return %arg0, %arg2 : i32, i32
  }
  func.func @transform_1(%arg0: i32, %arg1: i32, %arg2: i32) -> (i32, i32) {
    %c0_i32 = arith.constant 0 : i32
    return %arg2, %arg1 : i32, i32
  }
  func.func @transform_2(%arg0: i32, %arg1: i32, %arg2: i32) -> (i32, i32) {
    %c0_i32 = arith.constant 0 : i32
    %c0_i32_0 = arith.constant 0 : i32
    return %c0_i32, %arg1 : i32, i32
  }
  func.func @transform_3(%arg0: i32, %arg1: i32, %arg2: i32) -> (i32, i32) {
    %c0_i32 = arith.constant 0 : i32
    return %arg0, %arg1 : i32, i32
  }
}

</mosaic_0001>

<llo_original>
// kernel: decoder_forward.19
$region0: #{decoder_forward.19}
  #allocation0 [shape = 'u32[]', space=smem, size = 0x4, offset = 0x4, fixed_abs, tag = 'smem constant byte address 0x4 - core index']
  #allocation1 [shape = 'u32[144,128]{1,0:T(1,128)}', space=vmem, size = 0x12000, scoped, tag = 'internal scratch']
  #allocation2 [shape = 'f32[16,96]{1,0:T(8,128)}', space=vmem, size = 0x2000, scoped, tag = 'scratch operand']
  %s0 = inlined_call_operand.vmem [shape: bf16[16,32], index: 0, kind: input, shape index: {}]
  %s1 = inlined_call_operand.vmem [shape: bf16[32,96], index: 1, kind: input, shape index: {}]
  %s2 = inlined_call_operand.vmem [shape: f32[1,96], index: 2, kind: input, shape index: {}]
  %s3 = inlined_call_operand.vmem [shape: bf16[16,96], index: 3, kind: output, shape index: {}]
  %s4 = sld [smem:[#allocation0]]
  $region30: #{decoder_forward.19} parent=0
    _
  %s6 = ssub.s32 1, %s4
  %s7 = scalar_select 0, %s6, %s4
  // Predicated region
  $region2: #{decoder_forward.19} parent=0 // pred_check
    _
  $region3: #{decoder_forward.19} parent=0 // pred_check_branch
    %9 = sbr.rel (0) target = $region5
  $region4: #{decoder_forward.19} parent=0 // pred_region
    _
  $region5: #{decoder_forward.19} parent=0 // pred_fallthru
    _
  // Predicated region
  $region6: #{decoder_forward.19} parent=0 // pred_check
    _
  $region7: #{decoder_forward.19} parent=0 // pred_check_branch
    %11 = sbr.rel (0) target = $region9
  $region8: #{decoder_forward.19} parent=0 // pred_region
    _
  $region9: #{decoder_forward.19} parent=0 // pred_fallthru
    _
  // Predicated region
  $region10: #{decoder_forward.19} parent=0 // pred_check
    _
  $region11: #{decoder_forward.19} parent=0 // pred_check_branch
    %13 = sbr.rel (0) target = $region13
  $region12: #{decoder_forward.19} parent=0 // pred_region
    _
  $region13: #{decoder_forward.19} parent=0 // pred_fallthru
    _
  %p15 = scmp.eq.s32.totalorder 0, 0
  // Predicated region
  $region14: #{decoder_forward.19} parent=0 // pred_check
    %p16 = pneg %p15
  $region15: #{decoder_forward.19} parent=0 // pred_check_branch
    %18 = sbr.rel (%p16) target = $region17
  $region16: #{decoder_forward.19} parent=0 // pred_region
    %vm19 = vcmask 785408
    %20 = vst.msk [vmem:[#allocation2] sm:$0xff] %vm19, 0.0
    %21 = vst.msk [vmem:[#allocation2 + $0x8] sm:$0xff] %vm19, 0.0
  $region17: #{decoder_forward.19} parent=0 // pred_fallthru
    _
  %v22 = vld [vmem:[#allocation2] sm:$0xff]
  %v23 = vld [vmem:[#allocation2 + $0x8] sm:$0xff]
  %v24 = vld [vmem:[%s0] sm:$0xf]
  %v25 = vld [vmem:[%s0 + $0x4] sm:$0xf]
  %v26 = vld [vmem:[%s1] sm:$0xf]
  %v27 = vld [vmem:[%s1 + $0x4] sm:$0xf]
  %v28 = vld [vmem:[%s1 + $0x8] sm:$0xf]
  %v29 = vld [vmem:[%s1 + $0xc] sm:$0xf]
  %v32 = vunpack.c.l.b16 %v24
  %v33 = vunpack.c.l.b16 %v25
  %v34 = vpack.c.b16 %v33, %v32
  %v39 = vunpack.c.l.b16 %v26
  %v40 = vunpack.c.l.b16 %v27
  %v41 = vunpack.c.l.b16 %v28
  %v42 = vunpack.c.l.b16 %v29
  %v43 = vpack.c.b16 %v40, %v39
  %v44 = vpack.c.b16 %v42, %v41
  %vm47 = vcmask 261120
  %v49 = vsel %vm47, %v34, 0
  %51 = vmatprep.subr.bf16.mxu0 0
  %52 = vmatpush1.bf16.msra.mxu0 0
  %53 = vmatprep.subr.bf16.mxu0 0
  %54 = vmatpush1.bf16.msra.mxu0 0
  %55 = vmatprep.subr.bf16.mxu0 0
  %56 = vmatpush1.bf16.msra.mxu0 0
  %57 = vmatprep.subr.bf16.mxu0 0
  %58 = vmatpush1.bf16.msra.mxu0 0
  %59 = vmatprep.subr.bf16.mxu0 0
  %60 = vmatpush1.bf16.msra.mxu0 0
  %61 = vmatprep.subr.bf16.mxu0 0
  %62 = vmatpush1.bf16.msra.mxu0 0
  %63 = vmatprep.subr.bf16.mxu0 0
  %64 = vmatpush1.bf16.msra.mxu0 %v44
  %65 = vmatprep.subr.bf16.mxu0 0
  %66 = vmatpush1.bf16.msra.mxu0 %v43
  %67 = vmatprep.subr.bf16.mxu0 0
  %68 = vmatpush2.bf16.msra.mxu0 0
  %69 = vmatprep.subr.bf16.mxu0 0
  %70 = vmatpush2.bf16.msra.mxu0 0
  %71 = vmatprep.subr.bf16.mxu0 0
  %72 = vmatpush2.bf16.msra.mxu0 0
  %73 = vmatprep.subr.bf16.mxu0 0
  %74 = vmatpush2.bf16.msra.mxu0 0
  %75 = vmatprep.subr.bf16.mxu0 0
  %76 = vmatpush2.bf16.msra.mxu0 0
  %77 = vmatprep.subr.bf16.mxu0 0
  %78 = vmatpush2.bf16.msra.mxu0 0
  %79 = vmatprep.subr.bf16.mxu0 0
  %80 = vmatpush2.bf16.msra.mxu0 0
  %81 = vmatprep.subr.bf16.mxu0 0
  %82 = vmatpush2.bf16.msra.mxu0 0
  %83 = vmatprep.mubr.bf16.mxu0 0
  %84 = vmatmul.mubr.bf16.gmra.mxu0 %v49
  %v85 = vpop.f32.mrf.mxu0
  %v86 = vadd.f32 0.0, %v85
  %v87 = vpop.f32.mrf.mxu0
  %v88 = vpop.f32.mrf.mxu0
  %v89 = vadd.f32 0.0, %v88
  %v90 = vpop.f32.mrf.mxu0
  %91 = vdwg.mxu0
  %v92 = vadd.f32 %v22, %v86
  %v93 = vadd.f32 %v23, %v89
  %vm94 = vcmask 785408
  %95 = vst.msk [vmem:[#allocation2] sm:$0xff] %vm94, %v92
  %96 = vst.msk [vmem:[#allocation2 + $0x8] sm:$0xff] %vm94, %v93
  // Predicated region
  $region18: #{decoder_forward.19} parent=0 // pred_check
    %p97 = pneg %p15
  $region19: #{decoder_forward.19} parent=0 // pred_check_branch
    %99 = sbr.rel (%p97) target = $region21
  $region20: #{decoder_forward.19} parent=0 // pred_region
    %v100 = vld [vmem:[#allocation2] sm:$0xff]
    %v101 = vld [vmem:[#allocation2 + $0x8] sm:$0xff]
    %v102 = vld [vmem:[%s2] sm:$0x1]
    %v104 = vlaneseq
    %v105 = vshrl.u32 %v104, 7
    %v106 = vsub.s32 0, %v105
    %v107 = vrot.slane %v102, %v106
    %v109 = vadd.f32 %v100, %v107
    %v110 = vadd.f32 %v101, %v107
    %v111 = vpack.c.bf16 %v110, %v109
    %v113 = vunpack.c.l.b16 %v111
    %v114 = vunpack.c.h.b16 %v111
    %v115 = vpack.c.b16 %v113, %v113
    %v116 = vpack.c.b16 %v114, %v114
    %vm119 = vcmask 781312
    %120 = vst.msk [vmem:[%s3] sm:$0xf] %vm119, %v115
    %121 = vst.msk [vmem:[%s3 + $0x4] sm:$0xf] %vm119, %v116
  $region21: #{decoder_forward.19} parent=0 // pred_fallthru
    _
  // Predicated region
  $region22: #{decoder_forward.19} parent=0 // pred_check
    _
  $region23: #{decoder_forward.19} parent=0 // pred_check_branch
    %123 = sbr.rel (0) target = $region25
  $region24: #{decoder_forward.19} parent=0 // pred_region
    _
  $region25: #{decoder_forward.19} parent=0 // pred_fallthru
    _
  // Predicated region
  $region26: #{decoder_forward.19} parent=0 // pred_check
    _
  $region27: #{decoder_forward.19} parent=0 // pred_check_branch
    %125 = sbr.rel (0) target = $region29
  $region28: #{decoder_forward.19} parent=0 // pred_region
    _
  $region29: #{decoder_forward.19} parent=0 // pred_fallthru
    _

// kernel: decoder_forward.21
$region0: #{decoder_forward.21}
  #allocation0 [shape = 'u32[]', space=smem, size = 0x4, offset = 0x4, fixed_abs, tag = 'smem constant byte address 0x4 - core index']
  #allocation1 [shape = 'u32[144,128]{1,0:T(1,128)}', space=vmem, size = 0x12000, scoped, tag = 'internal scratch']
  #allocation2 [shape = 'f32[16,32]{1,0:T(8,128)}', space=vmem, size = 0x2000, scoped, tag = 'scratch operand']
  %s0 = inlined_call_operand.vmem [shape: bf16[16,32], index: 0, kind: input, shape index: {}]
  %s1 = inlined_call_operand.vmem [shape: bf16[32,32], index: 1, kind: input, shape index: {}]
  %s2 = inlined_call_operand.vmem [shape: f32[1,32], index: 2, kind: input, shape index: {}]
  %s3 = inlined_call_operand.vmem [shape: bf16[16,32], index: 3, kind: input, shape index: {}]
  %s4 = inlined_call_operand.vmem [shape: f32[1,32], index: 4, kind: input, shape index: {}]
  %s5 = inlined_call_operand.vmem [shape: f32[1,32], index: 5, kind: input, shape index: {}]
  %s6 = inlined_call_operand.vmem [shape: f32[16,1], index: 6, kind: input, shape index: {}]
  %s7 = inlined_call_operand.vmem [shape: bf16[16,32], index: 7, kind: output, shape index: {}]
  %s8 = sld [smem:[#allocation0]]
  $region46: #{decoder_forward.21} parent=0
    _
  %s10 = ssub.s32 1, %s8
  %s11 = scalar_select 0, %s10, %s8
  // Predicated region
  $region2: #{decoder_forward.21} parent=0 // pred_check
    _
  $region3: #{decoder_forward.21} parent=0 // pred_check_branch
    %13 = sbr.rel (0) target = $region5
  $region4: #{decoder_forward.21} parent=0 // pred_region
    _
  $region5: #{decoder_forward.21} parent=0 // pred_fallthru
    _
  // Predicated region
  $region6: #{decoder_forward.21} parent=0 // pred_check
    _
  $region7: #{decoder_forward.21} parent=0 // pred_check_branch
    %15 = sbr.rel (0) target = $region9
  $region8: #{decoder_forward.21} parent=0 // pred_region
    _
  $region9: #{decoder_forward.21} parent=0 // pred_fallthru
    _
  // Predicated region
  $region10: #{decoder_forward.21} parent=0 // pred_check
    _
  $region11: #{decoder_forward.21} parent=0 // pred_check_branch
    %17 = sbr.rel (0) target = $region13
  $region12: #{decoder_forward.21} parent=0 // pred_region
    _
  $region13: #{decoder_forward.21} parent=0 // pred_fallthru
    _
  // Predicated region
  $region14: #{decoder_forward.21} parent=0 // pred_check
    _
  $region15: #{decoder_forward.21} parent=0 // pred_check_branch
    %19 = sbr.rel (0) target = $region17
  $region16: #{decoder_forward.21} parent=0 // pred_region
    _
  $region17: #{decoder_forward.21} parent=0 // pred_fallthru
    _
  // Predicated region
  $region18: #{decoder_forward.21} parent=0 // pred_check
    _
  $region19: #{decoder_forward.21} parent=0 // pred_check_branch
    %21 = sbr.rel (0) target = $region21
  $region20: #{decoder_forward.21} parent=0 // pred_region
    _
  $region21: #{decoder_forward.21} parent=0 // pred_fallthru
    _
  // Predicated region
  $region22: #{decoder_forward.21} parent=0 // pred_check
    _
  $region23: #{decoder_forward.21} parent=0 // pred_check_branch
    %23 = sbr.rel (0) target = $region25
  $region24: #{decoder_forward.21} parent=0 // pred_region
    _
  $region25: #{decoder_forward.21} parent=0 // pred_fallthru
    _
  // Predicated region
  $region26: #{decoder_forward.21} parent=0 // pred_check
    _
  $region27: #{decoder_forward.21} parent=0 // pred_check_branch
    %25 = sbr.rel (0) target = $region29
  $region28: #{decoder_forward.21} parent=0 // pred_region
    _
  $region29: #{decoder_forward.21} parent=0 // pred_fallthru
    _
  %p27 = scmp.eq.s32.totalorder 0, 0
  // Predicated region
  $region30: #{decoder_forward.21} parent=0 // pred_check
    %p28 = pneg %p27
  $region31: #{decoder_forward.21} parent=0 // pred_check_branch
    %30 = sbr.rel (%p28) target = $region33
  $region32: #{decoder_forward.21} parent=0 // pred_region
    %vm31 = vcmask 261120
    %32 = vst.msk [vmem:[#allocation2] sm:$0xff] %vm31, 0.0
    %33 = vst.msk [vmem:[#allocation2 + $0x8] sm:$0xff] %vm31, 0.0
  $region33: #{decoder_forward.21} parent=0 // pred_fallthru
    _
  %v34 = vld [vmem:[#allocation2] sm:$0xff]
  %v35 = vld [vmem:[#allocation2 + $0x8] sm:$0xff]
  %v36 = vld [vmem:[%s0] sm:$0xf]
  %v37 = vld [vmem:[%s0 + $0x4] sm:$0xf]
  %v38 = vld [vmem:[%s1] sm:$0xf]
  %v39 = vld [vmem:[%s1 + $0x4] sm:$0xf]
  %v40 = vld [vmem:[%s1 + $0x8] sm:$0xf]
  %v41 = vld [vmem:[%s1 + $0xc] sm:$0xf]
  %v44 = vunpack.c.l.b16 %v36
  %v45 = vunpack.c.l.b16 %v37
  %v46 = vpack.c.b16 %v45, %v44
  %v51 = vunpack.c.l.b16 %v38
  %v52 = vunpack.c.l.b16 %v39
  %v53 = vunpack.c.l.b16 %v40
  %v54 = vunpack.c.l.b16 %v41
  %v55 = vpack.c.b16 %v52, %v51
  %v56 = vpack.c.b16 %v54, %v53
  %vm59 = vcmask 261120
  %v61 = vsel %vm59, %v46, 0
  %63 = vmatprep.subr.bf16.mxu0 0
  %64 = vmatpush1.bf16.msra.mxu0 0
  %65 = vmatprep.subr.bf16.mxu0 0
  %66 = vmatpush1.bf16.msra.mxu0 0
  %67 = vmatprep.subr.bf16.mxu0 0
  %68 = vmatpush1.bf16.msra.mxu0 0
  %69 = vmatprep.subr.bf16.mxu0 0
  %70 = vmatpush1.bf16.msra.mxu0 0
  %71 = vmatprep.subr.bf16.mxu0 0
  %72 = vmatpush1.bf16.msra.mxu0 0
  %73 = vmatprep.subr.bf16.mxu0 0
  %74 = vmatpush1.bf16.msra.mxu0 0
  %75 = vmatprep.subr.bf16.mxu0 0
  %76 = vmatpush1.bf16.msra.mxu0 %v56
  %77 = vmatprep.subr.bf16.mxu0 0
  %78 = vmatpush1.bf16.msra.mxu0 %v55
  %79 = vmatprep.subr.bf16.mxu0 0
  %80 = vmatpush2.bf16.msra.mxu0 0
  %81 = vmatprep.subr.bf16.mxu0 0
  %82 = vmatpush2.bf16.msra.mxu0 0
  %83 = vmatprep.subr.bf16.mxu0 0
  %84 = vmatpush2.bf16.msra.mxu0 0
  %85 = vmatprep.subr.bf16.mxu0 0
  %86 = vmatpush2.bf16.msra.mxu0 0
  %87 = vmatprep.subr.bf16.mxu0 0
  %88 = vmatpush2.bf16.msra.mxu0 0
  %89 = vmatprep.subr.bf16.mxu0 0
  %90 = vmatpush2.bf16.msra.mxu0 0
  %91 = vmatprep.subr.bf16.mxu0 0
  %92 = vmatpush2.bf16.msra.mxu0 0
  %93 = vmatprep.subr.bf16.mxu0 0
  %94 = vmatpush2.bf16.msra.mxu0 0
  %95 = vmatprep.mubr.bf16.mxu0 0
  %96 = vmatmul.mubr.bf16.gmra.mxu0 %v61
  %v97 = vpop.f32.mrf.mxu0
  %v98 = vadd.f32 0.0, %v97
  %v99 = vpop.f32.mrf.mxu0
  %v100 = vpop.f32.mrf.mxu0
  %v101 = vadd.f32 0.0, %v100
  %v102 = vpop.f32.mrf.mxu0
  %103 = vdwg.mxu0
  %v104 = vadd.f32 %v34, %v98
  %v105 = vadd.f32 %v35, %v101
  %106 = vst.msk [vmem:[#allocation2] sm:$0xff] %vm59, %v104
  %107 = vst.msk [vmem:[#allocation2 + $0x8] sm:$0xff] %vm59, %v105
  // Predicated region
  $region34: #{decoder_forward.21} parent=0 // pred_check
    %p108 = pneg %p27
  $region35: #{decoder_forward.21} parent=0 // pred_check_branch
    %110 = sbr.rel (%p108) target = $region37
  $region36: #{decoder_forward.21} parent=0 // pred_region
    %v111 = vld [vmem:[#allocation2] sm:$0xff]
    %v112 = vld [vmem:[#allocation2 + $0x8] sm:$0xff]
    %v113 = vld [vmem:[%s2] sm:$0x1]
    %v115 = vlaneseq
    %v116 = vshrl.u32 %v115, 7
    %v117 = vsub.s32 0, %v116
    %v118 = vrot.slane %v113, %v117
    %v120 = vadd.f32 %v111, %v118
    %v121 = vadd.f32 %v112, %v118
    %v122 = vld [vmem:[%s3] sm:$0xf]
    %v123 = vld [vmem:[%s3 + $0x4] sm:$0xf]
    %v124 = vunpack.c.l.bf16 %v122
    %v125 = vunpack.c.l.bf16 %v123
    %v126 = vadd.f32 %v120, %v124
    %v127 = vadd.f32 %v121, %v125
    %v128 = vsel %vm59, %v126, 0.0
    %129 = vadd.xlane.f32.xlu0 %v128
    %v130 = vpop.xlane.xlu0 %129
    %v131 = vsel %vm59, %v127, 0.0
    %132 = vadd.xlane.f32.xlu0 %v131
    %v133 = vpop.xlane.xlu0 %132
    %v134 = vrcp.pop 32.0
    %v135 = vmul.f32 %v130, %v134
    %v136 = vmul.f32 %v133, %v134
    %v137 = vsub.f32 %v126, %v135
    %v138 = vsub.f32 %v127, %v136
    %v139 = vmul.f32 %v137, %v137
    %v140 = vmul.f32 %v138, %v138
    %v141 = vsel %vm59, %v139, 0.0
    %142 = vadd.xlane.f32.xlu0 %v141
    %v143 = vpop.xlane.xlu0 %142
    %v144 = vsel %vm59, %v140, 0.0
    %145 = vadd.xlane.f32.xlu0 %v144
    %v146 = vpop.xlane.xlu0 %145
    %v147 = vmul.f32 %v143, %v134
    %v148 = vmul.f32 %v146, %v134
    %v149 = vadd.f32 %v147, 1e-05
    %v150 = vadd.f32 %v148, 1e-05
    %v151 = vrsqrt.pop %v149
    %v152 = vrsqrt.pop %v150
    %v153 = vmul.f32 %v137, %v151
    %v154 = vmul.f32 %v138, %v152
    %v155 = vld [vmem:[%s4] sm:$0x1]
    %v157 = vlaneseq
    %v158 = vshrl.u32 %v157, 7
    %v159 = vsub.s32 0, %v158
    %v160 = vrot.slane %v155, %v159
    %v162 = vmul.f32 %v153, %v160
    %v163 = vmul.f32 %v154, %v160
    %v164 = vld [vmem:[%s5] sm:$0x1]
    %v166 = vlaneseq
    %v167 = vshrl.u32 %v166, 7
    %v168 = vsub.s32 0, %v167
    %v169 = vrot.slane %v164, %v168
    %v171 = vadd.f32 %v162, %v169
    %v172 = vadd.f32 %v163, %v169
    %v173 = vld [vmem:[%s6] sm:$0xff]
    %v174 = vld [vmem:[%s6 + $0x8] sm:$0xff]
    %176 = vset.pattern.permute.xlu0 0
    %177 = vperm.xlu0 %176, %v173
    %v178 = vpop.permute.xlu0 %177
    %181 = vset.pattern.permute.xlu0 0
    %182 = vperm.xlu0 %181, %v174
    %v183 = vpop.permute.xlu0 %182
    %v185 = vmul.f32 %v171, %v178
    %v186 = vmul.f32 %v172, %v183
    %v187 = vpack.c.bf16 %v186, %v185
    %v189 = vunpack.c.l.b16 %v187
    %v190 = vunpack.c.h.b16 %v187
    %v191 = vpack.c.b16 %v189, %v189
    %v192 = vpack.c.b16 %v190, %v190
    %vm195 = vcmask 257024
    %196 = vst.msk [vmem:[%s7] sm:$0xf] %vm195, %v191
    %197 = vst.msk [vmem:[%s7 + $0x4] sm:$0xf] %vm195, %v192
  $region37: #{decoder_forward.21} parent=0 // pred_fallthru
    _
  // Predicated region
  $region38: #{decoder_forward.21} parent=0 // pred_check
    _
  $region39: #{decoder_forward.21} parent=0 // pred_check_branch
    %199 = sbr.rel (0) target = $region41
  $region40: #{decoder_forward.21} parent=0 // pred_region
    _
  $region41: #{decoder_forward.21} parent=0 // pred_fallthru
    _
  // Predicated region
  $region42: #{decoder_forward.21} parent=0 // pred_check
    _
  $region43: #{decoder_forward.21} parent=0 // pred_check_branch
    %201 = sbr.rel (0) target = $region45
  $region44: #{decoder_forward.21} parent=0 // pred_region
    _
  $region45: #{decoder_forward.21} parent=0 // pred_fallthru
    _

// kernel: decoder_forward.20
$region0: #{decoder_forward.20}
  #allocation0 [shape = 'u32[]', space=smem, size = 0x4, offset = 0x4, fixed_abs, tag = 'smem constant byte address 0x4 - core index']
  #allocation1 [shape = 'u32[144,128]{1,0:T(1,128)}', space=vmem, size = 0x12000, scoped, tag = 'internal scratch']
  %s0 = inlined_call_operand.vmem [shape: bf16[2,8,32], index: 0, kind: input, shape index: {}]
  %s1 = inlined_call_operand.vmem [shape: bf16[2,8,32], index: 1, kind: input, shape index: {}]
  %s2 = inlined_call_operand.vmem [shape: bf16[2,8,32], index: 2, kind: input, shape index: {}]
  %s3 = inlined_call_operand.vmem [shape: f32[2,8,8], index: 3, kind: input, shape index: {}]
  %s4 = inlined_call_operand.vmem [shape: bf16[2,8,32], index: 4, kind: output, shape index: {}]
  %s5 = sld [smem:[#allocation0]]
  $region49: #{decoder_forward.20} parent=0
    _
  %s7 = ssub.s32 1, %s5
  %s8 = scalar_select 0, %s7, %s5
  loop: start=0, step=1, limit=4
  $region2: #{decoder_forward.20} parent=0 // loop_pre_header
    _
  $region3: #{decoder_forward.20} parent=0 // loop_header
    %s10 = sphi 0, %s14
    %p11 = scmp.ge.s32.totalorder %s10, 4
    %s17 = sphi 0, %s29
    %s18 = sphi 0, %s25
    %s19 = sphi 0, %s17
    %s20 = sphi 0, %s18
    %s21 = sphi 0, %s19
    %s22 = sphi 0, %s20
    %s34 = sphi 0, %s36
    %s37 = sphi 0, %s34
    %s38 = sphi 0, %s37
    %s54 = sphi 0, %s38
    %s60 = sphi 0, %s62
    %s63 = sphi 0, %s60
    %s64 = sphi 0, %s63
    %s80 = sphi 0, %s64
    %s86 = sphi 0, %s88
    %s89 = sphi 0, %s86
    %s90 = sphi 0, %s89
    %s106 = sphi 0, %s90
    %s114 = sphi 0, %s116
    %s117 = sphi 0, %s114
    %s118 = sphi 0, %s117
    %s134 = sphi 0, %s118
    %s142 = sphi 0, %s144
    %s145 = sphi 0, %s142
    %s146 = sphi 0, %s145
    %s162 = sphi 0, %s146
  $region4: #{decoder_forward.20} parent=0 // loop_header_branch
    %13 = sbr.rel (%p11) target = $region8
  $region5: #{decoder_forward.20} parent=0 // loop_body
    %s15 = ssub.s32 %s10, 1
    %s16 = ssub.s32 %s10, 2
    %s23 = sadd.s32 1, %s18
    %p24 = scmp.ge.s32.totalorder %s23, 1
    %s25 = scalar_select %p24, 0, %s23
    %s26 = sadd.s32 1, %s17
    %s27 = scalar_select %p24, %s26, %s17
    %p28 = scmp.ge.s32.totalorder %s27, 2
    %s29 = scalar_select %p28, 0, %s27
    %s30 = ssub.s32 %s17, %s29
    %s31 = ssub.s32 %s18, %s25
    %s32 = sor.u32 %s30, %s31
    %p33 = scmp.eq.s32.totalorder %s32, 0
    %s35 = sadd.s32 %s34, 1
    %s36 = scalar_select %p33, %s34, %s35
    %p39 = pneg %p33
    %p40 = scmp.eq.s32.totalorder %s10, 1
    %p41 = por %p39, %p40
    %p42 = scmp.ne.s32.totalorder %s34, %s37
    %p43 = scmp.eq.s32.totalorder %s10, 0
    %p44 = por %p42, %p43
    %p45 = scmp.ne.s32.totalorder %s34, %s37
    %p46 = scmp.eq.s32.totalorder %s15, 1
    %p47 = por %p45, %p46
    %p48 = scmp.ne.s32.totalorder %s37, %s38
    %p49 = scmp.eq.s32.totalorder %s15, 0
    %p50 = por %p48, %p49
    %p51 = scmp.ne.s32.totalorder %s37, %s38
    %p52 = scmp.eq.s32.totalorder %s16, 1
    %p53 = por %p51, %p52
    %p55 = scmp.ne.s32.totalorder %s38, %s54
    %p56 = scmp.eq.s32.totalorder %s16, 0
    %p57 = por %p55, %p56
    %s58 = ssub.s32 %s17, %s29
    %p59 = scmp.eq.s32.totalorder %s58, 0
    %s61 = sadd.s32 %s60, 1
    %s62 = scalar_select %p59, %s60, %s61
    %p65 = pneg %p59
    %p66 = scmp.eq.s32.totalorder %s10, 1
    %p67 = por %p65, %p66
    %p68 = scmp.ne.s32.totalorder %s60, %s63
    %p69 = scmp.eq.s32.totalorder %s10, 0
    %p70 = por %p68, %p69
    %p71 = scmp.ne.s32.totalorder %s60, %s63
    %p72 = scmp.eq.s32.totalorder %s15, 1
    %p73 = por %p71, %p72
    %p74 = scmp.ne.s32.totalorder %s63, %s64
    %p75 = scmp.eq.s32.totalorder %s15, 0
    %p76 = por %p74, %p75
    %p77 = scmp.ne.s32.totalorder %s63, %s64
    %p78 = scmp.eq.s32.totalorder %s16, 1
    %p79 = por %p77, %p78
    %p81 = scmp.ne.s32.totalorder %s64, %s80
    %p82 = scmp.eq.s32.totalorder %s16, 0
    %p83 = por %p81, %p82
    %s84 = ssub.s32 %s17, %s29
    %p85 = scmp.eq.s32.totalorder %s84, 0
    %s87 = sadd.s32 %s86, 1
    %s88 = scalar_select %p85, %s86, %s87
    %p91 = pneg %p85
    %p92 = scmp.eq.s32.totalorder %s10, 1
    %p93 = por %p91, %p92
    %p94 = scmp.ne.s32.totalorder %s86, %s89
    %p95 = scmp.eq.s32.totalorder %s10, 0
    %p96 = por %p94, %p95
    %p97 = scmp.ne.s32.totalorder %s86, %s89
    %p98 = scmp.eq.s32.totalorder %s15, 1
    %p99 = por %p97, %p98
    %p100 = scmp.ne.s32.totalorder %s89, %s90
    %p101 = scmp.eq.s32.totalorder %s15, 0
    %p102 = por %p100, %p101
    %p103 = scmp.ne.s32.totalorder %s89, %s90
    %p104 = scmp.eq.s32.totalorder %s16, 1
    %p105 = por %p103, %p104
    %p107 = scmp.ne.s32.totalorder %s90, %s106
    %p108 = scmp.eq.s32.totalorder %s16, 0
    %p109 = por %p107, %p108
    %s110 = ssub.s32 %s17, %s29
    %s111 = ssub.s32 %s18, %s25
    %s112 = sor.u32 %s110, %s111
    %p113 = scmp.eq.s32.totalorder %s112, 0
    %s115 = sadd.s32 %s114, 1
    %s116 = scalar_select %p113, %s114, %s115
    %p119 = pneg %p113
    %p120 = scmp.eq.s32.totalorder %s10, 1
    %p121 = por %p119, %p120
    %p122 = scmp.ne.s32.totalorder %s114, %s117
    %p123 = scmp.eq.s32.totalorder %s10, 0
    %p124 = por %p122, %p123
    %p125 = scmp.ne.s32.totalorder %s114, %s117
    %p126 = scmp.eq.s32.totalorder %s15, 1
    %p127 = por %p125, %p126
    %p128 = scmp.ne.s32.totalorder %s117, %s118
    %p129 = scmp.eq.s32.totalorder %s15, 0
    %p130 = por %p128, %p129
    %p131 = scmp.ne.s32.totalorder %s117, %s118
    %p132 = scmp.eq.s32.totalorder %s16, 1
    %p133 = por %p131, %p132
    %p135 = scmp.ne.s32.totalorder %s118, %s134
    %p136 = scmp.eq.s32.totalorder %s16, 0
    %p137 = por %p135, %p136
    %s138 = ssub.s32 %s17, %s29
    %s139 = ssub.s32 %s18, %s25
    %s140 = sor.u32 %s138, %s139
    %p141 = scmp.eq.s32.totalorder %s140, 0
    %s143 = sadd.s32 %s142, 1
    %s144 = scalar_select %p141, %s142, %s143
    %p147 = pneg %p141
    %p148 = scmp.eq.s32.totalorder %s10, 1
    %p149 = por %p147, %p148
    %p150 = scmp.ne.s32.totalorder %s142, %s145
    %p151 = scmp.eq.s32.totalorder %s10, 0
    %p152 = por %p150, %p151
    %p153 = scmp.ne.s32.totalorder %s142, %s145
    %p154 = scmp.eq.s32.totalorder %s15, 1
    %p155 = por %p153, %p154
    %p156 = scmp.ne.s32.totalorder %s145, %s146
    %p157 = scmp.eq.s32.totalorder %s15, 0
    %p158 = por %p156, %p157
    %p159 = scmp.ne.s32.totalorder %s145, %s146
    %p160 = scmp.eq.s32.totalorder %s16, 1
    %p161 = por %p159, %p160
    %p163 = scmp.ne.s32.totalorder %s146, %s162
    %p164 = scmp.eq.s32.totalorder %s16, 0
    %p165 = por %p163, %p164
    %p166 = scmp.le.s32.totalorder 1, %s10
    %p167 = scmp.lt.s32.totalorder %s10, 3
    %p168 = pnand %p166, %p167
    %p169 = pneg %p168
    // Predicated region
    $region9: #{decoder_forward.20} parent=5 // pred_check
      _
    $region10: #{decoder_forward.20} parent=5 // pred_check_branch
      %171 = sbr.rel (%p168) target = $region12
    $region11: #{decoder_forward.20} parent=5 // pred_region
      %s172 = ssub.s32 %s10, 1
    $region12: #{decoder_forward.20} parent=5 // pred_fallthru
      _
    %p173 = scmp.lt.s32.totalorder %s10, 2
    // Predicated region
    $region13: #{decoder_forward.20} parent=5 // pred_check
      %p174 = pneg %p173
    $region14: #{decoder_forward.20} parent=5 // pred_check_branch
      %176 = sbr.rel (%p174) target = $region16
    $region15: #{decoder_forward.20} parent=5 // pred_region
      // Predicated region
      $region17: #{decoder_forward.20} parent=15 // pred_check
        %p177 = pneg %p44
      $region18: #{decoder_forward.20} parent=15 // pred_check_branch
        %179 = sbr.rel (%p177) target = $region20
      $region19: #{decoder_forward.20} parent=15 // pred_region
        %p180 = scmp.lt.s32.totalorder %s17, 1
        %s181 = scalar_select %p180, %s17, 1
        %p182 = scmp.lt.s32.totalorder %s18, 0
        %s183 = scalar_select %p182, %s18, 0
        %s184 = sadd.s32 %s183, %s181
        %s185 = smul.addr %s184, 4
        %s186 = scalar_lea.vmem %s0, %s185
      $region20: #{decoder_forward.20} parent=15 // pred_fallthru
        _
      // Predicated region
      $region21: #{decoder_forward.20} parent=15 // pred_check
        %p187 = pneg %p70
      $region22: #{decoder_forward.20} parent=15 // pred_check_branch
        %189 = sbr.rel (%p187) target = $region24
      $region23: #{decoder_forward.20} parent=15 // pred_region
        %p190 = scmp.lt.s32.totalorder %s17, 1
        %s191 = scalar_select %p190, %s17, 1
        %s192 = smul.addr %s191, 4
        %s193 = scalar_lea.vmem %s1, %s192
      $region24: #{decoder_forward.20} parent=15 // pred_fallthru
        _
      // Predicated region
      $region25: #{decoder_forward.20} parent=15 // pred_check
        %p194 = pneg %p96
      $region26: #{decoder_forward.20} parent=15 // pred_check_branch
        %196 = sbr.rel (%p194) target = $region28
      $region27: #{decoder_forward.20} parent=15 // pred_region
        %p197 = scmp.lt.s32.totalorder %s17, 1
        %s198 = scalar_select %p197, %s17, 1
        %s199 = smul.addr %s198, 4
        %s200 = scalar_lea.vmem %s2, %s199
      $region28: #{decoder_forward.20} parent=15 // pred_fallthru
        _
      // Predicated region
      $region29: #{decoder_forward.20} parent=15 // pred_check
        %p201 = pneg %p124
      $region30: #{decoder_forward.20} parent=15 // pred_check_branch
        %203 = sbr.rel (%p201) target = $region32
      $region31: #{decoder_forward.20} parent=15 // pred_region
        %p204 = scmp.lt.s32.totalorder %s17, 1
        %s205 = scalar_select %p204, %s17, 1
        %p206 = scmp.lt.s32.totalorder %s18, 0
        %s207 = scalar_select %p206, %s18, 0
        %s208 = sadd.s32 %s207, %s205
        %s209 = smul.addr %s208, 8
        %s210 = scalar_lea.vmem %s3, %s209
      $region32: #{decoder_forward.20} parent=15 // pred_fallthru
        _
    $region16: #{decoder_forward.20} parent=5 // pred_fallthru
      _
    %p211 = scmp.le.s32.totalorder 1, %s10
    %p212 = scmp.lt.s32.totalorder %s10, 3
    %p213 = pnand %p211, %p212
    %p214 = pneg %p213
    // Predicated region
    $region33: #{decoder_forward.20} parent=5 // pred_check
      _
    $region34: #{decoder_forward.20} parent=5 // pred_check_branch
      %216 = sbr.rel (%p213) target = $region36
    $region35: #{decoder_forward.20} parent=5 // pred_region
      %s217 = ssub.s32 %s10, 1
      %p218 = scmp.lt.s32.totalorder %s19, 1
      %s219 = scalar_select %p218, %s19, 1
      %p220 = scmp.lt.s32.totalorder %s20, 0
      %s221 = scalar_select %p220, %s20, 0
      %s222 = sadd.s32 %s221, %s219
      %s223 = smul.addr %s222, 4
      %s224 = scalar_lea.vmem %s0, %s223
      %p225 = pneg %p50
      %p226 = pneg %p47
      %p227 = scmp.lt.s32.totalorder %s19, 1
      %s228 = scalar_select %p227, %s19, 1
      %s229 = smul.addr %s228, 4
      %s230 = scalar_lea.vmem %s1, %s229
      %p231 = pneg %p76
      %p232 = pneg %p73
      %p233 = scmp.lt.s32.totalorder %s19, 1
      %s234 = scalar_select %p233, %s19, 1
      %s235 = smul.addr %s234, 4
      %s236 = scalar_lea.vmem %s2, %s235
      %p237 = pneg %p102
      %p238 = pneg %p99
      %p239 = scmp.lt.s32.totalorder %s19, 1
      %s240 = scalar_select %p239, %s19, 1
      %p241 = scmp.lt.s32.totalorder %s20, 0
      %s242 = scalar_select %p241, %s20, 0
      %s243 = sadd.s32 %s242, %s240
      %s244 = smul.addr %s243, 8
      %s245 = scalar_lea.vmem %s3, %s244
      %p246 = pneg %p130
      %p247 = pneg %p127
      %p248 = pneg %p158
      %p249 = pneg %p155
      %p250 = scmp.lt.s32.totalorder %s19, 1
      %s251 = scalar_select %p250, %s19, 1
      %p252 = scmp.lt.s32.totalorder %s20, 0
      %s253 = scalar_select %p252, %s20, 0
      %s254 = sadd.s32 %s253, %s251
      %s255 = smul.addr %s254, 4
      %s256 = scalar_lea.vmem %s4, %s255
      %p257 = scmp.lt.s32.totalorder %s19, 1
      %s258 = scalar_select %p257, %s19, 1
      %p259 = scmp.lt.s32.totalorder %s20, 0
      %s260 = scalar_select %p259, %s20, 0
      %s261 = sadd.s32 %s260, %s258
      %s262 = smul.addr %s261, 4
      %s263 = scalar_lea.vmem %s0, %s262
      %p264 = scmp.lt.s32.totalorder %s19, 1
      %s265 = scalar_select %p264, %s19, 1
      %s266 = smul.addr %s265, 4
      %s267 = scalar_lea.vmem %s1, %s266
      %p268 = scmp.lt.s32.totalorder %s19, 1
      %s269 = scalar_select %p268, %s19, 1
      %s270 = smul.addr %s269, 4
      %s271 = scalar_lea.vmem %s2, %s270
      %p272 = scmp.lt.s32.totalorder %s19, 1
      %s273 = scalar_select %p272, %s19, 1
      %p274 = scmp.lt.s32.totalorder %s20, 0
      %s275 = scalar_select %p274, %s20, 0
      %s276 = sadd.s32 %s275, %s273
      %s277 = smul.addr %s276, 8
      %s278 = scalar_lea.vmem %s3, %s277
      %p279 = scmp.lt.s32.totalorder %s19, 1
      %s280 = scalar_select %p279, %s19, 1
      %p281 = scmp.lt.s32.totalorder %s20, 0
      %s282 = scalar_select %p281, %s20, 0
      %s283 = sadd.s32 %s282, %s280
      %s284 = smul.addr %s283, 4
      %s285 = scalar_lea.vmem %s4, %s284
      %v287 = vld [vmem:[%s263] sm:$0xf]
      %v288 = vld [vmem:[%s267] sm:$0xf]
      %v289 = vld [vmem:[%s271] sm:$0xf]
      %v290 = vld [vmem:[%s278] sm:$0xff]
      %vm291 = vcmask 64512
      %v293 = vsel %vm291, %v287, 0
      %v296 = vsel %vm291, %v288, 0
      %298 = vmatprep.subr.bf16.mxu0 0
      %299 = vmatpush1.bf16.xpose.msra.mxu0 0
      %300 = vmatprep.subr.bf16.mxu0 0
      %301 = vmatpush1.bf16.xpose.msra.mxu0 0
      %302 = vmatprep.subr.bf16.mxu0 0
      %303 = vmatpush1.bf16.xpose.msra.mxu0 0
      %304 = vmatprep.subr.bf16.mxu0 0
      %305 = vmatpush1.bf16.xpose.msra.mxu0 0
      %306 = vmatprep.subr.bf16.mxu0 0
      %307 = vmatpush1.bf16.xpose.msra.mxu0 0
      %308 = vmatprep.subr.bf16.mxu0 0
      %309 = vmatpush1.bf16.xpose.msra.mxu0 0
      %310 = vmatprep.subr.bf16.mxu0 0
      %311 = vmatpush1.bf16.xpose.msra.mxu0 0
      %312 = vmatprep.subr.bf16.mxu0 0
      %313 = vmatpush1.bf16.xpose.msra.mxu0 %v296
      %314 = vmatprep.subr.bf16.mxu0 0
      %315 = vmatpush2.bf16.xpose.msra.mxu0 0
      %316 = vmatprep.subr.bf16.mxu0 0
      %317 = vmatpush2.bf16.xpose.msra.mxu0 0
      %318 = vmatprep.subr.bf16.mxu0 0
      %319 = vmatpush2.bf16.xpose.msra.mxu0 0
      %320 = vmatprep.subr.bf16.mxu0 0
      %321 = vmatpush2.bf16.xpose.msra.mxu0 0
      %322 = vmatprep.subr.bf16.mxu0 0
      %323 = vmatpush2.bf16.xpose.msra.mxu0 0
      %324 = vmatprep.subr.bf16.mxu0 0
      %325 = vmatpush2.bf16.xpose.msra.mxu0 0
      %326 = vmatprep.subr.bf16.mxu0 0
      %327 = vmatpush2.bf16.xpose.msra.mxu0 0
      %328 = vmatprep.subr.bf16.mxu0 0
      %329 = vmatpush2.bf16.xpose.msra.mxu0 0
      %330 = vmatprep.mubr.bf16.mxu0 0
      %331 = vmatmul.mubr.bf16.gmra.mxu0 %v293
      %v332 = vpop.f32.mrf.mxu0
      %v333 = vadd.f32 %v290, %v332
      %v334 = vpop.f32.mrf.mxu0
      %v335 = vpop.f32.mrf.mxu0
      %v336 = vpop.f32.mrf.mxu0
      %337 = vdwg.mxu0
      %v338 = vsel %vm291, %v333, -inf
      %339 = vmax.xlane.f32.xlu0 %v338
      %v340 = vpop.xlane.xlu0 %339
      %v341 = vsub.f32 %v333, %v340
      %v342 = vmul.f32 %v341, 1.442695
      %v343 = vpow.pop %v342
      %v344 = vsel %vm291, %v343, 0.0
      %345 = vadd.xlane.f32.xlu0 %v344
      %v346 = vpop.xlane.xlu0 %345
      %v347 = vrcp.pop %v346
      %v348 = vmul.f32 %v343, %v347
      %v349 = vpack.c.bf16 %v348, %v348
      %v351 = vsel %vm291, %v349, 0
      %vm353 = vcmask 1043456
      %v355 = vsel %vm353, %v289, 0
      %357 = vmatprep.subr.bf16.mxu0 0
      %358 = vmatpush1.bf16.msra.mxu0 0
      %359 = vmatprep.subr.bf16.mxu0 0
      %360 = vmatpush1.bf16.msra.mxu0 0
      %361 = vmatprep.subr.bf16.mxu0 0
      %362 = vmatpush1.bf16.msra.mxu0 0
      %363 = vmatprep.subr.bf16.mxu0 0
      %364 = vmatpush1.bf16.msra.mxu0 0
      %365 = vmatprep.subr.bf16.mxu0 0
      %366 = vmatpush1.bf16.msra.mxu0 0
      %367 = vmatprep.subr.bf16.mxu0 0
      %368 = vmatpush1.bf16.msra.mxu0 0
      %369 = vmatprep.subr.bf16.mxu0 0
      %370 = vmatpush1.bf16.msra.mxu0 0
      %371 = vmatprep.subr.bf16.mxu0 0
      %372 = vmatpush1.bf16.msra.mxu0 %v355
      %373 = vmatprep.subr.bf16.mxu0 0
      %374 = vmatpush2.bf16.msra.mxu0 0
      %375 = vmatprep.subr.bf16.mxu0 0
      %376 = vmatpush2.bf16.msra.mxu0 0
      %377 = vmatprep.subr.bf16.mxu0 0
      %378 = vmatpush2.bf16.msra.mxu0 0
      %379 = vmatprep.subr.bf16.mxu0 0
      %380 = vmatpush2.bf16.msra.mxu0 0
      %381 = vmatprep.subr.bf16.mxu0 0
      %382 = vmatpush2.bf16.msra.mxu0 0
      %383 = vmatprep.subr.bf16.mxu0 0
      %384 = vmatpush2.bf16.msra.mxu0 0
      %385 = vmatprep.subr.bf16.mxu0 0
      %386 = vmatpush2.bf16.msra.mxu0 0
      %387 = vmatprep.subr.bf16.mxu0 0
      %388 = vmatpush2.bf16.msra.mxu0 0
      %389 = vmatprep.mubr.bf16.mxu0 0
      %390 = vmatmul.mubr.bf16.gmra.mxu0 %v351
      %v391 = vpop.f32.mrf.mxu0
      %v392 = vadd.f32 0.0, %v391
      %v393 = vpop.f32.mrf.mxu0
      %v394 = vpop.f32.mrf.mxu0
      %v395 = vpop.f32.mrf.mxu0
      %396 = vdwg.mxu0
      %v398 = vunpack.c.l.b16 %v287
      %v399 = vpack.c.b16 %v398, %v398
      %400 = vrot.lane.b32.xlu0 %v399, 120
      %v401 = vpop.permute.xlu0 %400
      %v403 = vunpack.c.l.b16 %v288
      %v404 = vpack.c.b16 %v403, %v403
      %405 = vrot.lane.b32.xlu0 %v404, 120
      %v406 = vpop.permute.xlu0 %405
      %v408 = vsel %vm291, %v401, 0
      %v411 = vsel %vm291, %v406, 0
      %413 = vmatprep.subr.bf16.mxu0 0
      %414 = vmatpush1.bf16.xpose.msra.mxu0 0
      %415 = vmatprep.subr.bf16.mxu0 0
      %416 = vmatpush1.bf16.xpose.msra.mxu0 0
      %417 = vmatprep.subr.bf16.mxu0 0
      %418 = vmatpush1.bf16.xpose.msra.mxu0 0
      %419 = vmatprep.subr.bf16.mxu0 0
      %420 = vmatpush1.bf16.xpose.msra.mxu0 0
      %421 = vmatprep.subr.bf16.mxu0 0
      %422 = vmatpush1.bf16.xpose.msra.mxu0 0
      %423 = vmatprep.subr.bf16.mxu0 0
      %424 = vmatpush1.bf16.xpose.msra.mxu0 0
      %425 = vmatprep.subr.bf16.mxu0 0
      %426 = vmatpush1.bf16.xpose.msra.mxu0 0
      %427 = vmatprep.subr.bf16.mxu0 0
      %428 = vmatpush1.bf16.xpose.msra.mxu0 %v411
      %429 = vmatprep.subr.bf16.mxu0 0
      %430 = vmatpush2.bf16.xpose.msra.mxu0 0
      %431 = vmatprep.subr.bf16.mxu0 0
      %432 = vmatpush2.bf16.xpose.msra.mxu0 0
      %433 = vmatprep.subr.bf16.mxu0 0
      %434 = vmatpush2.bf16.xpose.msra.mxu0 0
      %435 = vmatprep.subr.bf16.mxu0 0
      %436 = vmatpush2.bf16.xpose.msra.mxu0 0
      %437 = vmatprep.subr.bf16.mxu0 0
      %438 = vmatpush2.bf16.xpose.msra.mxu0 0
      %439 = vmatprep.subr.bf16.mxu0 0
      %440 = vmatpush2.bf16.xpose.msra.mxu0 0
      %441 = vmatprep.subr.bf16.mxu0 0
      %442 = vmatpush2.bf16.xpose.msra.mxu0 0
      %443 = vmatprep.subr.bf16.mxu0 0
      %444 = vmatpush2.bf16.xpose.msra.mxu0 0
      %445 = vmatprep.mubr.bf16.mxu0 0
      %446 = vmatmul.mubr.bf16.gmra.mxu0 %v408
      %v447 = vpop.f32.mrf.mxu0
      %v448 = vadd.f32 %v290, %v447
      %v449 = vpop.f32.mrf.mxu0
      %v450 = vpop.f32.mrf.mxu0
      %v451 = vpop.f32.mrf.mxu0
      %452 = vdwg.mxu0
      %v453 = vsel %vm291, %v448, -inf
      %454 = vmax.xlane.f32.xlu0 %v453
      %v455 = vpop.xlane.xlu0 %454
      %v456 = vsub.f32 %v448, %v455
      %v457 = vmul.f32 %v456, 1.442695
      %v458 = vpow.pop %v457
      %v459 = vsel %vm291, %v458, 0.0
      %460 = vadd.xlane.f32.xlu0 %v459
      %v461 = vpop.xlane.xlu0 %460
      %v462 = vrcp.pop %v461
      %v463 = vmul.f32 %v458, %v462
      %v464 = vpack.c.bf16 %v463, %v463
      %v466 = vunpack.c.l.b16 %v289
      %v467 = vpack.c.b16 %v466, %v466
      %468 = vrot.lane.b32.xlu0 %v467, 120
      %v469 = vpop.permute.xlu0 %468
      %v471 = vsel %vm291, %v464, 0
      %v474 = vsel %vm353, %v469, 0
      %476 = vmatprep.subr.bf16.mxu0 0
      %477 = vmatpush1.bf16.msra.mxu0 0
      %478 = vmatprep.subr.bf16.mxu0 0
      %479 = vmatpush1.bf16.msra.mxu0 0
      %480 = vmatprep.subr.bf16.mxu0 0
      %481 = vmatpush1.bf16.msra.mxu0 0
      %482 = vmatprep.subr.bf16.mxu0 0
      %483 = vmatpush1.bf16.msra.mxu0 0
      %484 = vmatprep.subr.bf16.mxu0 0
      %485 = vmatpush1.bf16.msra.mxu0 0
      %486 = vmatprep.subr.bf16.mxu0 0
      %487 = vmatpush1.bf16.msra.mxu0 0
      %488 = vmatprep.subr.bf16.mxu0 0
      %489 = vmatpush1.bf16.msra.mxu0 0
      %490 = vmatprep.subr.bf16.mxu0 0
      %491 = vmatpush1.bf16.msra.mxu0 %v474
      %492 = vmatprep.subr.bf16.mxu0 0
      %493 = vmatpush2.bf16.msra.mxu0 0
      %494 = vmatprep.subr.bf16.mxu0 0
      %495 = vmatpush2.bf16.msra.mxu0 0
      %496 = vmatprep.subr.bf16.mxu0 0
      %497 = vmatpush2.bf16.msra.mxu0 0
      %498 = vmatprep.subr.bf16.mxu0 0
      %499 = vmatpush2.bf16.msra.mxu0 0
      %500 = vmatprep.subr.bf16.mxu0 0
      %501 = vmatpush2.bf16.msra.mxu0 0
      %502 = vmatprep.subr.bf16.mxu0 0
      %503 = vmatpush2.bf16.msra.mxu0 0
      %504 = vmatprep.subr.bf16.mxu0 0
      %505 = vmatpush2.bf16.msra.mxu0 0
      %506 = vmatprep.subr.bf16.mxu0 0
      %507 = vmatpush2.bf16.msra.mxu0 0
      %508 = vmatprep.mubr.bf16.mxu0 0
      %509 = vmatmul.mubr.bf16.gmra.mxu0 %v471
      %v510 = vpop.f32.mrf.mxu0
      %v511 = vadd.f32 0.0, %v510
      %v512 = vpop.f32.mrf.mxu0
      %v513 = vpop.f32.mrf.mxu0
      %v514 = vpop.f32.mrf.mxu0
      %515 = vdwg.mxu0
      %516 = vrot.lane.b32.xlu0 %v399, 112
      %v517 = vpop.permute.xlu0 %516
      %518 = vrot.lane.b32.xlu0 %v404, 112
      %v519 = vpop.permute.xlu0 %518
      %v521 = vsel %vm291, %v517, 0
      %v524 = vsel %vm291, %v519, 0
      %526 = vmatprep.subr.bf16.mxu0 0
      %527 = vmatpush1.bf16.xpose.msra.mxu0 0
      %528 = vmatprep.subr.bf16.mxu0 0
      %529 = vmatpush1.bf16.xpose.msra.mxu0 0
      %530 = vmatprep.subr.bf16.mxu0 0
      %531 = vmatpush1.bf16.xpose.msra.mxu0 0
      %532 = vmatprep.subr.bf16.mxu0 0
      %533 = vmatpush1.bf16.xpose.msra.mxu0 0
      %534 = vmatprep.subr.bf16.mxu0 0
      %535 = vmatpush1.bf16.xpose.msra.mxu0 0
      %536 = vmatprep.subr.bf16.mxu0 0
      %537 = vmatpush1.bf16.xpose.msra.mxu0 0
      %538 = vmatprep.subr.bf16.mxu0 0
      %539 = vmatpush1.bf16.xpose.msra.mxu0 0
      %540 = vmatprep.subr.bf16.mxu0 0
      %541 = vmatpush1.bf16.xpose.msra.mxu0 %v524
      %542 = vmatprep.subr.bf16.mxu0 0
      %543 = vmatpush2.bf16.xpose.msra.mxu0 0
      %544 = vmatprep.subr.bf16.mxu0 0
      %545 = vmatpush2.bf16.xpose.msra.mxu0 0
      %546 = vmatprep.subr.bf16.mxu0 0
      %547 = vmatpush2.bf16.xpose.msra.mxu0 0
      %548 = vmatprep.subr.bf16.mxu0 0
      %549 = vmatpush2.bf16.xpose.msra.mxu0 0
      %550 = vmatprep.subr.bf16.mxu0 0
      %551 = vmatpush2.bf16.xpose.msra.mxu0 0
      %552 = vmatprep.subr.bf16.mxu0 0
      %553 = vmatpush2.bf16.xpose.msra.mxu0 0
      %554 = vmatprep.subr.bf16.mxu0 0
      %555 = vmatpush2.bf16.xpose.msra.mxu0 0
      %556 = vmatprep.subr.bf16.mxu0 0
      %557 = vmatpush2.bf16.xpose.msra.mxu0 0
      %558 = vmatprep.mubr.bf16.mxu0 0
      %559 = vmatmul.mubr.bf16.gmra.mxu0 %v521
      %v560 = vpop.f32.mrf.mxu0
      %v561 = vadd.f32 %v290, %v560
      %v562 = vpop.f32.mrf.mxu0
      %v563 = vpop.f32.mrf.mxu0
      %v564 = vpop.f32.mrf.mxu0
      %565 = vdwg.mxu0
      %v566 = vsel %vm291, %v561, -inf
      %567 = vmax.xlane.f32.xlu0 %v566
      %v568 = vpop.xlane.xlu0 %567
      %v569 = vsub.f32 %v561, %v568
      %v570 = vmul.f32 %v569, 1.442695
      %v571 = vpow.pop %v570
      %v572 = vsel %vm291, %v571, 0.0
      %573 = vadd.xlane.f32.xlu0 %v572
      %v574 = vpop.xlane.xlu0 %573
      %v575 = vrcp.pop %v574
      %v576 = vmul.f32 %v571, %v575
      %v577 = vpack.c.bf16 %v576, %v576
      %578 = vrot.lane.b32.xlu0 %v467, 112
      %v579 = vpop.permute.xlu0 %578
      %v581 = vsel %vm291, %v577, 0
      %v584 = vsel %vm353, %v579, 0
      %586 = vmatprep.subr.bf16.mxu0 0
      %587 = vmatpush1.bf16.msra.mxu0 0
      %588 = vmatprep.subr.bf16.mxu0 0
      %589 = vmatpush1.bf16.msra.mxu0 0
      %590 = vmatprep.subr.bf16.mxu0 0
      %591 = vmatpush1.bf16.msra.mxu0 0
      %592 = vmatprep.subr.bf16.mxu0 0
      %593 = vmatpush1.bf16.msra.mxu0 0
      %594 = vmatprep.subr.bf16.mxu0 0
      %595 = vmatpush1.bf16.msra.mxu0 0
      %596 = vmatprep.subr.bf16.mxu0 0
      %597 = vmatpush1.bf16.msra.mxu0 0
      %598 = vmatprep.subr.bf16.mxu0 0
      %599 = vmatpush1.bf16.msra.mxu0 0
      %600 = vmatprep.subr.bf16.mxu0 0
      %601 = vmatpush1.bf16.msra.mxu0 %v584
      %602 = vmatprep.subr.bf16.mxu0 0
      %603 = vmatpush2.bf16.msra.mxu0 0
      %604 = vmatprep.subr.bf16.mxu0 0
      %605 = vmatpush2.bf16.msra.mxu0 0
      %606 = vmatprep.subr.bf16.mxu0 0
      %607 = vmatpush2.bf16.msra.mxu0 0
      %608 = vmatprep.subr.bf16.mxu0 0
      %609 = vmatpush2.bf16.msra.mxu0 0
      %610 = vmatprep.subr.bf16.mxu0 0
      %611 = vmatpush2.bf16.msra.mxu0 0
      %612 = vmatprep.subr.bf16.mxu0 0
      %613 = vmatpush2.bf16.msra.mxu0 0
      %614 = vmatprep.subr.bf16.mxu0 0
      %615 = vmatpush2.bf16.msra.mxu0 0
      %616 = vmatprep.subr.bf16.mxu0 0
      %617 = vmatpush2.bf16.msra.mxu0 0
      %618 = vmatprep.mubr.bf16.mxu0 0
      %619 = vmatmul.mubr.bf16.gmra.mxu0 %v581
      %v620 = vpop.f32.mrf.mxu0
      %v621 = vadd.f32 0.0, %v620
      %v622 = vpop.f32.mrf.mxu0
      %v623 = vpop.f32.mrf.mxu0
      %v624 = vpop.f32.mrf.mxu0
      %625 = vdwg.mxu0
      %626 = vrot.lane.b32.xlu0 %v399, 104
      %v627 = vpop.permute.xlu0 %626
      %628 = vrot.lane.b32.xlu0 %v404, 104
      %v629 = vpop.permute.xlu0 %628
      %v631 = vsel %vm291, %v627, 0
      %v634 = vsel %vm291, %v629, 0
      %636 = vmatprep.subr.bf16.mxu0 0
      %637 = vmatpush1.bf16.xpose.msra.mxu0 0
      %638 = vmatprep.subr.bf16.mxu0 0
      %639 = vmatpush1.bf16.xpose.msra.mxu0 0
      %640 = vmatprep.subr.bf16.mxu0 0
      %641 = vmatpush1.bf16.xpose.msra.mxu0 0
      %642 = vmatprep.subr.bf16.mxu0 0
      %643 = vmatpush1.bf16.xpose.msra.mxu0 0
      %644 = vmatprep.subr.bf16.mxu0 0
      %645 = vmatpush1.bf16.xpose.msra.mxu0 0
      %646 = vmatprep.subr.bf16.mxu0 0
      %647 = vmatpush1.bf16.xpose.msra.mxu0 0
      %648 = vmatprep.subr.bf16.mxu0 0
      %649 = vmatpush1.bf16.xpose.msra.mxu0 0
      %650 = vmatprep.subr.bf16.mxu0 0
      %651 = vmatpush1.bf16.xpose.msra.mxu0 %v634
      %652 = vmatprep.subr.bf16.mxu0 0
      %653 = vmatpush2.bf16.xpose.msra.mxu0 0
      %654 = vmatprep.subr.bf16.mxu0 0
      %655 = vmatpush2.bf16.xpose.msra.mxu0 0
      %656 = vmatprep.subr.bf16.mxu0 0
      %657 = vmatpush2.bf16.xpose.msra.mxu0 0
      %658 = vmatprep.subr.bf16.mxu0 0
      %659 = vmatpush2.bf16.xpose.msra.mxu0 0
      %660 = vmatprep.subr.bf16.mxu0 0
      %661 = vmatpush2.bf16.xpose.msra.mxu0 0
      %662 = vmatprep.subr.bf16.mxu0 0
      %663 = vmatpush2.bf16.xpose.msra.mxu0 0
      %664 = vmatprep.subr.bf16.mxu0 0
      %665 = vmatpush2.bf16.xpose.msra.mxu0 0
      %666 = vmatprep.subr.bf16.mxu0 0
      %667 = vmatpush2.bf16.xpose.msra.mxu0 0
      %668 = vmatprep.mubr.bf16.mxu0 0
      %669 = vmatmul.mubr.bf16.gmra.mxu0 %v631
      %v670 = vpop.f32.mrf.mxu0
      %v671 = vadd.f32 %v290, %v670
      %v672 = vpop.f32.mrf.mxu0
      %v673 = vpop.f32.mrf.mxu0
      %v674 = vpop.f32.mrf.mxu0
      %675 = vdwg.mxu0
      %v676 = vsel %vm291, %v671, -inf
      %677 = vmax.xlane.f32.xlu0 %v676
      %v678 = vpop.xlane.xlu0 %677
      %v679 = vsub.f32 %v671, %v678
      %v680 = vmul.f32 %v679, 1.442695
      %v681 = vpow.pop %v680
      %v682 = vsel %vm291, %v681, 0.0
      %683 = vadd.xlane.f32.xlu0 %v682
      %v684 = vpop.xlane.xlu0 %683
      %v685 = vrcp.pop %v684
      %v686 = vmul.f32 %v681, %v685
      %v687 = vpack.c.bf16 %v686, %v686
      %688 = vrot.lane.b32.xlu0 %v467, 104
      %v689 = vpop.permute.xlu0 %688
      %v691 = vsel %vm291, %v687, 0
      %v694 = vsel %vm353, %v689, 0
      %696 = vmatprep.subr.bf16.mxu0 0
      %697 = vmatpush1.bf16.msra.mxu0 0
      %698 = vmatprep.subr.bf16.mxu0 0
      %699 = vmatpush1.bf16.msra.mxu0 0
      %700 = vmatprep.subr.bf16.mxu0 0
      %701 = vmatpush1.bf16.msra.mxu0 0
      %702 = vmatprep.subr.bf16.mxu0 0
      %703 = vmatpush1.bf16.msra.mxu0 0
      %704 = vmatprep.subr.bf16.mxu0 0
      %705 = vmatpush1.bf16.msra.mxu0 0
      %706 = vmatprep.subr.bf16.mxu0 0
      %707 = vmatpush1.bf16.msra.mxu0 0
      %708 = vmatprep.subr.bf16.mxu0 0
      %709 = vmatpush1.bf16.msra.mxu0 0
      %710 = vmatprep.subr.bf16.mxu0 0
      %711 = vmatpush1.bf16.msra.mxu0 %v694
      %712 = vmatprep.subr.bf16.mxu0 0
      %713 = vmatpush2.bf16.msra.mxu0 0
      %714 = vmatprep.subr.bf16.mxu0 0
      %715 = vmatpush2.bf16.msra.mxu0 0
      %716 = vmatprep.subr.bf16.mxu0 0
      %717 = vmatpush2.bf16.msra.mxu0 0
      %718 = vmatprep.subr.bf16.mxu0 0
      %719 = vmatpush2.bf16.msra.mxu0 0
      %720 = vmatprep.subr.bf16.mxu0 0
      %721 = vmatpush2.bf16.msra.mxu0 0
      %722 = vmatprep.subr.bf16.mxu0 0
      %723 = vmatpush2.bf16.msra.mxu0 0
      %724 = vmatprep.subr.bf16.mxu0 0
      %725 = vmatpush2.bf16.msra.mxu0 0
      %726 = vmatprep.subr.bf16.mxu0 0
      %727 = vmatpush2.bf16.msra.mxu0 0
      %728 = vmatprep.mubr.bf16.mxu0 0
      %729 = vmatmul.mubr.bf16.gmra.mxu0 %v691
      %v730 = vpop.f32.mrf.mxu0
      %v731 = vadd.f32 0.0, %v730
      %v732 = vpop.f32.mrf.mxu0
      %v733 = vpop.f32.mrf.mxu0
      %v734 = vpop.f32.mrf.mxu0
      %735 = vdwg.mxu0
      %737 = vrot.lane.b32.xlu0 %v511, 8
      %v738 = vpop.permute.xlu0 %737
      %741 = vrot.lane.b32.xlu0 %v621, 16
      %v742 = vpop.permute.xlu0 %741
      %745 = vrot.lane.b32.xlu0 %v731, 24
      %v746 = vpop.permute.xlu0 %745
      %v748 = vsel %vm291, %v392, %v738
      %vm749 = vcmask 130048
      %v750 = vsel %vm749, %v748, %v742
      %vm751 = vcmask 195584
      %v752 = vsel %vm751, %v750, %v746
      %v753 = vpack.c.bf16 %v752, %v752
      %vm754 = vcmask 257024
      %755 = vst.msk [vmem:[%s285] sm:$0xf] %vm754, %v753
      %p756 = scmp.lt.s32.totalorder %s19, 1
      %s757 = scalar_select %p756, %s19, 1
      %p758 = scmp.lt.s32.totalorder %s20, 0
      %s759 = scalar_select %p758, %s20, 0
      %s760 = sadd.s32 %s759, %s757
      %s761 = smul.addr %s760, 4
      %s762 = scalar_lea.vmem %s4, %s761
      // Predicated region
      $region37: #{decoder_forward.20} parent=35 // pred_check
        %p763 = pneg %p155
      $region38: #{decoder_forward.20} parent=35 // pred_check_branch
        %765 = sbr.rel (%p763) target = $region40
      $region39: #{decoder_forward.20} parent=35 // pred_region
        _
      $region40: #{decoder_forward.20} parent=35 // pred_fallthru
        _
    $region36: #{decoder_forward.20} parent=5 // pred_fallthru
      _
    %p766 = scmp.le.s32.totalorder 2, %s10
    // Predicated region
    $region41: #{decoder_forward.20} parent=5 // pred_check
      %p767 = pneg %p766
    $region42: #{decoder_forward.20} parent=5 // pred_check_branch
      %769 = sbr.rel (%p767) target = $region44
    $region43: #{decoder_forward.20} parent=5 // pred_region
      %s770 = ssub.s32 %s10, 2
      // Predicated region
      $region45: #{decoder_forward.20} parent=43 // pred_check
        %p771 = pneg %p161
      $region46: #{decoder_forward.20} parent=43 // pred_check_branch
        %773 = sbr.rel (%p771) target = $region48
      $region47: #{decoder_forward.20} parent=43 // pred_region
        %p774 = scmp.lt.s32.totalorder %s21, 1
        %s775 = scalar_select %p774, %s21, 1
        %p776 = scmp.lt.s32.totalorder %s22, 0
        %s777 = scalar_select %p776, %s22, 0
        %s778 = sadd.s32 %s777, %s775
        %s779 = smul.addr %s778, 4
        %s780 = scalar_lea.vmem %s4, %s779
      $region48: #{decoder_forward.20} parent=43 // pred_fallthru
        _
    $region44: #{decoder_forward.20} parent=5 // pred_fallthru
      _
  $region6: #{decoder_forward.20} parent=0 // loop_footer
    %s14 = sadd.s32 1, %s10
  $region7: #{decoder_forward.20} parent=0 // loop_footer_branch
    %9 = sbr.rel target = $region3
  $region8: #{decoder_forward.20} parent=0 // loop_exit
    _

// kernel: decoder_forward.22
$region0: #{decoder_forward.22}
  #allocation0 [shape = 'u32[]', space=smem, size = 0x4, offset = 0x4, fixed_abs, tag = 'smem constant byte address 0x4 - core index']
  #allocation1 [shape = 'u32[144,128]{1,0:T(1,128)}', space=vmem, size = 0x12000, scoped, tag = 'internal scratch']
  #allocation2 [shape = 'f32[16,32]{1,0:T(8,128)}', space=vmem, size = 0x2000, scoped, tag = 'scratch operand']
  %s0 = inlined_call_operand.vmem [shape: bf16[16,32], index: 0, kind: input, shape index: {}]
  %s1 = inlined_call_operand.vmem [shape: bf16[32,32], index: 1, kind: input, shape index: {}]
  %s2 = inlined_call_operand.vmem [shape: f32[1,32], index: 2, kind: input, shape index: {}]
  %s3 = inlined_call_operand.vmem [shape: bf16[16,32], index: 3, kind: output, shape index: {}]
  %s4 = sld [smem:[#allocation0]]
  $region30: #{decoder_forward.22} parent=0
    _
  %s6 = ssub.s32 1, %s4
  %s7 = scalar_select 0, %s6, %s4
  // Predicated region
  $region2: #{decoder_forward.22} parent=0 // pred_check
    _
  $region3: #{decoder_forward.22} parent=0 // pred_check_branch
    %9 = sbr.rel (0) target = $region5
  $region4: #{decoder_forward.22} parent=0 // pred_region
    _
  $region5: #{decoder_forward.22} parent=0 // pred_fallthru
    _
  // Predicated region
  $region6: #{decoder_forward.22} parent=0 // pred_check
    _
  $region7: #{decoder_forward.22} parent=0 // pred_check_branch
    %11 = sbr.rel (0) target = $region9
  $region8: #{decoder_forward.22} parent=0 // pred_region
    _
  $region9: #{decoder_forward.22} parent=0 // pred_fallthru
    _
  // Predicated region
  $region10: #{decoder_forward.22} parent=0 // pred_check
    _
  $region11: #{decoder_forward.22} parent=0 // pred_check_branch
    %13 = sbr.rel (0) target = $region13
  $region12: #{decoder_forward.22} parent=0 // pred_region
    _
  $region13: #{decoder_forward.22} parent=0 // pred_fallthru
    _
  %p15 = scmp.eq.s32.totalorder 0, 0
  // Predicated region
  $region14: #{decoder_forward.22} parent=0 // pred_check
    %p16 = pneg %p15
  $region15: #{decoder_forward.22} parent=0 // pred_check_branch
    %18 = sbr.rel (%p16) target = $region17
  $region16: #{decoder_forward.22} parent=0 // pred_region
    %vm19 = vcmask 261120
    %20 = vst.msk [vmem:[#allocation2] sm:$0xff] %vm19, 0.0
    %21 = vst.msk [vmem:[#allocation2 + $0x8] sm:$0xff] %vm19, 0.0
  $region17: #{decoder_forward.22} parent=0 // pred_fallthru
    _
  %v22 = vld [vmem:[#allocation2] sm:$0xff]
  %v23 = vld [vmem:[#allocation2 + $0x8] sm:$0xff]
  %v24 = vld [vmem:[%s0] sm:$0xf]
  %v25 = vld [vmem:[%s0 + $0x4] sm:$0xf]
  %v26 = vld [vmem:[%s1] sm:$0xf]
  %v27 = vld [vmem:[%s1 + $0x4] sm:$0xf]
  %v28 = vld [vmem:[%s1 + $0x8] sm:$0xf]
  %v29 = vld [vmem:[%s1 + $0xc] sm:$0xf]
  %v32 = vunpack.c.l.b16 %v24
  %v33 = vunpack.c.l.b16 %v25
  %v34 = vpack.c.b16 %v33, %v32
  %v39 = vunpack.c.l.b16 %v26
  %v40 = vunpack.c.l.b16 %v27
  %v41 = vunpack.c.l.b16 %v28
  %v42 = vunpack.c.l.b16 %v29
  %v43 = vpack.c.b16 %v40, %v39
  %v44 = vpack.c.b16 %v42, %v41
  %vm47 = vcmask 261120
  %v49 = vsel %vm47, %v34, 0
  %51 = vmatprep.subr.bf16.mxu0 0
  %52 = vmatpush1.bf16.msra.mxu0 0
  %53 = vmatprep.subr.bf16.mxu0 0
  %54 = vmatpush1.bf16.msra.mxu0 0
  %55 = vmatprep.subr.bf16.mxu0 0
  %56 = vmatpush1.bf16.msra.mxu0 0
  %57 = vmatprep.subr.bf16.mxu0 0
  %58 = vmatpush1.bf16.msra.mxu0 0
  %59 = vmatprep.subr.bf16.mxu0 0
  %60 = vmatpush1.bf16.msra.mxu0 0
  %61 = vmatprep.subr.bf16.mxu0 0
  %62 = vmatpush1.bf16.msra.mxu0 0
  %63 = vmatprep.subr.bf16.mxu0 0
  %64 = vmatpush1.bf16.msra.mxu0 %v44
  %65 = vmatprep.subr.bf16.mxu0 0
  %66 = vmatpush1.bf16.msra.mxu0 %v43
  %67 = vmatprep.subr.bf16.mxu0 0
  %68 = vmatpush2.bf16.msra.mxu0 0
  %69 = vmatprep.subr.bf16.mxu0 0
  %70 = vmatpush2.bf16.msra.mxu0 0
  %71 = vmatprep.subr.bf16.mxu0 0
  %72 = vmatpush2.bf16.msra.mxu0 0
  %73 = vmatprep.subr.bf16.mxu0 0
  %74 = vmatpush2.bf16.msra.mxu0 0
  %75 = vmatprep.subr.bf16.mxu0 0
  %76 = vmatpush2.bf16.msra.mxu0 0
  %77 = vmatprep.subr.bf16.mxu0 0
  %78 = vmatpush2.bf16.msra.mxu0 0
  %79 = vmatprep.subr.bf16.mxu0 0
  %80 = vmatpush2.bf16.msra.mxu0 0
  %81 = vmatprep.subr.bf16.mxu0 0
  %82 = vmatpush2.bf16.msra.mxu0 0
  %83 = vmatprep.mubr.bf16.mxu0 0
  %84 = vmatmul.mubr.bf16.gmra.mxu0 %v49
  %v85 = vpop.f32.mrf.mxu0
  %v86 = vadd.f32 0.0, %v85
  %v87 = vpop.f32.mrf.mxu0
  %v88 = vpop.f32.mrf.mxu0
  %v89 = vadd.f32 0.0, %v88
  %v90 = vpop.f32.mrf.mxu0
  %91 = vdwg.mxu0
  %v92 = vadd.f32 %v22, %v86
  %v93 = vadd.f32 %v23, %v89
  %94 = vst.msk [vmem:[#allocation2] sm:$0xff] %vm47, %v92
  %95 = vst.msk [vmem:[#allocation2 + $0x8] sm:$0xff] %vm47, %v93
  // Predicated region
  $region18: #{decoder_forward.22} parent=0 // pred_check
    %p96 = pneg %p15
  $region19: #{decoder_forward.22} parent=0 // pred_check_branch
    %98 = sbr.rel (%p96) target = $region21
  $region20: #{decoder_forward.22} parent=0 // pred_region
    %v99 = vld [vmem:[#allocation2] sm:$0xff]
    %v100 = vld [vmem:[#allocation2 + $0x8] sm:$0xff]
    %v101 = vld [vmem:[%s2] sm:$0x1]
    %v103 = vlaneseq
    %v104 = vshrl.u32 %v103, 7
    %v105 = vsub.s32 0, %v104
    %v106 = vrot.slane %v101, %v105
    %v108 = vadd.f32 %v99, %v106
    %v109 = vadd.f32 %v100, %v106
    %v110 = vpack.c.bf16 %v109, %v108
    %v112 = vunpack.c.l.b16 %v110
    %v113 = vunpack.c.h.b16 %v110
    %v114 = vpack.c.b16 %v112, %v112
    %v115 = vpack.c.b16 %v113, %v113
    %vm118 = vcmask 257024
    %119 = vst.msk [vmem:[%s3] sm:$0xf] %vm118, %v114
    %120 = vst.msk [vmem:[%s3 + $0x4] sm:$0xf] %vm118, %v115
  $region21: #{decoder_forward.22} parent=0 // pred_fallthru
    _
  // Predicated region
  $region22: #{decoder_forward.22} parent=0 // pred_check
    _
  $region23: #{decoder_forward.22} parent=0 // pred_check_branch
    %122 = sbr.rel (0) target = $region25
  $region24: #{decoder_forward.22} parent=0 // pred_region
    _
  $region25: #{decoder_forward.22} parent=0 // pred_fallthru
    _
  // Predicated region
  $region26: #{decoder_forward.22} parent=0 // pred_check
    _
  $region27: #{decoder_forward.22} parent=0 // pred_check_branch
    %124 = sbr.rel (0) target = $region29
  $region28: #{decoder_forward.22} parent=0 // pred_region
    _
  $region29: #{decoder_forward.22} parent=0 // pred_fallthru
    _

// kernel: decoder_forward.23
$region0: #{decoder_forward.23}
  #allocation0 [shape = 'u32[]', space=smem, size = 0x4, offset = 0x4, fixed_abs, tag = 'smem constant byte address 0x4 - core index']
  #allocation1 [shape = 'u32[144,128]{1,0:T(1,128)}', space=vmem, size = 0x12000, scoped, tag = 'internal scratch']
  #allocation2 [shape = 'f32[32,64]{1,0:T(8,128)}', space=vmem, size = 0x4000, scoped, tag = 'scratch operand']
  %s0 = inlined_call_operand.vmem [shape: bf16[32,32], index: 0, kind: input, shape index: {}]
  %s1 = inlined_call_operand.vmem [shape: bf16[32,64], index: 1, kind: input, shape index: {}]
  %s2 = inlined_call_operand.vmem [shape: f32[1,64], index: 2, kind: input, shape index: {}]
  %s3 = inlined_call_operand.vmem [shape: bf16[32,64], index: 3, kind: output, shape index: {}]
  %s4 = sld [smem:[#allocation0]]
  $region30: #{decoder_forward.23} parent=0
    _
  %s6 = ssub.s32 1, %s4
  %s7 = scalar_select 0, %s6, %s4
  // Predicated region
  $region2: #{decoder_forward.23} parent=0 // pred_check
    _
  $region3: #{decoder_forward.23} parent=0 // pred_check_branch
    %9 = sbr.rel (0) target = $region5
  $region4: #{decoder_forward.23} parent=0 // pred_region
    _
  $region5: #{decoder_forward.23} parent=0 // pred_fallthru
    _
  // Predicated region
  $region6: #{decoder_forward.23} parent=0 // pred_check
    _
  $region7: #{decoder_forward.23} parent=0 // pred_check_branch
    %11 = sbr.rel (0) target = $region9
  $region8: #{decoder_forward.23} parent=0 // pred_region
    _
  $region9: #{decoder_forward.23} parent=0 // pred_fallthru
    _
  // Predicated region
  $region10: #{decoder_forward.23} parent=0 // pred_check
    _
  $region11: #{decoder_forward.23} parent=0 // pred_check_branch
    %13 = sbr.rel (0) target = $region13
  $region12: #{decoder_forward.23} parent=0 // pred_region
    _
  $region13: #{decoder_forward.23} parent=0 // pred_fallthru
    _
  %p15 = scmp.eq.s32.totalorder 0, 0
  // Predicated region
  $region14: #{decoder_forward.23} parent=0 // pred_check
    %p16 = pneg %p15
  $region15: #{decoder_forward.23} parent=0 // pred_check_branch
    %18 = sbr.rel (%p16) target = $region17
  $region16: #{decoder_forward.23} parent=0 // pred_region
    %vm19 = vcmask 523264
    %20 = vst.msk [vmem:[#allocation2] sm:$0xff] %vm19, 0.0
    %21 = vst.msk [vmem:[#allocation2 + $0x8] sm:$0xff] %vm19, 0.0
    %22 = vst.msk [vmem:[#allocation2 + $0x10] sm:$0xff] %vm19, 0.0
    %23 = vst.msk [vmem:[#allocation2 + $0x18] sm:$0xff] %vm19, 0.0
  $region17: #{decoder_forward.23} parent=0 // pred_fallthru
    _
  %v24 = vld [vmem:[#allocation2] sm:$0xff]
  %v25 = vld [vmem:[#allocation2 + $0x8] sm:$0xff]
  %v26 = vld [vmem:[#allocation2 + $0x10] sm:$0xff]
  %v27 = vld [vmem:[#allocation2 + $0x18] sm:$0xff]
  %v28 = vld [vmem:[%s0] sm:$0xf]
  %v29 = vld [vmem:[%s0 + $0x4] sm:$0xf]
  %v30 = vld [vmem:[%s0 + $0x8] sm:$0xf]
  %v31 = vld [vmem:[%s0 + $0xc] sm:$0xf]
  %v32 = vld [vmem:[%s1] sm:$0xf]
  %v33 = vld [vmem:[%s1 + $0x4] sm:$0xf]
  %v34 = vld [vmem:[%s1 + $0x8] sm:$0xf]
  %v35 = vld [vmem:[%s1 + $0xc] sm:$0xf]
  %v40 = vunpack.c.l.b16 %v28
  %v41 = vunpack.c.l.b16 %v29
  %v42 = vunpack.c.l.b16 %v30
  %v43 = vunpack.c.l.b16 %v31
  %v44 = vpack.c.b16 %v41, %v40
  %v45 = vpack.c.b16 %v43, %v42
  %v50 = vunpack.c.l.b16 %v32
  %v51 = vunpack.c.l.b16 %v33
  %v52 = vunpack.c.l.b16 %v34
  %v53 = vunpack.c.l.b16 %v35
  %v54 = vpack.c.b16 %v51, %v50
  %v55 = vpack.c.b16 %v53, %v52
  %vm58 = vcmask 261120
  %v60 = vsel %vm58, %v44, 0
  %v63 = vsel %vm58, %v45, 0
  %65 = vmatprep.subr.bf16.mxu0 0
  %66 = vmatpush1.bf16.msra.mxu0 0
  %67 = vmatprep.subr.bf16.mxu0 0
  %68 = vmatpush1.bf16.msra.mxu0 0
  %69 = vmatprep.subr.bf16.mxu0 0
  %70 = vmatpush1.bf16.msra.mxu0 0
  %71 = vmatprep.subr.bf16.mxu0 0
  %72 = vmatpush1.bf16.msra.mxu0 0
  %73 = vmatprep.subr.bf16.mxu0 0
  %74 = vmatpush1.bf16.msra.mxu0 0
  %75 = vmatprep.subr.bf16.mxu0 0
  %76 = vmatpush1.bf16.msra.mxu0 0
  %77 = vmatprep.subr.bf16.mxu0 0
  %78 = vmatpush1.bf16.msra.mxu0 %v55
  %79 = vmatprep.subr.bf16.mxu0 0
  %80 = vmatpush1.bf16.msra.mxu0 %v54
  %81 = vmatprep.subr.bf16.mxu0 0
  %82 = vmatpush2.bf16.msra.mxu0 0
  %83 = vmatprep.subr.bf16.mxu0 0
  %84 = vmatpush2.bf16.msra.mxu0 0
  %85 = vmatprep.subr.bf16.mxu0 0
  %86 = vmatpush2.bf16.msra.mxu0 0
  %87 = vmatprep.subr.bf16.mxu0 0
  %88 = vmatpush2.bf16.msra.mxu0 0
  %89 = vmatprep.subr.bf16.mxu0 0
  %90 = vmatpush2.bf16.msra.mxu0 0
  %91 = vmatprep.subr.bf16.mxu0 0
  %92 = vmatpush2.bf16.msra.mxu0 0
  %93 = vmatprep.subr.bf16.mxu0 0
  %94 = vmatpush2.bf16.msra.mxu0 0
  %95 = vmatprep.subr.bf16.mxu0 0
  %96 = vmatpush2.bf16.msra.mxu0 0
  %97 = vmatprep.mubr.bf16.mxu0 0
  %98 = vmatmul.mubr.bf16.gmra.mxu0 %v60
  %v99 = vpop.f32.mrf.mxu0
  %v100 = vadd.f32 0.0, %v99
  %v101 = vpop.f32.mrf.mxu0
  %v102 = vpop.f32.mrf.mxu0
  %v103 = vadd.f32 0.0, %v102
  %v104 = vpop.f32.mrf.mxu0
  %105 = vmatprep.mubr.bf16.mxu0 0
  %106 = vmatmul.mubr.bf16.gmra.mxu0 %v63
  %v107 = vpop.f32.mrf.mxu0
  %v108 = vadd.f32 0.0, %v107
  %v109 = vpop.f32.mrf.mxu0
  %v110 = vpop.f32.mrf.mxu0
  %v111 = vadd.f32 0.0, %v110
  %v112 = vpop.f32.mrf.mxu0
  %113 = vdwg.mxu0
  %v114 = vadd.f32 %v24, %v100
  %v115 = vadd.f32 %v25, %v103
  %v116 = vadd.f32 %v26, %v108
  %v117 = vadd.f32 %v27, %v111
  %vm118 = vcmask 523264
  %119 = vst.msk [vmem:[#allocation2] sm:$0xff] %vm118, %v114
  %120 = vst.msk [vmem:[#allocation2 + $0x8] sm:$0xff] %vm118, %v115
  %121 = vst.msk [vmem:[#allocation2 + $0x10] sm:$0xff] %vm118, %v116
  %122 = vst.msk [vmem:[#allocation2 + $0x18] sm:$0xff] %vm118, %v117
  // Predicated region
  $region18: #{decoder_forward.23} parent=0 // pred_check
    %p123 = pneg %p15
  $region19: #{decoder_forward.23} parent=0 // pred_check_branch
    %125 = sbr.rel (%p123) target = $region21
  $region20: #{decoder_forward.23} parent=0 // pred_region
    %v126 = vld [vmem:[#allocation2] sm:$0xff]
    %v127 = vld [vmem:[#allocation2 + $0x8] sm:$0xff]
    %v128 = vld [vmem:[#allocation2 + $0x10] sm:$0xff]
    %v129 = vld [vmem:[#allocation2 + $0x18] sm:$0xff]
    %v130 = vld [vmem:[%s2] sm:$0x1]
    %v132 = vlaneseq
    %v133 = vshrl.u32 %v132, 7
    %v134 = vsub.s32 0, %v133
    %v135 = vrot.slane %v130, %v134
    %v137 = vadd.f32 %v126, %v135
    %v138 = vadd.f32 %v127, %v135
    %v139 = vadd.f32 %v128, %v135
    %v140 = vadd.f32 %v129, %v135
    %v141 = vpack.c.bf16 %v138, %v137
    %v142 = vpack.c.bf16 %v140, %v139
    %v145 = vunpack.c.l.b16 %v141
    %v146 = vunpack.c.h.b16 %v141
    %v147 = vunpack.c.l.b16 %v142
    %v148 = vunpack.c.h.b16 %v142
    %v149 = vpack.c.b16 %v145, %v145
    %v150 = vpack.c.b16 %v146, %v146
    %v151 = vpack.c.b16 %v147, %v147
    %v152 = vpack.c.b16 %v148, %v148
    %vm157 = vcmask 519168
    %158 = vst.msk [vmem:[%s3] sm:$0xf] %vm157, %v149
    %159 = vst.msk [vmem:[%s3 + $0x4] sm:$0xf] %vm157, %v150
    %160 = vst.msk [vmem:[%s3 + $0x8] sm:$0xf] %vm157, %v151
    %161 = vst.msk [vmem:[%s3 + $0xc] sm:$0xf] %vm157, %v152
  $region21: #{decoder_forward.23} parent=0 // pred_fallthru
    _
  // Predicated region
  $region22: #{decoder_forward.23} parent=0 // pred_check
    _
  $region23: #{decoder_forward.23} parent=0 // pred_check_branch
    %163 = sbr.rel (0) target = $region25
  $region24: #{decoder_forward.23} parent=0 // pred_region
    _
  $region25: #{decoder_forward.23} parent=0 // pred_fallthru
    _
  // Predicated region
  $region26: #{decoder_forward.23} parent=0 // pred_check
    _
  $region27: #{decoder_forward.23} parent=0 // pred_check_branch
    %165 = sbr.rel (0) target = $region29
  $region28: #{decoder_forward.23} parent=0 // pred_region
    _
  $region29: #{decoder_forward.23} parent=0 // pred_fallthru
    _

// kernel: decoder_forward.26
$region0: #{decoder_forward.26}
  #allocation0 [shape = 'u32[]', space=smem, size = 0x4, offset = 0x4, fixed_abs, tag = 'smem constant byte address 0x4 - core index']
  #allocation1 [shape = 'u32[144,128]{1,0:T(1,128)}', space=vmem, size = 0x12000, scoped, tag = 'internal scratch']
  #allocation2 [shape = 'f32[16,64]{1,0:T(8,128)}', space=vmem, size = 0x2000, scoped, tag = 'scratch operand']
  %s0 = inlined_call_operand.vmem [shape: bf16[16,32], index: 0, kind: input, shape index: {}]
  %s1 = inlined_call_operand.vmem [shape: bf16[32,64], index: 1, kind: input, shape index: {}]
  %s2 = inlined_call_operand.vmem [shape: f32[1,64], index: 2, kind: input, shape index: {}]
  %s3 = inlined_call_operand.vmem [shape: bf16[16,64], index: 3, kind: output, shape index: {}]
  %s4 = sld [smem:[#allocation0]]
  $region30: #{decoder_forward.26} parent=0
    _
  %s6 = ssub.s32 1, %s4
  %s7 = scalar_select 0, %s6, %s4
  // Predicated region
  $region2: #{decoder_forward.26} parent=0 // pred_check
    _
  $region3: #{decoder_forward.26} parent=0 // pred_check_branch
    %9 = sbr.rel (0) target = $region5
  $region4: #{decoder_forward.26} parent=0 // pred_region
    _
  $region5: #{decoder_forward.26} parent=0 // pred_fallthru
    _
  // Predicated region
  $region6: #{decoder_forward.26} parent=0 // pred_check
    _
  $region7: #{decoder_forward.26} parent=0 // pred_check_branch
    %11 = sbr.rel (0) target = $region9
  $region8: #{decoder_forward.26} parent=0 // pred_region
    _
  $region9: #{decoder_forward.26} parent=0 // pred_fallthru
    _
  // Predicated region
  $region10: #{decoder_forward.26} parent=0 // pred_check
    _
  $region11: #{decoder_forward.26} parent=0 // pred_check_branch
    %13 = sbr.rel (0) target = $region13
  $region12: #{decoder_forward.26} parent=0 // pred_region
    _
  $region13: #{decoder_forward.26} parent=0 // pred_fallthru
    _
  %p15 = scmp.eq.s32.totalorder 0, 0
  // Predicated region
  $region14: #{decoder_forward.26} parent=0 // pred_check
    %p16 = pneg %p15
  $region15: #{decoder_forward.26} parent=0 // pred_check_branch
    %18 = sbr.rel (%p16) target = $region17
  $region16: #{decoder_forward.26} parent=0 // pred_region
    %vm19 = vcmask 523264
    %20 = vst.msk [vmem:[#allocation2] sm:$0xff] %vm19, 0.0
    %21 = vst.msk [vmem:[#allocation2 + $0x8] sm:$0xff] %vm19, 0.0
  $region17: #{decoder_forward.26} parent=0 // pred_fallthru
    _
  %v22 = vld [vmem:[#allocation2] sm:$0xff]
  %v23 = vld [vmem:[#allocation2 + $0x8] sm:$0xff]
  %v24 = vld [vmem:[%s0] sm:$0xf]
  %v25 = vld [vmem:[%s0 + $0x4] sm:$0xf]
  %v26 = vld [vmem:[%s1] sm:$0xf]
  %v27 = vld [vmem:[%s1 + $0x4] sm:$0xf]
  %v28 = vld [vmem:[%s1 + $0x8] sm:$0xf]
  %v29 = vld [vmem:[%s1 + $0xc] sm:$0xf]
  %v32 = vunpack.c.l.b16 %v24
  %v33 = vunpack.c.l.b16 %v25
  %v34 = vpack.c.b16 %v33, %v32
  %v39 = vunpack.c.l.b16 %v26
  %v40 = vunpack.c.l.b16 %v27
  %v41 = vunpack.c.l.b16 %v28
  %v42 = vunpack.c.l.b16 %v29
  %v43 = vpack.c.b16 %v40, %v39
  %v44 = vpack.c.b16 %v42, %v41
  %vm47 = vcmask 261120
  %v49 = vsel %vm47, %v34, 0
  %51 = vmatprep.subr.bf16.mxu0 0
  %52 = vmatpush1.bf16.msra.mxu0 0
  %53 = vmatprep.subr.bf16.mxu0 0
  %54 = vmatpush1.bf16.msra.mxu0 0
  %55 = vmatprep.subr.bf16.mxu0 0
  %56 = vmatpush1.bf16.msra.mxu0 0
  %57 = vmatprep.subr.bf16.mxu0 0
  %58 = vmatpush1.bf16.msra.mxu0 0
  %59 = vmatprep.subr.bf16.mxu0 0
  %60 = vmatpush1.bf16.msra.mxu0 0
  %61 = vmatprep.subr.bf16.mxu0 0
  %62 = vmatpush1.bf16.msra.mxu0 0
  %63 = vmatprep.subr.bf16.mxu0 0
  %64 = vmatpush1.bf16.msra.mxu0 %v44
  %65 = vmatprep.subr.bf16.mxu0 0
  %66 = vmatpush1.bf16.msra.mxu0 %v43
  %67 = vmatprep.subr.bf16.mxu0 0
  %68 = vmatpush2.bf16.msra.mxu0 0
  %69 = vmatprep.subr.bf16.mxu0 0
  %70 = vmatpush2.bf16.msra.mxu0 0
  %71 = vmatprep.subr.bf16.mxu0 0
  %72 = vmatpush2.bf16.msra.mxu0 0
  %73 = vmatprep.subr.bf16.mxu0 0
  %74 = vmatpush2.bf16.msra.mxu0 0
  %75 = vmatprep.subr.bf16.mxu0 0
  %76 = vmatpush2.bf16.msra.mxu0 0
  %77 = vmatprep.subr.bf16.mxu0 0
  %78 = vmatpush2.bf16.msra.mxu0 0
  %79 = vmatprep.subr.bf16.mxu0 0
  %80 = vmatpush2.bf16.msra.mxu0 0
  %81 = vmatprep.subr.bf16.mxu0 0
  %82 = vmatpush2.bf16.msra.mxu0 0
  %83 = vmatprep.mubr.bf16.mxu0 0
  %84 = vmatmul.mubr.bf16.gmra.mxu0 %v49
  %v85 = vpop.f32.mrf.mxu0
  %v86 = vadd.f32 0.0, %v85
  %v87 = vpop.f32.mrf.mxu0
  %v88 = vpop.f32.mrf.mxu0
  %v89 = vadd.f32 0.0, %v88
  %v90 = vpop.f32.mrf.mxu0
  %91 = vdwg.mxu0
  %v92 = vadd.f32 %v22, %v86
  %v93 = vadd.f32 %v23, %v89
  %vm94 = vcmask 523264
  %95 = vst.msk [vmem:[#allocation2] sm:$0xff] %vm94, %v92
  %96 = vst.msk [vmem:[#allocation2 + $0x8] sm:$0xff] %vm94, %v93
  // Predicated region
  $region18: #{decoder_forward.26} parent=0 // pred_check
    %p97 = pneg %p15
  $region19: #{decoder_forward.26} parent=0 // pred_check_branch
    %99 = sbr.rel (%p97) target = $region21
  $region20: #{decoder_forward.26} parent=0 // pred_region
    %v100 = vld [vmem:[#allocation2] sm:$0xff]
    %v101 = vld [vmem:[#allocation2 + $0x8] sm:$0xff]
    %v102 = vld [vmem:[%s2] sm:$0x1]
    %v104 = vlaneseq
    %v105 = vshrl.u32 %v104, 7
    %v106 = vsub.s32 0, %v105
    %v107 = vrot.slane %v102, %v106
    %v109 = vadd.f32 %v100, %v107
    %v110 = vadd.f32 %v101, %v107
    %v111 = vmax.f32 %v109, 0.0
    %v112 = vmax.f32 %v110, 0.0
    %v113 = vpack.c.bf16 %v112, %v111
    %v115 = vunpack.c.l.b16 %v113
    %v116 = vunpack.c.h.b16 %v113
    %v117 = vpack.c.b16 %v115, %v115
    %v118 = vpack.c.b16 %v116, %v116
    %vm121 = vcmask 519168
    %122 = vst.msk [vmem:[%s3] sm:$0xf] %vm121, %v117
    %123 = vst.msk [vmem:[%s3 + $0x4] sm:$0xf] %vm121, %v118
  $region21: #{decoder_forward.26} parent=0 // pred_fallthru
    _
  // Predicated region
  $region22: #{decoder_forward.26} parent=0 // pred_check
    _
  $region23: #{decoder_forward.26} parent=0 // pred_check_branch
    %125 = sbr.rel (0) target = $region25
  $region24: #{decoder_forward.26} parent=0 // pred_region
    _
  $region25: #{decoder_forward.26} parent=0 // pred_fallthru
    _
  // Predicated region
  $region26: #{decoder_forward.26} parent=0 // pred_check
    _
  $region27: #{decoder_forward.26} parent=0 // pred_check_branch
    %127 = sbr.rel (0) target = $region29
  $region28: #{decoder_forward.26} parent=0 // pred_region
    _
  $region29: #{decoder_forward.26} parent=0 // pred_fallthru
    _

// kernel: decoder_forward.27
$region0: #{decoder_forward.27}
  #allocation0 [shape = 'u32[]', space=smem, size = 0x4, offset = 0x4, fixed_abs, tag = 'smem constant byte address 0x4 - core index']
  #allocation1 [shape = 'u32[144,128]{1,0:T(1,128)}', space=vmem, size = 0x12000, scoped, tag = 'internal scratch']
  #allocation2 [shape = 'f32[16,32]{1,0:T(8,128)}', space=vmem, size = 0x2000, scoped, tag = 'scratch operand']
  %s0 = inlined_call_operand.vmem [shape: bf16[16,64], index: 0, kind: input, shape index: {}]
  %s1 = inlined_call_operand.vmem [shape: bf16[64,32], index: 1, kind: input, shape index: {}]
  %s2 = inlined_call_operand.vmem [shape: f32[1,32], index: 2, kind: input, shape index: {}]
  %s3 = inlined_call_operand.vmem [shape: bf16[16,32], index: 3, kind: input, shape index: {}]
  %s4 = inlined_call_operand.vmem [shape: f32[1,32], index: 4, kind: input, shape index: {}]
  %s5 = inlined_call_operand.vmem [shape: f32[1,32], index: 5, kind: input, shape index: {}]
  %s6 = inlined_call_operand.vmem [shape: f32[16,1], index: 6, kind: input, shape index: {}]
  %s7 = inlined_call_operand.vmem [shape: bf16[16,32], index: 7, kind: output, shape index: {}]
  %s8 = sld [smem:[#allocation0]]
  $region46: #{decoder_forward.27} parent=0
    _
  %s10 = ssub.s32 1, %s8
  %s11 = scalar_select 0, %s10, %s8
  // Predicated region
  $region2: #{decoder_forward.27} parent=0 // pred_check
    _
  $region3: #{decoder_forward.27} parent=0 // pred_check_branch
    %13 = sbr.rel (0) target = $region5
  $region4: #{decoder_forward.27} parent=0 // pred_region
    _
  $region5: #{decoder_forward.27} parent=0 // pred_fallthru
    _
  // Predicated region
  $region6: #{decoder_forward.27} parent=0 // pred_check
    _
  $region7: #{decoder_forward.27} parent=0 // pred_check_branch
    %15 = sbr.rel (0) target = $region9
  $region8: #{decoder_forward.27} parent=0 // pred_region
    _
  $region9: #{decoder_forward.27} parent=0 // pred_fallthru
    _
  // Predicated region
  $region10: #{decoder_forward.27} parent=0 // pred_check
    _
  $region11: #{decoder_forward.27} parent=0 // pred_check_branch
    %17 = sbr.rel (0) target = $region13
  $region12: #{decoder_forward.27} parent=0 // pred_region
    _
  $region13: #{decoder_forward.27} parent=0 // pred_fallthru
    _
  // Predicated region
  $region14: #{decoder_forward.27} parent=0 // pred_check
    _
  $region15: #{decoder_forward.27} parent=0 // pred_check_branch
    %19 = sbr.rel (0) target = $region17
  $region16: #{decoder_forward.27} parent=0 // pred_region
    _
  $region17: #{decoder_forward.27} parent=0 // pred_fallthru
    _
  // Predicated region
  $region18: #{decoder_forward.27} parent=0 // pred_check
    _
  $region19: #{decoder_forward.27} parent=0 // pred_check_branch
    %21 = sbr.rel (0) target = $region21
  $region20: #{decoder_forward.27} parent=0 // pred_region
    _
  $region21: #{decoder_forward.27} parent=0 // pred_fallthru
    _
  // Predicated region
  $region22: #{decoder_forward.27} parent=0 // pred_check
    _
  $region23: #{decoder_forward.27} parent=0 // pred_check_branch
    %23 = sbr.rel (0) target = $region25
  $region24: #{decoder_forward.27} parent=0 // pred_region
    _
  $region25: #{decoder_forward.27} parent=0 // pred_fallthru
    _
  // Predicated region
  $region26: #{decoder_forward.27} parent=0 // pred_check
    _
  $region27: #{decoder_forward.27} parent=0 // pred_check_branch
    %25 = sbr.rel (0) target = $region29
  $region28: #{decoder_forward.27} parent=0 // pred_region
    _
  $region29: #{decoder_forward.27} parent=0 // pred_fallthru
    _
  %p27 = scmp.eq.s32.totalorder 0, 0
  // Predicated region
  $region30: #{decoder_forward.27} parent=0 // pred_check
    %p28 = pneg %p27
  $region31: #{decoder_forward.27} parent=0 // pred_check_branch
    %30 = sbr.rel (%p28) target = $region33
  $region32: #{decoder_forward.27} parent=0 // pred_region
    %vm31 = vcmask 261120
    %32 = vst.msk [vmem:[#allocation2] sm:$0xff] %vm31, 0.0
    %33 = vst.msk [vmem:[#allocation2 + $0x8] sm:$0xff] %vm31, 0.0
  $region33: #{decoder_forward.27} parent=0 // pred_fallthru
    _
  %v34 = vld [vmem:[#allocation2] sm:$0xff]
  %v35 = vld [vmem:[#allocation2 + $0x8] sm:$0xff]
  %v36 = vld [vmem:[%s0] sm:$0xf]
  %v37 = vld [vmem:[%s0 + $0x4] sm:$0xf]
  %v38 = vld [vmem:[%s1] sm:$0xf]
  %v39 = vld [vmem:[%s1 + $0x4] sm:$0xf]
  %v40 = vld [vmem:[%s1 + $0x8] sm:$0xf]
  %v41 = vld [vmem:[%s1 + $0xc] sm:$0xf]
  %v42 = vld [vmem:[%s1 + $0x10] sm:$0xf]
  %v43 = vld [vmem:[%s1 + $0x14] sm:$0xf]
  %v44 = vld [vmem:[%s1 + $0x18] sm:$0xf]
  %v45 = vld [vmem:[%s1 + $0x1c] sm:$0xf]
  %v48 = vunpack.c.l.b16 %v36
  %v49 = vunpack.c.l.b16 %v37
  %v50 = vpack.c.b16 %v49, %v48
  %v59 = vunpack.c.l.b16 %v38
  %v60 = vunpack.c.l.b16 %v39
  %v61 = vunpack.c.l.b16 %v40
  %v62 = vunpack.c.l.b16 %v41
  %v63 = vunpack.c.l.b16 %v42
  %v64 = vunpack.c.l.b16 %v43
  %v65 = vunpack.c.l.b16 %v44
  %v66 = vunpack.c.l.b16 %v45
  %v67 = vpack.c.b16 %v60, %v59
  %v68 = vpack.c.b16 %v62, %v61
  %v69 = vpack.c.b16 %v64, %v63
  %v70 = vpack.c.b16 %v66, %v65
  %vm75 = vcmask 523264
  %v77 = vsel %vm75, %v50, 0
  %79 = vmatprep.subr.bf16.mxu0 0
  %80 = vmatpush1.bf16.msra.mxu0 0
  %81 = vmatprep.subr.bf16.mxu0 0
  %82 = vmatpush1.bf16.msra.mxu0 0
  %83 = vmatprep.subr.bf16.mxu0 0
  %84 = vmatpush1.bf16.msra.mxu0 0
  %85 = vmatprep.subr.bf16.mxu0 0
  %86 = vmatpush1.bf16.msra.mxu0 0
  %87 = vmatprep.subr.bf16.mxu0 0
  %88 = vmatpush1.bf16.msra.mxu0 %v70
  %89 = vmatprep.subr.bf16.mxu0 0
  %90 = vmatpush1.bf16.msra.mxu0 %v69
  %91 = vmatprep.subr.bf16.mxu0 0
  %92 = vmatpush1.bf16.msra.mxu0 %v68
  %93 = vmatprep.subr.bf16.mxu0 0
  %94 = vmatpush1.bf16.msra.mxu0 %v67
  %95 = vmatprep.subr.bf16.mxu0 0
  %96 = vmatpush2.bf16.msra.mxu0 0
  %97 = vmatprep.subr.bf16.mxu0 0
  %98 = vmatpush2.bf16.msra.mxu0 0
  %99 = vmatprep.subr.bf16.mxu0 0
  %100 = vmatpush2.bf16.msra.mxu0 0
  %101 = vmatprep.subr.bf16.mxu0 0
  %102 = vmatpush2.bf16.msra.mxu0 0
  %103 = vmatprep.subr.bf16.mxu0 0
  %104 = vmatpush2.bf16.msra.mxu0 0
  %105 = vmatprep.subr.bf16.mxu0 0
  %106 = vmatpush2.bf16.msra.mxu0 0
  %107 = vmatprep.subr.bf16.mxu0 0
  %108 = vmatpush2.bf16.msra.mxu0 0
  %109 = vmatprep.subr.bf16.mxu0 0
  %110 = vmatpush2.bf16.msra.mxu0 0
  %111 = vmatprep.mubr.bf16.mxu0 0
  %112 = vmatmul.mubr.bf16.gmra.mxu0 %v77
  %v113 = vpop.f32.mrf.mxu0
  %v114 = vadd.f32 0.0, %v113
  %v115 = vpop.f32.mrf.mxu0
  %v116 = vpop.f32.mrf.mxu0
  %v117 = vadd.f32 0.0, %v116
  %v118 = vpop.f32.mrf.mxu0
  %119 = vdwg.mxu0
  %v120 = vadd.f32 %v34, %v114
  %v121 = vadd.f32 %v35, %v117
  %vm122 = vcmask 261120
  %123 = vst.msk [vmem:[#allocation2] sm:$0xff] %vm122, %v120
  %124 = vst.msk [vmem:[#allocation2 + $0x8] sm:$0xff] %vm122, %v121
  // Predicated region
  $region34: #{decoder_forward.27} parent=0 // pred_check
    %p125 = pneg %p27
  $region35: #{decoder_forward.27} parent=0 // pred_check_branch
    %127 = sbr.rel (%p125) target = $region37
  $region36: #{decoder_forward.27} parent=0 // pred_region
    %v128 = vld [vmem:[#allocation2] sm:$0xff]
    %v129 = vld [vmem:[#allocation2 + $0x8] sm:$0xff]
    %v130 = vld [vmem:[%s2] sm:$0x1]
    %v132 = vlaneseq
    %v133 = vshrl.u32 %v132, 7
    %v134 = vsub.s32 0, %v133
    %v135 = vrot.slane %v130, %v134
    %v137 = vadd.f32 %v128, %v135
    %v138 = vadd.f32 %v129, %v135
    %v139 = vld [vmem:[%s3] sm:$0xf]
    %v140 = vld [vmem:[%s3 + $0x4] sm:$0xf]
    %v141 = vunpack.c.l.bf16 %v139
    %v142 = vunpack.c.l.bf16 %v140
    %v143 = vadd.f32 %v137, %v141
    %v144 = vadd.f32 %v138, %v142
    %v145 = vsel %vm122, %v143, 0.0
    %146 = vadd.xlane.f32.xlu0 %v145
    %v147 = vpop.xlane.xlu0 %146
    %v148 = vsel %vm122, %v144, 0.0
    %149 = vadd.xlane.f32.xlu0 %v148
    %v150 = vpop.xlane.xlu0 %149
    %v151 = vrcp.pop 32.0
    %v152 = vmul.f32 %v147, %v151
    %v153 = vmul.f32 %v150, %v151
    %v154 = vsub.f32 %v143, %v152
    %v155 = vsub.f32 %v144, %v153
    %v156 = vmul.f32 %v154, %v154
    %v157 = vmul.f32 %v155, %v155
    %v158 = vsel %vm122, %v156, 0.0
    %159 = vadd.xlane.f32.xlu0 %v158
    %v160 = vpop.xlane.xlu0 %159
    %v161 = vsel %vm122, %v157, 0.0
    %162 = vadd.xlane.f32.xlu0 %v161
    %v163 = vpop.xlane.xlu0 %162
    %v164 = vmul.f32 %v160, %v151
    %v165 = vmul.f32 %v163, %v151
    %v166 = vadd.f32 %v164, 1e-05
    %v167 = vadd.f32 %v165, 1e-05
    %v168 = vrsqrt.pop %v166
    %v169 = vrsqrt.pop %v167
    %v170 = vmul.f32 %v154, %v168
    %v171 = vmul.f32 %v155, %v169
    %v172 = vld [vmem:[%s4] sm:$0x1]
    %v174 = vlaneseq
    %v175 = vshrl.u32 %v174, 7
    %v176 = vsub.s32 0, %v175
    %v177 = vrot.slane %v172, %v176
    %v179 = vmul.f32 %v170, %v177
    %v180 = vmul.f32 %v171, %v177
    %v181 = vld [vmem:[%s5] sm:$0x1]
    %v183 = vlaneseq
    %v184 = vshrl.u32 %v183, 7
    %v185 = vsub.s32 0, %v184
    %v186 = vrot.slane %v181, %v185
    %v188 = vadd.f32 %v179, %v186
    %v189 = vadd.f32 %v180, %v186
    %v190 = vld [vmem:[%s6] sm:$0xff]
    %v191 = vld [vmem:[%s6 + $0x8] sm:$0xff]
    %193 = vset.pattern.permute.xlu0 0
    %194 = vperm.xlu0 %193, %v190
    %v195 = vpop.permute.xlu0 %194
    %198 = vset.pattern.permute.xlu0 0
    %199 = vperm.xlu0 %198, %v191
    %v200 = vpop.permute.xlu0 %199
    %v202 = vmul.f32 %v188, %v195
    %v203 = vmul.f32 %v189, %v200
    %v204 = vpack.c.bf16 %v203, %v202
    %v206 = vunpack.c.l.b16 %v204
    %v207 = vunpack.c.h.b16 %v204
    %v208 = vpack.c.b16 %v206, %v206
    %v209 = vpack.c.b16 %v207, %v207
    %vm212 = vcmask 257024
    %213 = vst.msk [vmem:[%s7] sm:$0xf] %vm212, %v208
    %214 = vst.msk [vmem:[%s7 + $0x4] sm:$0xf] %vm212, %v209
  $region37: #{decoder_forward.27} parent=0 // pred_fallthru
    _
  // Predicated region
  $region38: #{decoder_forward.27} parent=0 // pred_check
    _
  $region39: #{decoder_forward.27} parent=0 // pred_check_branch
    %216 = sbr.rel (0) target = $region41
  $region40: #{decoder_forward.27} parent=0 // pred_region
    _
  $region41: #{decoder_forward.27} parent=0 // pred_fallthru
    _
  // Predicated region
  $region42: #{decoder_forward.27} parent=0 // pred_check
    _
  $region43: #{decoder_forward.27} parent=0 // pred_check_branch
    %218 = sbr.rel (0) target = $region45
  $region44: #{decoder_forward.27} parent=0 // pred_region
    _
  $region45: #{decoder_forward.27} parent=0 // pred_fallthru
    _

// kernel: decoder_forward.37
$region0: #{decoder_forward.37}
  #allocation0 [shape = 'u32[]', space=smem, size = 0x4, offset = 0x4, fixed_abs, tag = 'smem constant byte address 0x4 - core index']
  #allocation1 [shape = 'u32[144,128]{1,0:T(1,128)}', space=vmem, size = 0x12000, scoped, tag = 'internal scratch']
  #allocation2 [shape = 'f32[16,40]{1,0:T(8,128)}', space=vmem, size = 0x2000, scoped, tag = 'scratch operand']
  %s0 = inlined_call_operand.vmem [shape: bf16[16,32], index: 0, kind: input, shape index: {}]
  %s1 = inlined_call_operand.vmem [shape: bf16[32,40], index: 1, kind: input, shape index: {}]
  %s2 = inlined_call_operand.vmem [shape: f32[1,40], index: 2, kind: input, shape index: {}]
  %s3 = inlined_call_operand.hbm [shape: f32[16,40], index: 3, kind: output, shape index: {}]
  %s4 = sld [smem:[#allocation0]]
  $region30: #{decoder_forward.37} parent=0
    _
  %s6 = ssub.s32 1, %s4
  %s7 = scalar_select 0, %s6, %s4
  $region1: #{decoder_forward.37} parent=0
    #allocation3 [shape = 'u8[8192]{0}', space=vmem, size = 0x2000, scoped, tag = 'output window, operand 0, single buffered']
    #allocation4 [shape = 's32[1]{0}', space=sflag, size = 0x4, scoped, tag = 'scoped memory for decoder_forward.37']
    %8 = vsyncpa [#allocation4], 0
    // Predicated region
    $region2: #{decoder_forward.37} parent=1 // pred_check
      _
    $region3: #{decoder_forward.37} parent=1 // pred_check_branch
      %10 = sbr.rel (0) target = $region5
    $region4: #{decoder_forward.37} parent=1 // pred_region
      _
    $region5: #{decoder_forward.37} parent=1 // pred_fallthru
      _
    // Predicated region
    $region6: #{decoder_forward.37} parent=1 // pred_check
      _
    $region7: #{decoder_forward.37} parent=1 // pred_check_branch
      %12 = sbr.rel (0) target = $region9
    $region8: #{decoder_forward.37} parent=1 // pred_region
      _
    $region9: #{decoder_forward.37} parent=1 // pred_fallthru
      _
    // Predicated region
    $region10: #{decoder_forward.37} parent=1 // pred_check
      _
    $region11: #{decoder_forward.37} parent=1 // pred_check_branch
      %14 = sbr.rel (0) target = $region13
    $region12: #{decoder_forward.37} parent=1 // pred_region
      _
    $region13: #{decoder_forward.37} parent=1 // pred_fallthru
      _
    %p16 = scmp.eq.s32.totalorder 0, 0
    // Predicated region
    $region14: #{decoder_forward.37} parent=1 // pred_check
      %p17 = pneg %p16
    $region15: #{decoder_forward.37} parent=1 // pred_check_branch
      %19 = sbr.rel (%p17) target = $region17
    $region16: #{decoder_forward.37} parent=1 // pred_region
      %vm20 = vcmask 326656
      %21 = vst.msk [vmem:[#allocation2] sm:$0xff] %vm20, 0.0
      %22 = vst.msk [vmem:[#allocation2 + $0x8] sm:$0xff] %vm20, 0.0
    $region17: #{decoder_forward.37} parent=1 // pred_fallthru
      _
    %v23 = vld [vmem:[#allocation2] sm:$0xff]
    %v24 = vld [vmem:[#allocation2 + $0x8] sm:$0xff]
    %v25 = vld [vmem:[%s0] sm:$0xf]
    %v26 = vld [vmem:[%s0 + $0x4] sm:$0xf]
    %v27 = vld [vmem:[%s1] sm:$0xf]
    %v28 = vld [vmem:[%s1 + $0x4] sm:$0xf]
    %v29 = vld [vmem:[%s1 + $0x8] sm:$0xf]
    %v30 = vld [vmem:[%s1 + $0xc] sm:$0xf]
    %v33 = vunpack.c.l.b16 %v25
    %v34 = vunpack.c.l.b16 %v26
    %v35 = vpack.c.b16 %v34, %v33
    %v40 = vunpack.c.l.b16 %v27
    %v41 = vunpack.c.l.b16 %v28
    %v42 = vunpack.c.l.b16 %v29
    %v43 = vunpack.c.l.b16 %v30
    %v44 = vpack.c.b16 %v41, %v40
    %v45 = vpack.c.b16 %v43, %v42
    %vm48 = vcmask 261120
    %v50 = vsel %vm48, %v35, 0
    %52 = vmatprep.subr.bf16.mxu0 0
    %53 = vmatpush1.bf16.msra.mxu0 0
    %54 = vmatprep.subr.bf16.mxu0 0
    %55 = vmatpush1.bf16.msra.mxu0 0
    %56 = vmatprep.subr.bf16.mxu0 0
    %57 = vmatpush1.bf16.msra.mxu0 0
    %58 = vmatprep.subr.bf16.mxu0 0
    %59 = vmatpush1.bf16.msra.mxu0 0
    %60 = vmatprep.subr.bf16.mxu0 0
    %61 = vmatpush1.bf16.msra.mxu0 0
    %62 = vmatprep.subr.bf16.mxu0 0
    %63 = vmatpush1.bf16.msra.mxu0 0
    %64 = vmatprep.subr.bf16.mxu0 0
    %65 = vmatpush1.bf16.msra.mxu0 %v45
    %66 = vmatprep.subr.bf16.mxu0 0
    %67 = vmatpush1.bf16.msra.mxu0 %v44
    %68 = vmatprep.subr.bf16.mxu0 0
    %69 = vmatpush2.bf16.msra.mxu0 0
    %70 = vmatprep.subr.bf16.mxu0 0
    %71 = vmatpush2.bf16.msra.mxu0 0
    %72 = vmatprep.subr.bf16.mxu0 0
    %73 = vmatpush2.bf16.msra.mxu0 0
    %74 = vmatprep.subr.bf16.mxu0 0
    %75 = vmatpush2.bf16.msra.mxu0 0
    %76 = vmatprep.subr.bf16.mxu0 0
    %77 = vmatpush2.bf16.msra.mxu0 0
    %78 = vmatprep.subr.bf16.mxu0 0
    %79 = vmatpush2.bf16.msra.mxu0 0
    %80 = vmatprep.subr.bf16.mxu0 0
    %81 = vmatpush2.bf16.msra.mxu0 0
    %82 = vmatprep.subr.bf16.mxu0 0
    %83 = vmatpush2.bf16.msra.mxu0 0
    %84 = vmatprep.mubr.bf16.mxu0 0
    %85 = vmatmul.mubr.bf16.gmra.mxu0 %v50
    %v86 = vpop.f32.mrf.mxu0
    %v87 = vadd.f32 0.0, %v86
    %v88 = vpop.f32.mrf.mxu0
    %v89 = vpop.f32.mrf.mxu0
    %v90 = vadd.f32 0.0, %v89
    %v91 = vpop.f32.mrf.mxu0
    %92 = vdwg.mxu0
    %v93 = vadd.f32 %v23, %v87
    %v94 = vadd.f32 %v24, %v90
    %vm95 = vcmask 326656
    %96 = vst.msk [vmem:[#allocation2] sm:$0xff] %vm95, %v93
    %97 = vst.msk [vmem:[#allocation2 + $0x8] sm:$0xff] %vm95, %v94
    // Predicated region
    $region18: #{decoder_forward.37} parent=1 // pred_check
      %p98 = pneg %p16
    $region19: #{decoder_forward.37} parent=1 // pred_check_branch
      %100 = sbr.rel (%p98) target = $region21
    $region20: #{decoder_forward.37} parent=1 // pred_region
      %v101 = vld [vmem:[#allocation2] sm:$0xff]
      %v102 = vld [vmem:[#allocation2 + $0x8] sm:$0xff]
      %v103 = vld [vmem:[%s2] sm:$0x1]
      %v105 = vlaneseq
      %v106 = vshrl.u32 %v105, 7
      %v107 = vsub.s32 0, %v106
      %v108 = vrot.slane %v103, %v107
      %v110 = vadd.f32 %v101, %v108
      %v111 = vadd.f32 %v102, %v108
      %112 = vst.msk [vmem:[#allocation3] sm:$0xff] %vm95, %v110
      %113 = vst.msk [vmem:[#allocation3 + $0x8] sm:$0xff] %vm95, %v111
    $region21: #{decoder_forward.37} parent=1 // pred_fallthru
      _
    // Predicated region
    $region22: #{decoder_forward.37} parent=1 // pred_check
      _
    $region23: #{decoder_forward.37} parent=1 // pred_check_branch
      %115 = sbr.rel (0) target = $region25
    $region24: #{decoder_forward.37} parent=1 // pred_region
      %s117 = ssub.s32 256, 256
      %118 = vsyncadd [#allocation4], %s117
      %s119 = sshll.u32 [#allocation3], 4
      %s120 = int_to_ptr.vmem [resolvable:$true] %s119
      %125 = dma.vmem_to_hbm [thread:$0]  %s120, 256, %s3, [#allocation4], 128, 128, 8
    $region25: #{decoder_forward.37} parent=1 // pred_fallthru
      _
    // Predicated region
    $region26: #{decoder_forward.37} parent=1 // pred_check
      _
    $region27: #{decoder_forward.37} parent=1 // pred_check_branch
      %127 = sbr.rel (0) target = $region29
    $region28: #{decoder_forward.37} parent=1 // pred_region
      %128 = dma.done [#allocation4], 256
    $region29: #{decoder_forward.37} parent=1 // pred_fallthru
      _
    %129 = vsyncpa [#allocation4], 1

// kernel: decoder_forward.24
$region0: #{decoder_forward.24}
  #allocation0 [shape = 'u32[]', space=smem, size = 0x4, offset = 0x4, fixed_abs, tag = 'smem constant byte address 0x4 - core index']
  #allocation1 [shape = 'u32[144,128]{1,0:T(1,128)}', space=vmem, size = 0x12000, scoped, tag = 'internal scratch']
  %s0 = inlined_call_operand.vmem [shape: bf16[2,8,32], index: 0, kind: input, shape index: {}]
  %s1 = inlined_call_operand.vmem [shape: bf16[2,16,32], index: 1, kind: input, shape index: {}]
  %s2 = inlined_call_operand.vmem [shape: bf16[2,16,32], index: 2, kind: input, shape index: {}]
  %s3 = inlined_call_operand.vmem [shape: f32[2,8,16], index: 3, kind: input, shape index: {}]
  %s4 = inlined_call_operand.vmem [shape: bf16[2,8,32], index: 4, kind: output, shape index: {}]
  %s5 = sld [smem:[#allocation0]]
  $region49: #{decoder_forward.24} parent=0
    _
  %s7 = ssub.s32 1, %s5
  %s8 = scalar_select 0, %s7, %s5
  loop: start=0, step=1, limit=4
  $region2: #{decoder_forward.24} parent=0 // loop_pre_header
    _
  $region3: #{decoder_forward.24} parent=0 // loop_header
    %s10 = sphi 0, %s14
    %p11 = scmp.ge.s32.totalorder %s10, 4
    %s17 = sphi 0, %s29
    %s18 = sphi 0, %s25
    %s19 = sphi 0, %s17
    %s20 = sphi 0, %s18
    %s21 = sphi 0, %s19
    %s22 = sphi 0, %s20
    %s34 = sphi 0, %s36
    %s37 = sphi 0, %s34
    %s38 = sphi 0, %s37
    %s54 = sphi 0, %s38
    %s60 = sphi 0, %s62
    %s63 = sphi 0, %s60
    %s64 = sphi 0, %s63
    %s80 = sphi 0, %s64
    %s86 = sphi 0, %s88
    %s89 = sphi 0, %s86
    %s90 = sphi 0, %s89
    %s106 = sphi 0, %s90
    %s114 = sphi 0, %s116
    %s117 = sphi 0, %s114
    %s118 = sphi 0, %s117
    %s134 = sphi 0, %s118
    %s142 = sphi 0, %s144
    %s145 = sphi 0, %s142
    %s146 = sphi 0, %s145
    %s162 = sphi 0, %s146
  $region4: #{decoder_forward.24} parent=0 // loop_header_branch
    %13 = sbr.rel (%p11) target = $region8
  $region5: #{decoder_forward.24} parent=0 // loop_body
    %s15 = ssub.s32 %s10, 1
    %s16 = ssub.s32 %s10, 2
    %s23 = sadd.s32 1, %s18
    %p24 = scmp.ge.s32.totalorder %s23, 1
    %s25 = scalar_select %p24, 0, %s23
    %s26 = sadd.s32 1, %s17
    %s27 = scalar_select %p24, %s26, %s17
    %p28 = scmp.ge.s32.totalorder %s27, 2
    %s29 = scalar_select %p28, 0, %s27
    %s30 = ssub.s32 %s17, %s29
    %s31 = ssub.s32 %s18, %s25
    %s32 = sor.u32 %s30, %s31
    %p33 = scmp.eq.s32.totalorder %s32, 0
    %s35 = sadd.s32 %s34, 1
    %s36 = scalar_select %p33, %s34, %s35
    %p39 = pneg %p33
    %p40 = scmp.eq.s32.totalorder %s10, 1
    %p41 = por %p39, %p40
    %p42 = scmp.ne.s32.totalorder %s34, %s37
    %p43 = scmp.eq.s32.totalorder %s10, 0
    %p44 = por %p42, %p43
    %p45 = scmp.ne.s32.totalorder %s34, %s37
    %p46 = scmp.eq.s32.totalorder %s15, 1
    %p47 = por %p45, %p46
    %p48 = scmp.ne.s32.totalorder %s37, %s38
    %p49 = scmp.eq.s32.totalorder %s15, 0
    %p50 = por %p48, %p49
    %p51 = scmp.ne.s32.totalorder %s37, %s38
    %p52 = scmp.eq.s32.totalorder %s16, 1
    %p53 = por %p51, %p52
    %p55 = scmp.ne.s32.totalorder %s38, %s54
    %p56 = scmp.eq.s32.totalorder %s16, 0
    %p57 = por %p55, %p56
    %s58 = ssub.s32 %s17, %s29
    %p59 = scmp.eq.s32.totalorder %s58, 0
    %s61 = sadd.s32 %s60, 1
    %s62 = scalar_select %p59, %s60, %s61
    %p65 = pneg %p59
    %p66 = scmp.eq.s32.totalorder %s10, 1
    %p67 = por %p65, %p66
    %p68 = scmp.ne.s32.totalorder %s60, %s63
    %p69 = scmp.eq.s32.totalorder %s10, 0
    %p70 = por %p68, %p69
    %p71 = scmp.ne.s32.totalorder %s60, %s63
    %p72 = scmp.eq.s32.totalorder %s15, 1
    %p73 = por %p71, %p72
    %p74 = scmp.ne.s32.totalorder %s63, %s64
    %p75 = scmp.eq.s32.totalorder %s15, 0
    %p76 = por %p74, %p75
    %p77 = scmp.ne.s32.totalorder %s63, %s64
    %p78 = scmp.eq.s32.totalorder %s16, 1
    %p79 = por %p77, %p78
    %p81 = scmp.ne.s32.totalorder %s64, %s80
    %p82 = scmp.eq.s32.totalorder %s16, 0
    %p83 = por %p81, %p82
    %s84 = ssub.s32 %s17, %s29
    %p85 = scmp.eq.s32.totalorder %s84, 0
    %s87 = sadd.s32 %s86, 1
    %s88 = scalar_select %p85, %s86, %s87
    %p91 = pneg %p85
    %p92 = scmp.eq.s32.totalorder %s10, 1
    %p93 = por %p91, %p92
    %p94 = scmp.ne.s32.totalorder %s86, %s89
    %p95 = scmp.eq.s32.totalorder %s10, 0
    %p96 = por %p94, %p95
    %p97 = scmp.ne.s32.totalorder %s86, %s89
    %p98 = scmp.eq.s32.totalorder %s15, 1
    %p99 = por %p97, %p98
    %p100 = scmp.ne.s32.totalorder %s89, %s90
    %p101 = scmp.eq.s32.totalorder %s15, 0
    %p102 = por %p100, %p101
    %p103 = scmp.ne.s32.totalorder %s89, %s90
    %p104 = scmp.eq.s32.totalorder %s16, 1
    %p105 = por %p103, %p104
    %p107 = scmp.ne.s32.totalorder %s90, %s106
    %p108 = scmp.eq.s32.totalorder %s16, 0
    %p109 = por %p107, %p108
    %s110 = ssub.s32 %s17, %s29
    %s111 = ssub.s32 %s18, %s25
    %s112 = sor.u32 %s110, %s111
    %p113 = scmp.eq.s32.totalorder %s112, 0
    %s115 = sadd.s32 %s114, 1
    %s116 = scalar_select %p113, %s114, %s115
    %p119 = pneg %p113
    %p120 = scmp.eq.s32.totalorder %s10, 1
    %p121 = por %p119, %p120
    %p122 = scmp.ne.s32.totalorder %s114, %s117
    %p123 = scmp.eq.s32.totalorder %s10, 0
    %p124 = por %p122, %p123
    %p125 = scmp.ne.s32.totalorder %s114, %s117
    %p126 = scmp.eq.s32.totalorder %s15, 1
    %p127 = por %p125, %p126
    %p128 = scmp.ne.s32.totalorder %s117, %s118
    %p129 = scmp.eq.s32.totalorder %s15, 0
    %p130 = por %p128, %p129
    %p131 = scmp.ne.s32.totalorder %s117, %s118
    %p132 = scmp.eq.s32.totalorder %s16, 1
    %p133 = por %p131, %p132
    %p135 = scmp.ne.s32.totalorder %s118, %s134
    %p136 = scmp.eq.s32.totalorder %s16, 0
    %p137 = por %p135, %p136
    %s138 = ssub.s32 %s17, %s29
    %s139 = ssub.s32 %s18, %s25
    %s140 = sor.u32 %s138, %s139
    %p141 = scmp.eq.s32.totalorder %s140, 0
    %s143 = sadd.s32 %s142, 1
    %s144 = scalar_select %p141, %s142, %s143
    %p147 = pneg %p141
    %p148 = scmp.eq.s32.totalorder %s10, 1
    %p149 = por %p147, %p148
    %p150 = scmp.ne.s32.totalorder %s142, %s145
    %p151 = scmp.eq.s32.totalorder %s10, 0
    %p152 = por %p150, %p151
    %p153 = scmp.ne.s32.totalorder %s142, %s145
    %p154 = scmp.eq.s32.totalorder %s15, 1
    %p155 = por %p153, %p154
    %p156 = scmp.ne.s32.totalorder %s145, %s146
    %p157 = scmp.eq.s32.totalorder %s15, 0
    %p158 = por %p156, %p157
    %p159 = scmp.ne.s32.totalorder %s145, %s146
    %p160 = scmp.eq.s32.totalorder %s16, 1
    %p161 = por %p159, %p160
    %p163 = scmp.ne.s32.totalorder %s146, %s162
    %p164 = scmp.eq.s32.totalorder %s16, 0
    %p165 = por %p163, %p164
    %p166 = scmp.le.s32.totalorder 1, %s10
    %p167 = scmp.lt.s32.totalorder %s10, 3
    %p168 = pnand %p166, %p167
    %p169 = pneg %p168
    // Predicated region
    $region9: #{decoder_forward.24} parent=5 // pred_check
      _
    $region10: #{decoder_forward.24} parent=5 // pred_check_branch
      %171 = sbr.rel (%p168) target = $region12
    $region11: #{decoder_forward.24} parent=5 // pred_region
      %s172 = ssub.s32 %s10, 1
    $region12: #{decoder_forward.24} parent=5 // pred_fallthru
      _
    %p173 = scmp.lt.s32.totalorder %s10, 2
    // Predicated region
    $region13: #{decoder_forward.24} parent=5 // pred_check
      %p174 = pneg %p173
    $region14: #{decoder_forward.24} parent=5 // pred_check_branch
      %176 = sbr.rel (%p174) target = $region16
    $region15: #{decoder_forward.24} parent=5 // pred_region
      // Predicated region
      $region17: #{decoder_forward.24} parent=15 // pred_check
        %p177 = pneg %p44
      $region18: #{decoder_forward.24} parent=15 // pred_check_branch
        %179 = sbr.rel (%p177) target = $region20
      $region19: #{decoder_forward.24} parent=15 // pred_region
        %p180 = scmp.lt.s32.totalorder %s17, 1
        %s181 = scalar_select %p180, %s17, 1
        %p182 = scmp.lt.s32.totalorder %s18, 0
        %s183 = scalar_select %p182, %s18, 0
        %s184 = sadd.s32 %s183, %s181
        %s185 = smul.addr %s184, 4
        %s186 = scalar_lea.vmem %s0, %s185
      $region20: #{decoder_forward.24} parent=15 // pred_fallthru
        _
      // Predicated region
      $region21: #{decoder_forward.24} parent=15 // pred_check
        %p187 = pneg %p70
      $region22: #{decoder_forward.24} parent=15 // pred_check_branch
        %189 = sbr.rel (%p187) target = $region24
      $region23: #{decoder_forward.24} parent=15 // pred_region
        %p190 = scmp.lt.s32.totalorder %s17, 1
        %s191 = scalar_select %p190, %s17, 1
        %s192 = smul.addr %s191, 2
        %s193 = smul.addr %s192, 4
        %s194 = scalar_lea.vmem %s1, %s193
      $region24: #{decoder_forward.24} parent=15 // pred_fallthru
        _
      // Predicated region
      $region25: #{decoder_forward.24} parent=15 // pred_check
        %p195 = pneg %p96
      $region26: #{decoder_forward.24} parent=15 // pred_check_branch
        %197 = sbr.rel (%p195) target = $region28
      $region27: #{decoder_forward.24} parent=15 // pred_region
        %p198 = scmp.lt.s32.totalorder %s17, 1
        %s199 = scalar_select %p198, %s17, 1
        %s200 = smul.addr %s199, 2
        %s201 = smul.addr %s200, 4
        %s202 = scalar_lea.vmem %s2, %s201
      $region28: #{decoder_forward.24} parent=15 // pred_fallthru
        _
      // Predicated region
      $region29: #{decoder_forward.24} parent=15 // pred_check
        %p203 = pneg %p124
      $region30: #{decoder_forward.24} parent=15 // pred_check_branch
        %205 = sbr.rel (%p203) target = $region32
      $region31: #{decoder_forward.24} parent=15 // pred_region
        %p206 = scmp.lt.s32.totalorder %s17, 1
        %s207 = scalar_select %p206, %s17, 1
        %p208 = scmp.lt.s32.totalorder %s18, 0
        %s209 = scalar_select %p208, %s18, 0
        %s210 = sadd.s32 %s209, %s207
        %s211 = smul.addr %s210, 8
        %s212 = scalar_lea.vmem %s3, %s211
      $region32: #{decoder_forward.24} parent=15 // pred_fallthru
        _
    $region16: #{decoder_forward.24} parent=5 // pred_fallthru
      _
    %p213 = scmp.le.s32.totalorder 1, %s10
    %p214 = scmp.lt.s32.totalorder %s10, 3
    %p215 = pnand %p213, %p214
    %p216 = pneg %p215
    // Predicated region
    $region33: #{decoder_forward.24} parent=5 // pred_check
      _
    $region34: #{decoder_forward.24} parent=5 // pred_check_branch
      %218 = sbr.rel (%p215) target = $region36
    $region35: #{decoder_forward.24} parent=5 // pred_region
      %s219 = ssub.s32 %s10, 1
      %p220 = scmp.lt.s32.totalorder %s19, 1
      %s221 = scalar_select %p220, %s19, 1
      %p222 = scmp.lt.s32.totalorder %s20, 0
      %s223 = scalar_select %p222, %s20, 0
      %s224 = sadd.s32 %s223, %s221
      %s225 = smul.addr %s224, 4
      %s226 = scalar_lea.vmem %s0, %s225
      %p227 = pneg %p50
      %p228 = pneg %p47
      %p229 = scmp.lt.s32.totalorder %s19, 1
      %s230 = scalar_select %p229, %s19, 1
      %s231 = smul.addr %s230, 2
      %s232 = smul.addr %s231, 4
      %s233 = scalar_lea.vmem %s1, %s232
      %p234 = pneg %p76
      %p235 = pneg %p73
      %p236 = scmp.lt.s32.totalorder %s19, 1
      %s237 = scalar_select %p236, %s19, 1
      %s238 = smul.addr %s237, 2
      %s239 = smul.addr %s238, 4
      %s240 = scalar_lea.vmem %s2, %s239
      %p241 = pneg %p102
      %p242 = pneg %p99
      %p243 = scmp.lt.s32.totalorder %s19, 1
      %s244 = scalar_select %p243, %s19, 1
      %p245 = scmp.lt.s32.totalorder %s20, 0
      %s246 = scalar_select %p245, %s20, 0
      %s247 = sadd.s32 %s246, %s244
      %s248 = smul.addr %s247, 8
      %s249 = scalar_lea.vmem %s3, %s248
      %p250 = pneg %p130
      %p251 = pneg %p127
      %p252 = pneg %p158
      %p253 = pneg %p155
      %p254 = scmp.lt.s32.totalorder %s19, 1
      %s255 = scalar_select %p254, %s19, 1
      %p256 = scmp.lt.s32.totalorder %s20, 0
      %s257 = scalar_select %p256, %s20, 0
      %s258 = sadd.s32 %s257, %s255
      %s259 = smul.addr %s258, 4
      %s260 = scalar_lea.vmem %s4, %s259
      %p261 = scmp.lt.s32.totalorder %s19, 1
      %s262 = scalar_select %p261, %s19, 1
      %p263 = scmp.lt.s32.totalorder %s20, 0
      %s264 = scalar_select %p263, %s20, 0
      %s265 = sadd.s32 %s264, %s262
      %s266 = smul.addr %s265, 4
      %s267 = scalar_lea.vmem %s0, %s266
      %p268 = scmp.lt.s32.totalorder %s19, 1
      %s269 = scalar_select %p268, %s19, 1
      %s270 = smul.addr %s269, 2
      %s271 = smul.addr %s270, 4
      %s272 = scalar_lea.vmem %s1, %s271
      %p273 = scmp.lt.s32.totalorder %s19, 1
      %s274 = scalar_select %p273, %s19, 1
      %s275 = smul.addr %s274, 2
      %s276 = smul.addr %s275, 4
      %s277 = scalar_lea.vmem %s2, %s276
      %p278 = scmp.lt.s32.totalorder %s19, 1
      %s279 = scalar_select %p278, %s19, 1
      %p280 = scmp.lt.s32.totalorder %s20, 0
      %s281 = scalar_select %p280, %s20, 0
      %s282 = sadd.s32 %s281, %s279
      %s283 = smul.addr %s282, 8
      %s284 = scalar_lea.vmem %s3, %s283
      %p285 = scmp.lt.s32.totalorder %s19, 1
      %s286 = scalar_select %p285, %s19, 1
      %p287 = scmp.lt.s32.totalorder %s20, 0
      %s288 = scalar_select %p287, %s20, 0
      %s289 = sadd.s32 %s288, %s286
      %s290 = smul.addr %s289, 4
      %s291 = scalar_lea.vmem %s4, %s290
      %v293 = vld [vmem:[%s267] sm:$0xf]
      %v294 = vld [vmem:[%s272] sm:$0xf]
      %v295 = vld [vmem:[%s272 + $0x4] sm:$0xf]
      %v296 = vld [vmem:[%s277] sm:$0xf]
      %v297 = vld [vmem:[%s277 + $0x4] sm:$0xf]
      %v298 = vld [vmem:[%s284] sm:$0xff]
      %v301 = vunpack.c.l.b16 %v294
      %v302 = vunpack.c.l.b16 %v295
      %v303 = vpack.c.b16 %v302, %v301
      %vm304 = vcmask 64512
      %v306 = vsel %vm304, %v293, 0
      %v309 = vsel %vm304, %v303, 0
      %311 = vmatprep.subr.bf16.mxu0 0
      %312 = vmatpush1.bf16.xpose.msra.mxu0 0
      %313 = vmatprep.subr.bf16.mxu0 0
      %314 = vmatpush1.bf16.xpose.msra.mxu0 0
      %315 = vmatprep.subr.bf16.mxu0 0
      %316 = vmatpush1.bf16.xpose.msra.mxu0 0
      %317 = vmatprep.subr.bf16.mxu0 0
      %318 = vmatpush1.bf16.xpose.msra.mxu0 0
      %319 = vmatprep.subr.bf16.mxu0 0
      %320 = vmatpush1.bf16.xpose.msra.mxu0 0
      %321 = vmatprep.subr.bf16.mxu0 0
      %322 = vmatpush1.bf16.xpose.msra.mxu0 0
      %323 = vmatprep.subr.bf16.mxu0 0
      %324 = vmatpush1.bf16.xpose.msra.mxu0 0
      %325 = vmatprep.subr.bf16.mxu0 0
      %326 = vmatpush1.bf16.xpose.msra.mxu0 %v309
      %327 = vmatprep.subr.bf16.mxu0 0
      %328 = vmatpush2.bf16.xpose.msra.mxu0 0
      %329 = vmatprep.subr.bf16.mxu0 0
      %330 = vmatpush2.bf16.xpose.msra.mxu0 0
      %331 = vmatprep.subr.bf16.mxu0 0
      %332 = vmatpush2.bf16.xpose.msra.mxu0 0
      %333 = vmatprep.subr.bf16.mxu0 0
      %334 = vmatpush2.bf16.xpose.msra.mxu0 0
      %335 = vmatprep.subr.bf16.mxu0 0
      %336 = vmatpush2.bf16.xpose.msra.mxu0 0
      %337 = vmatprep.subr.bf16.mxu0 0
      %338 = vmatpush2.bf16.xpose.msra.mxu0 0
      %339 = vmatprep.subr.bf16.mxu0 0
      %340 = vmatpush2.bf16.xpose.msra.mxu0 0
      %341 = vmatprep.subr.bf16.mxu0 0
      %342 = vmatpush2.bf16.xpose.msra.mxu0 0
      %343 = vmatprep.mubr.bf16.mxu0 0
      %344 = vmatmul.mubr.bf16.gmra.mxu0 %v306
      %v345 = vpop.f32.mrf.mxu0
      %v346 = vadd.f32 %v298, %v345
      %v347 = vpop.f32.mrf.mxu0
      %v348 = vpop.f32.mrf.mxu0
      %v349 = vpop.f32.mrf.mxu0
      %350 = vdwg.mxu0
      %vm351 = vcmask 130048
      %v352 = vsel %vm351, %v346, -inf
      %353 = vmax.xlane.f32.xlu0 %v352
      %v354 = vpop.xlane.xlu0 %353
      %v355 = vsub.f32 %v346, %v354
      %v356 = vmul.f32 %v355, 1.442695
      %v357 = vpow.pop %v356
      %v358 = vsel %vm351, %v357, 0.0
      %359 = vadd.xlane.f32.xlu0 %v358
      %v360 = vpop.xlane.xlu0 %359
      %v361 = vrcp.pop %v360
      %v362 = vmul.f32 %v357, %v361
      %v363 = vpack.c.bf16 %v362, %v362
      %v366 = vunpack.c.l.b16 %v296
      %v367 = vunpack.c.l.b16 %v297
      %v368 = vpack.c.b16 %v367, %v366
      %v371 = vsel %vm351, %v363, 0
      %373 = vmatprep.subr.bf16.mxu0 0
      %374 = vmatpush1.bf16.msra.mxu0 0
      %375 = vmatprep.subr.bf16.mxu0 0
      %376 = vmatpush1.bf16.msra.mxu0 0
      %377 = vmatprep.subr.bf16.mxu0 0
      %378 = vmatpush1.bf16.msra.mxu0 0
      %379 = vmatprep.subr.bf16.mxu0 0
      %380 = vmatpush1.bf16.msra.mxu0 0
      %381 = vmatprep.subr.bf16.mxu0 0
      %382 = vmatpush1.bf16.msra.mxu0 0
      %383 = vmatprep.subr.bf16.mxu0 0
      %384 = vmatpush1.bf16.msra.mxu0 0
      %385 = vmatprep.subr.bf16.mxu0 0
      %386 = vmatpush1.bf16.msra.mxu0 0
      %387 = vmatprep.subr.bf16.mxu0 0
      %388 = vmatpush1.bf16.msra.mxu0 %v368
      %389 = vmatprep.subr.bf16.mxu0 0
      %390 = vmatpush2.bf16.msra.mxu0 0
      %391 = vmatprep.subr.bf16.mxu0 0
      %392 = vmatpush2.bf16.msra.mxu0 0
      %393 = vmatprep.subr.bf16.mxu0 0
      %394 = vmatpush2.bf16.msra.mxu0 0
      %395 = vmatprep.subr.bf16.mxu0 0
      %396 = vmatpush2.bf16.msra.mxu0 0
      %397 = vmatprep.subr.bf16.mxu0 0
      %398 = vmatpush2.bf16.msra.mxu0 0
      %399 = vmatprep.subr.bf16.mxu0 0
      %400 = vmatpush2.bf16.msra.mxu0 0
      %401 = vmatprep.subr.bf16.mxu0 0
      %402 = vmatpush2.bf16.msra.mxu0 0
      %403 = vmatprep.subr.bf16.mxu0 0
      %404 = vmatpush2.bf16.msra.mxu0 0
      %405 = vmatprep.mubr.bf16.mxu0 0
      %406 = vmatmul.mubr.bf16.gmra.mxu0 %v371
      %v407 = vpop.f32.mrf.mxu0
      %v408 = vadd.f32 0.0, %v407
      %v409 = vpop.f32.mrf.mxu0
      %v410 = vpop.f32.mrf.mxu0
      %v411 = vpop.f32.mrf.mxu0
      %412 = vdwg.mxu0
      %v414 = vunpack.c.l.b16 %v293
      %v415 = vpack.c.b16 %v414, %v414
      %416 = vrot.lane.b32.xlu0 %v415, 120
      %v417 = vpop.permute.xlu0 %416
      %418 = vrot.lane.b32.xlu0 %v303, 120
      %v419 = vpop.permute.xlu0 %418
      %v421 = vsel %vm304, %v417, 0
      %v424 = vsel %vm304, %v419, 0
      %426 = vmatprep.subr.bf16.mxu0 0
      %427 = vmatpush1.bf16.xpose.msra.mxu0 0
      %428 = vmatprep.subr.bf16.mxu0 0
      %429 = vmatpush1.bf16.xpose.msra.mxu0 0
      %430 = vmatprep.subr.bf16.mxu0 0
      %431 = vmatpush1.bf16.xpose.msra.mxu0 0
      %432 = vmatprep.subr.bf16.mxu0 0
      %433 = vmatpush1.bf16.xpose.msra.mxu0 0
      %434 = vmatprep.subr.bf16.mxu0 0
      %435 = vmatpush1.bf16.xpose.msra.mxu0 0
      %436 = vmatprep.subr.bf16.mxu0 0
      %437 = vmatpush1.bf16.xpose.msra.mxu0 0
      %438 = vmatprep.subr.bf16.mxu0 0
      %439 = vmatpush1.bf16.xpose.msra.mxu0 0
      %440 = vmatprep.subr.bf16.mxu0 0
      %441 = vmatpush1.bf16.xpose.msra.mxu0 %v424
      %442 = vmatprep.subr.bf16.mxu0 0
      %443 = vmatpush2.bf16.xpose.msra.mxu0 0
      %444 = vmatprep.subr.bf16.mxu0 0
      %445 = vmatpush2.bf16.xpose.msra.mxu0 0
      %446 = vmatprep.subr.bf16.mxu0 0
      %447 = vmatpush2.bf16.xpose.msra.mxu0 0
      %448 = vmatprep.subr.bf16.mxu0 0
      %449 = vmatpush2.bf16.xpose.msra.mxu0 0
      %450 = vmatprep.subr.bf16.mxu0 0
      %451 = vmatpush2.bf16.xpose.msra.mxu0 0
      %452 = vmatprep.subr.bf16.mxu0 0
      %453 = vmatpush2.bf16.xpose.msra.mxu0 0
      %454 = vmatprep.subr.bf16.mxu0 0
      %455 = vmatpush2.bf16.xpose.msra.mxu0 0
      %456 = vmatprep.subr.bf16.mxu0 0
      %457 = vmatpush2.bf16.xpose.msra.mxu0 0
      %458 = vmatprep.mubr.bf16.mxu0 0
      %459 = vmatmul.mubr.bf16.gmra.mxu0 %v421
      %v460 = vpop.f32.mrf.mxu0
      %v461 = vadd.f32 %v298, %v460
      %v462 = vpop.f32.mrf.mxu0
      %v463 = vpop.f32.mrf.mxu0
      %v464 = vpop.f32.mrf.mxu0
      %465 = vdwg.mxu0
      %v466 = vsel %vm351, %v461, -inf
      %467 = vmax.xlane.f32.xlu0 %v466
      %v468 = vpop.xlane.xlu0 %467
      %v469 = vsub.f32 %v461, %v468
      %v470 = vmul.f32 %v469, 1.442695
      %v471 = vpow.pop %v470
      %v472 = vsel %vm351, %v471, 0.0
      %473 = vadd.xlane.f32.xlu0 %v472
      %v474 = vpop.xlane.xlu0 %473
      %v475 = vrcp.pop %v474
      %v476 = vmul.f32 %v471, %v475
      %v477 = vpack.c.bf16 %v476, %v476
      %478 = vrot.lane.b32.xlu0 %v368, 120
      %v479 = vpop.permute.xlu0 %478
      %v482 = vsel %vm351, %v477, 0
      %484 = vmatprep.subr.bf16.mxu0 0
      %485 = vmatpush1.bf16.msra.mxu0 0
      %486 = vmatprep.subr.bf16.mxu0 0
      %487 = vmatpush1.bf16.msra.mxu0 0
      %488 = vmatprep.subr.bf16.mxu0 0
      %489 = vmatpush1.bf16.msra.mxu0 0
      %490 = vmatprep.subr.bf16.mxu0 0
      %491 = vmatpush1.bf16.msra.mxu0 0
      %492 = vmatprep.subr.bf16.mxu0 0
      %493 = vmatpush1.bf16.msra.mxu0 0
      %494 = vmatprep.subr.bf16.mxu0 0
      %495 = vmatpush1.bf16.msra.mxu0 0
      %496 = vmatprep.subr.bf16.mxu0 0
      %497 = vmatpush1.bf16.msra.mxu0 0
      %498 = vmatprep.subr.bf16.mxu0 0
      %499 = vmatpush1.bf16.msra.mxu0 %v479
      %500 = vmatprep.subr.bf16.mxu0 0
      %501 = vmatpush2.bf16.msra.mxu0 0
      %502 = vmatprep.subr.bf16.mxu0 0
      %503 = vmatpush2.bf16.msra.mxu0 0
      %504 = vmatprep.subr.bf16.mxu0 0
      %505 = vmatpush2.bf16.msra.mxu0 0
      %506 = vmatprep.subr.bf16.mxu0 0
      %507 = vmatpush2.bf16.msra.mxu0 0
      %508 = vmatprep.subr.bf16.mxu0 0
      %509 = vmatpush2.bf16.msra.mxu0 0
      %510 = vmatprep.subr.bf16.mxu0 0
      %511 = vmatpush2.bf16.msra.mxu0 0
      %512 = vmatprep.subr.bf16.mxu0 0
      %513 = vmatpush2.bf16.msra.mxu0 0
      %514 = vmatprep.subr.bf16.mxu0 0
      %515 = vmatpush2.bf16.msra.mxu0 0
      %516 = vmatprep.mubr.bf16.mxu0 0
      %517 = vmatmul.mubr.bf16.gmra.mxu0 %v482
      %v518 = vpop.f32.mrf.mxu0
      %v519 = vadd.f32 0.0, %v518
      %v520 = vpop.f32.mrf.mxu0
      %v521 = vpop.f32.mrf.mxu0
      %v522 = vpop.f32.mrf.mxu0
      %523 = vdwg.mxu0
      %524 = vrot.lane.b32.xlu0 %v415, 112
      %v525 = vpop.permute.xlu0 %524
      %526 = vrot.lane.b32.xlu0 %v303, 112
      %v527 = vpop.permute.xlu0 %526
      %v529 = vsel %vm304, %v525, 0
      %v532 = vsel %vm304, %v527, 0
      %534 = vmatprep.subr.bf16.mxu0 0
      %535 = vmatpush1.bf16.xpose.msra.mxu0 0
      %536 = vmatprep.subr.bf16.mxu0 0
      %537 = vmatpush1.bf16.xpose.msra.mxu0 0
      %538 = vmatprep.subr.bf16.mxu0 0
      %539 = vmatpush1.bf16.xpose.msra.mxu0 0
      %540 = vmatprep.subr.bf16.mxu0 0
      %541 = vmatpush1.bf16.xpose.msra.mxu0 0
      %542 = vmatprep.subr.bf16.mxu0 0
      %543 = vmatpush1.bf16.xpose.msra.mxu0 0
      %544 = vmatprep.subr.bf16.mxu0 0
      %545 = vmatpush1.bf16.xpose.msra.mxu0 0
      %546 = vmatprep.subr.bf16.mxu0 0
      %547 = vmatpush1.bf16.xpose.msra.mxu0 0
      %548 = vmatprep.subr.bf16.mxu0 0
      %549 = vmatpush1.bf16.xpose.msra.mxu0 %v532
      %550 = vmatprep.subr.bf16.mxu0 0
      %551 = vmatpush2.bf16.xpose.msra.mxu0 0
      %552 = vmatprep.subr.bf16.mxu0 0
      %553 = vmatpush2.bf16.xpose.msra.mxu0 0
      %554 = vmatprep.subr.bf16.mxu0 0
      %555 = vmatpush2.bf16.xpose.msra.mxu0 0
      %556 = vmatprep.subr.bf16.mxu0 0
      %557 = vmatpush2.bf16.xpose.msra.mxu0 0
      %558 = vmatprep.subr.bf16.mxu0 0
      %559 = vmatpush2.bf16.xpose.msra.mxu0 0
      %560 = vmatprep.subr.bf16.mxu0 0
      %561 = vmatpush2.bf16.xpose.msra.mxu0 0
      %562 = vmatprep.subr.bf16.mxu0 0
      %563 = vmatpush2.bf16.xpose.msra.mxu0 0
      %564 = vmatprep.subr.bf16.mxu0 0
      %565 = vmatpush2.bf16.xpose.msra.mxu0 0
      %566 = vmatprep.mubr.bf16.mxu0 0
      %567 = vmatmul.mubr.bf16.gmra.mxu0 %v529
      %v568 = vpop.f32.mrf.mxu0
      %v569 = vadd.f32 %v298, %v568
      %v570 = vpop.f32.mrf.mxu0
      %v571 = vpop.f32.mrf.mxu0
      %v572 = vpop.f32.mrf.mxu0
      %573 = vdwg.mxu0
      %v574 = vsel %vm351, %v569, -inf
      %575 = vmax.xlane.f32.xlu0 %v574
      %v576 = vpop.xlane.xlu0 %575
      %v577 = vsub.f32 %v569, %v576
      %v578 = vmul.f32 %v577, 1.442695
      %v579 = vpow.pop %v578
      %v580 = vsel %vm351, %v579, 0.0
      %581 = vadd.xlane.f32.xlu0 %v580
      %v582 = vpop.xlane.xlu0 %581
      %v583 = vrcp.pop %v582
      %v584 = vmul.f32 %v579, %v583
      %v585 = vpack.c.bf16 %v584, %v584
      %586 = vrot.lane.b32.xlu0 %v368, 112
      %v587 = vpop.permute.xlu0 %586
      %v590 = vsel %vm351, %v585, 0
      %592 = vmatprep.subr.bf16.mxu0 0
      %593 = vmatpush1.bf16.msra.mxu0 0
      %594 = vmatprep.subr.bf16.mxu0 0
      %595 = vmatpush1.bf16.msra.mxu0 0
      %596 = vmatprep.subr.bf16.mxu0 0
      %597 = vmatpush1.bf16.msra.mxu0 0
      %598 = vmatprep.subr.bf16.mxu0 0
      %599 = vmatpush1.bf16.msra.mxu0 0
      %600 = vmatprep.subr.bf16.mxu0 0
      %601 = vmatpush1.bf16.msra.mxu0 0
      %602 = vmatprep.subr.bf16.mxu0 0
      %603 = vmatpush1.bf16.msra.mxu0 0
      %604 = vmatprep.subr.bf16.mxu0 0
      %605 = vmatpush1.bf16.msra.mxu0 0
      %606 = vmatprep.subr.bf16.mxu0 0
      %607 = vmatpush1.bf16.msra.mxu0 %v587
      %608 = vmatprep.subr.bf16.mxu0 0
      %609 = vmatpush2.bf16.msra.mxu0 0
      %610 = vmatprep.subr.bf16.mxu0 0
      %611 = vmatpush2.bf16.msra.mxu0 0
      %612 = vmatprep.subr.bf16.mxu0 0
      %613 = vmatpush2.bf16.msra.mxu0 0
      %614 = vmatprep.subr.bf16.mxu0 0
      %615 = vmatpush2.bf16.msra.mxu0 0
      %616 = vmatprep.subr.bf16.mxu0 0
      %617 = vmatpush2.bf16.msra.mxu0 0
      %618 = vmatprep.subr.bf16.mxu0 0
      %619 = vmatpush2.bf16.msra.mxu0 0
      %620 = vmatprep.subr.bf16.mxu0 0
      %621 = vmatpush2.bf16.msra.mxu0 0
      %622 = vmatprep.subr.bf16.mxu0 0
      %623 = vmatpush2.bf16.msra.mxu0 0
      %624 = vmatprep.mubr.bf16.mxu0 0
      %625 = vmatmul.mubr.bf16.gmra.mxu0 %v590
      %v626 = vpop.f32.mrf.mxu0
      %v627 = vadd.f32 0.0, %v626
      %v628 = vpop.f32.mrf.mxu0
      %v629 = vpop.f32.mrf.mxu0
      %v630 = vpop.f32.mrf.mxu0
      %631 = vdwg.mxu0
      %632 = vrot.lane.b32.xlu0 %v415, 104
      %v633 = vpop.permute.xlu0 %632
      %634 = vrot.lane.b32.xlu0 %v303, 104
      %v635 = vpop.permute.xlu0 %634
      %v637 = vsel %vm304, %v633, 0
      %v640 = vsel %vm304, %v635, 0
      %642 = vmatprep.subr.bf16.mxu0 0
      %643 = vmatpush1.bf16.xpose.msra.mxu0 0
      %644 = vmatprep.subr.bf16.mxu0 0
      %645 = vmatpush1.bf16.xpose.msra.mxu0 0
      %646 = vmatprep.subr.bf16.mxu0 0
      %647 = vmatpush1.bf16.xpose.msra.mxu0 0
      %648 = vmatprep.subr.bf16.mxu0 0
      %649 = vmatpush1.bf16.xpose.msra.mxu0 0
      %650 = vmatprep.subr.bf16.mxu0 0
      %651 = vmatpush1.bf16.xpose.msra.mxu0 0
      %652 = vmatprep.subr.bf16.mxu0 0
      %653 = vmatpush1.bf16.xpose.msra.mxu0 0
      %654 = vmatprep.subr.bf16.mxu0 0
      %655 = vmatpush1.bf16.xpose.msra.mxu0 0
      %656 = vmatprep.subr.bf16.mxu0 0
      %657 = vmatpush1.bf16.xpose.msra.mxu0 %v640
      %658 = vmatprep.subr.bf16.mxu0 0
      %659 = vmatpush2.bf16.xpose.msra.mxu0 0
      %660 = vmatprep.subr.bf16.mxu0 0
      %661 = vmatpush2.bf16.xpose.msra.mxu0 0
      %662 = vmatprep.subr.bf16.mxu0 0
      %663 = vmatpush2.bf16.xpose.msra.mxu0 0
      %664 = vmatprep.subr.bf16.mxu0 0
      %665 = vmatpush2.bf16.xpose.msra.mxu0 0
      %666 = vmatprep.subr.bf16.mxu0 0
      %667 = vmatpush2.bf16.xpose.msra.mxu0 0
      %668 = vmatprep.subr.bf16.mxu0 0
      %669 = vmatpush2.bf16.xpose.msra.mxu0 0
      %670 = vmatprep.subr.bf16.mxu0 0
      %671 = vmatpush2.bf16.xpose.msra.mxu0 0
      %672 = vmatprep.subr.bf16.mxu0 0
      %673 = vmatpush2.bf16.xpose.msra.mxu0 0
      %674 = vmatprep.mubr.bf16.mxu0 0
      %675 = vmatmul.mubr.bf16.gmra.mxu0 %v637
      %v676 = vpop.f32.mrf.mxu0
      %v677 = vadd.f32 %v298, %v676
      %v678 = vpop.f32.mrf.mxu0
      %v679 = vpop.f32.mrf.mxu0
      %v680 = vpop.f32.mrf.mxu0
      %681 = vdwg.mxu0
      %v682 = vsel %vm351, %v677, -inf
      %683 = vmax.xlane.f32.xlu0 %v682
      %v684 = vpop.xlane.xlu0 %683
      %v685 = vsub.f32 %v677, %v684
      %v686 = vmul.f32 %v685, 1.442695
      %v687 = vpow.pop %v686
      %v688 = vsel %vm351, %v687, 0.0
      %689 = vadd.xlane.f32.xlu0 %v688
      %v690 = vpop.xlane.xlu0 %689
      %v691 = vrcp.pop %v690
      %v692 = vmul.f32 %v687, %v691
      %v693 = vpack.c.bf16 %v692, %v692
      %694 = vrot.lane.b32.xlu0 %v368, 104
      %v695 = vpop.permute.xlu0 %694
      %v698 = vsel %vm351, %v693, 0
      %700 = vmatprep.subr.bf16.mxu0 0
      %701 = vmatpush1.bf16.msra.mxu0 0
      %702 = vmatprep.subr.bf16.mxu0 0
      %703 = vmatpush1.bf16.msra.mxu0 0
      %704 = vmatprep.subr.bf16.mxu0 0
      %705 = vmatpush1.bf16.msra.mxu0 0
      %706 = vmatprep.subr.bf16.mxu0 0
      %707 = vmatpush1.bf16.msra.mxu0 0
      %708 = vmatprep.subr.bf16.mxu0 0
      %709 = vmatpush1.bf16.msra.mxu0 0
      %710 = vmatprep.subr.bf16.mxu0 0
      %711 = vmatpush1.bf16.msra.mxu0 0
      %712 = vmatprep.subr.bf16.mxu0 0
      %713 = vmatpush1.bf16.msra.mxu0 0
      %714 = vmatprep.subr.bf16.mxu0 0
      %715 = vmatpush1.bf16.msra.mxu0 %v695
      %716 = vmatprep.subr.bf16.mxu0 0
      %717 = vmatpush2.bf16.msra.mxu0 0
      %718 = vmatprep.subr.bf16.mxu0 0
      %719 = vmatpush2.bf16.msra.mxu0 0
      %720 = vmatprep.subr.bf16.mxu0 0
      %721 = vmatpush2.bf16.msra.mxu0 0
      %722 = vmatprep.subr.bf16.mxu0 0
      %723 = vmatpush2.bf16.msra.mxu0 0
      %724 = vmatprep.subr.bf16.mxu0 0
      %725 = vmatpush2.bf16.msra.mxu0 0
      %726 = vmatprep.subr.bf16.mxu0 0
      %727 = vmatpush2.bf16.msra.mxu0 0
      %728 = vmatprep.subr.bf16.mxu0 0
      %729 = vmatpush2.bf16.msra.mxu0 0
      %730 = vmatprep.subr.bf16.mxu0 0
      %731 = vmatpush2.bf16.msra.mxu0 0
      %732 = vmatprep.mubr.bf16.mxu0 0
      %733 = vmatmul.mubr.bf16.gmra.mxu0 %v698
      %v734 = vpop.f32.mrf.mxu0
      %v735 = vadd.f32 0.0, %v734
      %v736 = vpop.f32.mrf.mxu0
      %v737 = vpop.f32.mrf.mxu0
      %v738 = vpop.f32.mrf.mxu0
      %739 = vdwg.mxu0
      %741 = vrot.lane.b32.xlu0 %v519, 8
      %v742 = vpop.permute.xlu0 %741
      %745 = vrot.lane.b32.xlu0 %v627, 16
      %v746 = vpop.permute.xlu0 %745
      %749 = vrot.lane.b32.xlu0 %v735, 24
      %v750 = vpop.permute.xlu0 %749
      %v752 = vsel %vm304, %v408, %v742
      %v753 = vsel %vm351, %v752, %v746
      %vm754 = vcmask 195584
      %v755 = vsel %vm754, %v753, %v750
      %v756 = vpack.c.bf16 %v755, %v755
      %vm757 = vcmask 257024
      %758 = vst.msk [vmem:[%s291] sm:$0xf] %vm757, %v756
      %p759 = scmp.lt.s32.totalorder %s19, 1
      %s760 = scalar_select %p759, %s19, 1
      %p761 = scmp.lt.s32.totalorder %s20, 0
      %s762 = scalar_select %p761, %s20, 0
      %s763 = sadd.s32 %s762, %s760
      %s764 = smul.addr %s763, 4
      %s765 = scalar_lea.vmem %s4, %s764
      // Predicated region
      $region37: #{decoder_forward.24} parent=35 // pred_check
        %p766 = pneg %p155
      $region38: #{decoder_forward.24} parent=35 // pred_check_branch
        %768 = sbr.rel (%p766) target = $region40
      $region39: #{decoder_forward.24} parent=35 // pred_region
        _
      $region40: #{decoder_forward.24} parent=35 // pred_fallthru
        _
    $region36: #{decoder_forward.24} parent=5 // pred_fallthru
      _
    %p769 = scmp.le.s32.totalorder 2, %s10
    // Predicated region
    $region41: #{decoder_forward.24} parent=5 // pred_check
      %p770 = pneg %p769
    $region42: #{decoder_forward.24} parent=5 // pred_check_branch
      %772 = sbr.rel (%p770) target = $region44
    $region43: #{decoder_forward.24} parent=5 // pred_region
      %s773 = ssub.s32 %s10, 2
      // Predicated region
      $region45: #{decoder_forward.24} parent=43 // pred_check
        %p774 = pneg %p161
      $region46: #{decoder_forward.24} parent=43 // pred_check_branch
        %776 = sbr.rel (%p774) target = $region48
      $region47: #{decoder_forward.24} parent=43 // pred_region
        %p777 = scmp.lt.s32.totalorder %s21, 1
        %s778 = scalar_select %p777, %s21, 1
        %p779 = scmp.lt.s32.totalorder %s22, 0
        %s780 = scalar_select %p779, %s22, 0
        %s781 = sadd.s32 %s780, %s778
        %s782 = smul.addr %s781, 4
        %s783 = scalar_lea.vmem %s4, %s782
      $region48: #{decoder_forward.24} parent=43 // pred_fallthru
        _
    $region44: #{decoder_forward.24} parent=5 // pred_fallthru
      _
  $region6: #{decoder_forward.24} parent=0 // loop_footer
    %s14 = sadd.s32 1, %s10
  $region7: #{decoder_forward.24} parent=0 // loop_footer_branch
    %9 = sbr.rel target = $region3
  $region8: #{decoder_forward.24} parent=0 // loop_exit
    _

</llo_original>
